<compile_context>
chip_gen: v7x
topology: tpu7x:2x2x1
jax: 0.10.0
libtpu: 0.0.40
codegen_flags: <defaults>
</compile_context>

<pallas_src>
import functools

import jax
import jax.numpy as jnp
from jax.experimental import pallas as pl
from jax.experimental.pallas import tpu as pltpu


# ----------------------------------------------------------------------------
# Fused per-step Pallas kernel (channel-major: activations are (C, H*W))
# ----------------------------------------------------------------------------
def _step_kernel(*refs, has_cond, C, H, W):
    if has_cond:
        (w_eff, b_eff, z_ref, cond_ref,
         w1_ref, b1_ref, w2_ref, b2_ref, w3_ref, b3_ref,
         zo_ref, ld_ref) = refs
    else:
        (w_eff, b_eff, z_ref,
         w1_ref, b1_ref, w2_ref, b2_ref, w3_ref, b3_ref,
         zo_ref, ld_ref) = refs
        cond_ref = None

    f32 = jnp.float32
    bf16 = jnp.bfloat16
    C2 = C // 2
    M = H * W

    z = z_ref[...]                                        # (C, M) f32

    # --- ActNorm + invertible 1x1 conv, folded into (w_eff, b_eff) ---------
    # C is tiny (4): scalar-broadcast FMAs on the VPU (weights from SMEM)
    # instead of a depth-4 MXU contraction.
    rows = []
    for co in range(C):
        acc = w_eff[co, 0] * z[0:1, :]
        for ci in range(1, C):
            acc = acc + w_eff[co, ci] * z[ci:ci + 1, :]
        rows.append(acc + b_eff[co])
    zm = jnp.concatenate(rows, axis=0)                    # (C, M)

    z1 = zm[:C2, :]                                       # (C2, M)
    z2 = zm[C2:, :]                                       # (C2, M)

    if cond_ref is not None:
        nn_in = jnp.concatenate([z1, cond_ref[...]], axis=0)
    else:
        nn_in = z1

    # --- in-VMEM 3x3 tap gather (no HBM im2col) ----------------------------
    # A spatial tap (dy, dx) of a channel-major (Cin, H*W) tile is a static
    # lane shift by dy*W+dx of a zero-padded copy.  Row overflow lands in the
    # zero pad; column wrap across row boundaries is killed with a lane mask.
    col = jax.lax.broadcasted_iota(jnp.int32, (1, M), 1) % W
    mask_l = (col >= 1).astype(f32)                       # valid lanes, dx=-1
    mask_r = (col < (W - 1)).astype(f32)                  # valid lanes, dx=+1
    pad = W + 1

    def conv3x3(x, w_ref, b_ref):
        cin = x.shape[0]
        cout = w_ref.shape[1]
        zeros = jnp.zeros((cin, pad), f32)
        xpad = jnp.concatenate([zeros, x, zeros], axis=1)  # (cin, M + 2*pad)
        acc = jnp.zeros((cout, M), f32)
        k = 0
        for dy in (-1, 0, 1):
            for dx in (-1, 0, 1):
                off = pad + dy * W + dx
                tap = xpad[:, off:off + M]
                if dx == -1:
                    tap = tap * mask_l
                elif dx == 1:
                    tap = tap * mask_r
                acc = acc + jnp.dot(w_ref[k].astype(bf16), tap.astype(bf16),
                                    preferred_element_type=f32)
                k += 1
        return acc + b_ref[...]

    # --- coupling net: conv3x3 + relu, conv1x1 + relu, conv3x3 -------------
    h = jnp.maximum(conv3x3(nn_in, w1_ref, b1_ref), 0.0)          # (hid, M)
    h = jnp.dot(w2_ref[...].astype(bf16), h.astype(bf16),
                preferred_element_type=f32) + b2_ref[...]
    h = jnp.maximum(h, 0.0)                                       # (hid, M)
    h = conv3x3(h, w3_ref, b3_ref)                                # (2*C2, M)

    # --- affine coupling ----------------------------------------------------
    shift = h[:C2, :]
    logs = h[C2:, :]
    scale = 1.0 / (1.0 + jnp.exp(-(logs + 2.0)))                  # sigmoid
    z2o = (z2 + shift) * scale

    zo_ref[...] = jnp.concatenate([z1, z2o], axis=0)              # (C, M)
    # per-pixel partial logdet sums (lane-dense); reduced in the wrapper
    ld_ref[...] = jnp.sum(jnp.log(scale), axis=0, keepdims=True)  # (1, M)


# ----------------------------------------------------------------------------
# pallas_call wrapper for one step
# ----------------------------------------------------------------------------
def pallas_step(prep, z_cm, cond_cm, H, W):
    """z_cm: (N, C, M) f32 channel-major; cond_cm: (N, CC, M) or None."""
    N, C, M = z_cm.shape
    _, hidden, nn_in_c = prep["w1_cm"].shape
    has_cond = cond_cm is not None
    assert has_cond == (nn_in_c > C // 2)

    def blk(shape):
        return pl.BlockSpec(shape, lambda n: (n, 0, 0))

    def const(shape):
        return pl.BlockSpec(shape, lambda n: (0,) * len(shape))

    smem = pl.BlockSpec(memory_space=pltpu.MemorySpace.SMEM)

    in_specs = [smem, smem, blk((None, C, M))]
    args = [prep["w_eff"], prep["b_eff"], z_cm]
    if has_cond:
        cc = cond_cm.shape[1]
        in_specs.append(blk((None, cc, M)))
        args.append(cond_cm)
    in_specs += [
        const((9, hidden, nn_in_c)), const((hidden, 1)),
        const((hidden, hidden)), const((hidden, 1)),
        const((9, C, hidden)), const((C, 1)),
    ]
    args += [prep["w1_cm"], prep["b1"], prep["w2_cm"], prep["b2"],
             prep["w3_cm"], prep["b3"]]

    kernel = functools.partial(_step_kernel, has_cond=has_cond, C=C, H=H, W=W)

    z_out, ld_part = pl.pallas_call(
        kernel,
        grid=(N,),
        in_specs=in_specs,
        out_specs=(blk((None, C, M)), blk((None, 1, M))),
        out_shape=(jax.ShapeDtypeStruct((N, C, M), jnp.float32),
                   jax.ShapeDtypeStruct((N, 1, M), jnp.float32)),
        input_output_aliases={2: 0},  # update z in place
        compiler_params=pltpu.CompilerParams(
            dimension_semantics=("parallel",)),
    )(*args)
    return z_out, ld_part


# ----------------------------------------------------------------------------
# Parameters (original layout) + kernel-friendly preparation
# ----------------------------------------------------------------------------
def init_step_params(key, C, hidden, cond_channels):
    C2 = C // 2
    nn_in = C2 + cond_channels
    ks = jax.random.split(key, 8)
    w = jax.random.normal(ks[0], (C, C), jnp.float32)
    q, _ = jnp.linalg.qr(w)  # invertible 1x1 conv weight
    return {
        "an_bias": 0.1 * jax.random.normal(ks[1], (C,), jnp.float32),
        "an_scale": jnp.exp(0.1 * jax.random.normal(ks[2], (C,), jnp.float32)),
        "inv_w": q,                       # (C_out, C_in)
        "w1": 0.05 * jax.random.normal(ks[3], (9 * nn_in, hidden), jnp.float32),
        "b1": jnp.zeros((hidden,), jnp.float32),
        "w2": 0.05 * jax.random.normal(ks[4], (hidden, hidden), jnp.float32),
        "b2": jnp.zeros((hidden,), jnp.float32),
        "w3": 0.05 * jax.random.normal(ks[5], (9 * hidden, 2 * C2), jnp.float32),
        "b3": jnp.zeros((2 * C2,), jnp.float32),
    }


def init_multistep_params(key, n_steps, C, hidden, cond_channels):
    keys = jax.random.split(key, n_steps)
    return [init_step_params(k, C, hidden, cond_channels) for k in keys]


def prepare_step_params(p, H, W):
    """One-off conversion to kernel layout; also folds ActNorm into the 1x1
    conv and precomputes the constant logdet terms (incl. slogdet)."""
    C = p["inv_w"].shape[0]
    C2 = C // 2
    hidden = p["w1"].shape[1]
    nn_in_c = p["w1"].shape[0] // 9
    w_eff = p["inv_w"] * p["an_scale"][None, :]            # inv_w @ diag(s)
    b_eff = p["inv_w"] @ (p["an_scale"] * p["an_bias"])
    logdet_const = H * W * (jnp.sum(jnp.log(jnp.abs(p["an_scale"])))
                            + jnp.linalg.slogdet(p["inv_w"])[1])
    return {
        "w_eff": w_eff.astype(jnp.float32),
        "b_eff": b_eff.astype(jnp.float32),
        "w1_cm": p["w1"].reshape(9, nn_in_c, hidden).transpose(0, 2, 1),
        "b1": p["b1"].reshape(hidden, 1),
        "w2_cm": p["w2"].T,
        "b2": p["b2"].reshape(hidden, 1),
        "w3_cm": p["w3"].reshape(9, hidden, 2 * C2).transpose(0, 2, 1),
        "b3": p["b3"].reshape(2 * C2, 1),
        "logdet_const": jnp.asarray(logdet_const, jnp.float32),
    }


# ----------------------------------------------------------------------------
# MultiStep forward (NCHW in / NCHW out). NCHW flattened over H,W IS the
# channel-major layout the kernel wants, so no transposes are needed.
# ----------------------------------------------------------------------------
def multistep_forward(prepared_steps, x_nchw, logdet, conditioning=None,
                      reverse=False):
    N, C, H, W = x_nchw.shape
    M = H * W
    z = x_nchw.reshape(N, C, M)
    cond = None
    if conditioning is not None:
        cond = conditioning.reshape(N, conditioning.shape[1], M)

    # NOTE: matches the reference MultiStep exactly — reverse only reverses
    # the step order; each step still applies its forward transform.
    steps = list(reversed(prepared_steps)) if reverse else prepared_steps
    for p in steps:
        z, ld_part = pallas_step(p, z, cond, H, W)
        logdet = logdet + p["logdet_const"] + jnp.sum(ld_part, axis=(1, 2))
    return z.reshape(N, C, H, W), logdet


# ----------------------------------------------------------------------------
# Pure-JAX reference (original-layout params, original im2col formulation)
# ----------------------------------------------------------------------------
def _im2col3x3(x_nhwc):
    N, H, W, Cin = x_nhwc.shape
    xp = jnp.pad(x_nhwc, ((0, 0), (1, 1), (1, 1), (0, 0)))
    cols = []
    for dy in range(3):
        for dx in range(3):
            cols.append(xp[:, dy:dy + H, dx:dx + W, :])
    return jnp.concatenate(cols, axis=-1).reshape(N * H * W, 9 * Cin)


def _reference_step(p, z, logdet, cond, N, H, W, C):
    hp = jax.lax.Precision.HIGHEST
    C2 = C // 2
    z = (z + p["an_bias"][None, :]) * p["an_scale"][None, :]
    z = jnp.dot(z, p["inv_w"].T, precision=hp)
    logdet = logdet + H * W * (jnp.sum(jnp.log(jnp.abs(p["an_scale"])))
                               + jnp.linalg.slogdet(p["inv_w"])[1])
    z1, z2 = z[:, :C2], z[:, C2:]
    nn_in = z1 if cond is None else jnp.concatenate([z1, cond], axis=1)
    cc = nn_in.shape[1]
    h = jnp.dot(_im2col3x3(nn_in.reshape(N, H, W, cc)), p["w1"],
                precision=hp) + p["b1"]
    h = jnp.maximum(h, 0.0)
    h = jnp.maximum(jnp.dot(h, p["w2"], precision=hp) + p["b2"], 0.0)
    h = jnp.dot(_im2col3x3(h.reshape(N, H, W, -1)), p["w3"],
                precision=hp) + p["b3"]
    shift, logs = h[:, :C2], h[:, C2:]
    scale = 1.0 / (1.0 + jnp.exp(-(logs + 2.0)))
    z2o = (z2 + shift) * scale
    logdet = logdet + jnp.sum(jnp.log(scale).reshape(N, H * W * C2), axis=1)
    return jnp.concatenate([z1, z2o], axis=1), logdet


def _reference_multistep(params_list, x_nchw, logdet, conditioning=None,
                         reverse=False):
    N, C, H, W = x_nchw.shape
    z = jnp.transpose(x_nchw, (0, 2, 3, 1)).reshape(N * H * W, C)
    cond = None
    if conditioning is not None:
        cc = conditioning.shape[1]
        cond = jnp.transpose(conditioning, (0, 2, 3, 1)).reshape(N * H * W, cc)
    steps = list(reversed(params_list)) if reverse else params_list
    for p in steps:
        z, logdet = _reference_step(p, z, logdet, cond, N, H, W, C)
    return jnp.transpose(z.reshape(N, H, W, C), (0, 3, 1, 2)), logdet


# ----------------------------------------------------------------------------
if __name__ == "__main__":
    key = jax.random.PRNGKey(0)
    k_x, k_c, k_p = jax.random.split(key, 3)

    N, C, H, W = 2, 4, 16, 16
    COND_C = 2
    HIDDEN = 32
    N_STEPS = 2          # params.stepsPerResolution[level]

    x = jax.random.normal(k_x, (N, C, H, W), jnp.float32)
    conditioning = jax.random.normal(k_c, (N, COND_C, H, W), jnp.float32)
    logdet = jnp.zeros((N,), jnp.float32)

    params_list = init_multistep_params(k_p, N_STEPS, C, HIDDEN, COND_C)
    prepared = [prepare_step_params(p, H, W) for p in params_list]

    fwd = jax.jit(lambda pp, xx, ld, cc: multistep_forward(
        pp, xx, ld, cc, reverse=False))
    z, ld = fwd(prepared, x, logdet, conditioning)
    jax.block_until_ready((z, ld))

    assert z.shape == (N, C, H, W) and ld.shape == (N,)
    assert jnp.all(jnp.isfinite(z)) and jnp.all(jnp.isfinite(ld))

    # correctness vs. pure-JAX reference of the original module math
    # (generous tolerance: the kernel feeds bf16 operands to the MXU).
    z_ref, ld_ref = _reference_multistep(params_list, x, logdet, conditioning)
    assert jnp.allclose(z, z_ref, rtol=5e-2, atol=5e-2), "z mismatch vs reference"
    assert jnp.allclose(ld, ld_ref, rtol=5e-2, atol=5e-2), "logdet mismatch vs reference"

    print("KERNEL_OK")
</pallas_src>

<mosaic_0001>
module attributes {stable_mosaic.version = 11 : i64} {
  func.func @_step_kernel(%arg0: i32, %arg1: memref<4x4xf32, #tpu.memory_space<smem>>, %arg2: memref<4xf32, #tpu.memory_space<smem>>, %arg3: memref<1x4x256xf32, #tpu.memory_space<vmem>>, %arg4: memref<1x2x256xf32, #tpu.memory_space<vmem>>, %arg5: memref<9x32x4xf32, #tpu.memory_space<vmem>>, %arg6: memref<32x1xf32, #tpu.memory_space<vmem>>, %arg7: memref<32x32xf32, #tpu.memory_space<vmem>>, %arg8: memref<32x1xf32, #tpu.memory_space<vmem>>, %arg9: memref<9x4x32xf32, #tpu.memory_space<vmem>>, %arg10: memref<4x1xf32, #tpu.memory_space<vmem>>, %arg11: memref<1x4x256xf32, #tpu.memory_space<vmem>>, %arg12: memref<1x1x256xf32, #tpu.memory_space<vmem>>) attributes {dimension_semantics = [#tpu.dimension_semantics<parallel>], iteration_bounds = array<i64: 2>, scalar_prefetch = 0 : i64, scratch_operands = 0 : i64, tpu.core_type = #tpu.core_type<tc>, window_params = [{transform_indices = @transform_0, window_bounds = array<i64: 4, 4>}, {transform_indices = @transform_1, window_bounds = array<i64: 4>}, {transform_indices = @transform_2, window_bounds = array<i64: 1, 4, 256>}, {transform_indices = @transform_3, window_bounds = array<i64: 1, 2, 256>}, {pipeline_mode = #tpu.pipeline_mode<synchronous>, transform_indices = @transform_4, window_bounds = array<i64: 9, 32, 4>}, {pipeline_mode = #tpu.pipeline_mode<synchronous>, transform_indices = @transform_5, window_bounds = array<i64: 32, 1>}, {pipeline_mode = #tpu.pipeline_mode<synchronous>, transform_indices = @transform_6, window_bounds = array<i64: 32, 32>}, {pipeline_mode = #tpu.pipeline_mode<synchronous>, transform_indices = @transform_7, window_bounds = array<i64: 32, 1>}, {pipeline_mode = #tpu.pipeline_mode<synchronous>, transform_indices = @transform_8, window_bounds = array<i64: 9, 4, 32>}, {pipeline_mode = #tpu.pipeline_mode<synchronous>, transform_indices = @transform_9, window_bounds = array<i64: 4, 1>}, {transform_indices = @transform_10, window_bounds = array<i64: 1, 4, 256>}, {transform_indices = @transform_11, window_bounds = array<i64: 1, 1, 256>}]} {
    %c0 = arith.constant 0 : index
    %c0_0 = arith.constant 0 : index
    %c0_1 = arith.constant 0 : index
    %0 = vector.load %arg3[%c0, %c0_0, %c0_1] : memref<1x4x256xf32, #tpu.memory_space<vmem>>, vector<1x4x256xf32>
    %1 = vector.shape_cast %0 : vector<1x4x256xf32> to vector<4x256xf32>
    %c0_2 = arith.constant 0 : index
    %c0_3 = arith.constant 0 : index
    %2 = memref.load %arg1[%c0_2, %c0_3] : memref<4x4xf32, #tpu.memory_space<smem>>
    %3 = vector.extract_strided_slice %1 {offsets = [0, 0], sizes = [1, 256], strides = [1, 1]} : vector<4x256xf32> to vector<1x256xf32>
    %4 = vector.broadcast %2 : f32 to vector<1x256xf32>
    %5 = arith.mulf %4, %3 : vector<1x256xf32>
    %c0_4 = arith.constant 0 : index
    %c1 = arith.constant 1 : index
    %6 = memref.load %arg1[%c0_4, %c1] : memref<4x4xf32, #tpu.memory_space<smem>>
    %7 = vector.extract_strided_slice %1 {offsets = [1, 0], sizes = [1, 256], strides = [1, 1]} : vector<4x256xf32> to vector<1x256xf32>
    %8 = vector.broadcast %6 : f32 to vector<1x256xf32>
    %9 = arith.mulf %8, %7 : vector<1x256xf32>
    %10 = arith.addf %5, %9 : vector<1x256xf32>
    %c0_5 = arith.constant 0 : index
    %c2 = arith.constant 2 : index
    %11 = memref.load %arg1[%c0_5, %c2] : memref<4x4xf32, #tpu.memory_space<smem>>
    %12 = vector.extract_strided_slice %1 {offsets = [2, 0], sizes = [1, 256], strides = [1, 1]} : vector<4x256xf32> to vector<1x256xf32>
    %13 = vector.broadcast %11 : f32 to vector<1x256xf32>
    %14 = arith.mulf %13, %12 : vector<1x256xf32>
    %15 = arith.addf %10, %14 : vector<1x256xf32>
    %c0_6 = arith.constant 0 : index
    %c3 = arith.constant 3 : index
    %16 = memref.load %arg1[%c0_6, %c3] : memref<4x4xf32, #tpu.memory_space<smem>>
    %17 = vector.extract_strided_slice %1 {offsets = [3, 0], sizes = [1, 256], strides = [1, 1]} : vector<4x256xf32> to vector<1x256xf32>
    %18 = vector.broadcast %16 : f32 to vector<1x256xf32>
    %19 = arith.mulf %18, %17 : vector<1x256xf32>
    %20 = arith.addf %15, %19 : vector<1x256xf32>
    %c0_7 = arith.constant 0 : index
    %21 = memref.load %arg2[%c0_7] : memref<4xf32, #tpu.memory_space<smem>>
    %22 = vector.broadcast %21 : f32 to vector<1x256xf32>
    %23 = arith.addf %20, %22 : vector<1x256xf32>
    %c1_8 = arith.constant 1 : index
    %c0_9 = arith.constant 0 : index
    %24 = memref.load %arg1[%c1_8, %c0_9] : memref<4x4xf32, #tpu.memory_space<smem>>
    %25 = vector.extract_strided_slice %1 {offsets = [0, 0], sizes = [1, 256], strides = [1, 1]} : vector<4x256xf32> to vector<1x256xf32>
    %26 = vector.broadcast %24 : f32 to vector<1x256xf32>
    %27 = arith.mulf %26, %25 : vector<1x256xf32>
    %c1_10 = arith.constant 1 : index
    %c1_11 = arith.constant 1 : index
    %28 = memref.load %arg1[%c1_10, %c1_11] : memref<4x4xf32, #tpu.memory_space<smem>>
    %29 = vector.extract_strided_slice %1 {offsets = [1, 0], sizes = [1, 256], strides = [1, 1]} : vector<4x256xf32> to vector<1x256xf32>
    %30 = vector.broadcast %28 : f32 to vector<1x256xf32>
    %31 = arith.mulf %30, %29 : vector<1x256xf32>
    %32 = arith.addf %27, %31 : vector<1x256xf32>
    %c1_12 = arith.constant 1 : index
    %c2_13 = arith.constant 2 : index
    %33 = memref.load %arg1[%c1_12, %c2_13] : memref<4x4xf32, #tpu.memory_space<smem>>
    %34 = vector.extract_strided_slice %1 {offsets = [2, 0], sizes = [1, 256], strides = [1, 1]} : vector<4x256xf32> to vector<1x256xf32>
    %35 = vector.broadcast %33 : f32 to vector<1x256xf32>
    %36 = arith.mulf %35, %34 : vector<1x256xf32>
    %37 = arith.addf %32, %36 : vector<1x256xf32>
    %c1_14 = arith.constant 1 : index
    %c3_15 = arith.constant 3 : index
    %38 = memref.load %arg1[%c1_14, %c3_15] : memref<4x4xf32, #tpu.memory_space<smem>>
    %39 = vector.extract_strided_slice %1 {offsets = [3, 0], sizes = [1, 256], strides = [1, 1]} : vector<4x256xf32> to vector<1x256xf32>
    %40 = vector.broadcast %38 : f32 to vector<1x256xf32>
    %41 = arith.mulf %40, %39 : vector<1x256xf32>
    %42 = arith.addf %37, %41 : vector<1x256xf32>
    %c1_16 = arith.constant 1 : index
    %43 = memref.load %arg2[%c1_16] : memref<4xf32, #tpu.memory_space<smem>>
    %44 = vector.broadcast %43 : f32 to vector<1x256xf32>
    %45 = arith.addf %42, %44 : vector<1x256xf32>
    %c2_17 = arith.constant 2 : index
    %c0_18 = arith.constant 0 : index
    %46 = memref.load %arg1[%c2_17, %c0_18] : memref<4x4xf32, #tpu.memory_space<smem>>
    %47 = vector.extract_strided_slice %1 {offsets = [0, 0], sizes = [1, 256], strides = [1, 1]} : vector<4x256xf32> to vector<1x256xf32>
    %48 = vector.broadcast %46 : f32 to vector<1x256xf32>
    %49 = arith.mulf %48, %47 : vector<1x256xf32>
    %c2_19 = arith.constant 2 : index
    %c1_20 = arith.constant 1 : index
    %50 = memref.load %arg1[%c2_19, %c1_20] : memref<4x4xf32, #tpu.memory_space<smem>>
    %51 = vector.extract_strided_slice %1 {offsets = [1, 0], sizes = [1, 256], strides = [1, 1]} : vector<4x256xf32> to vector<1x256xf32>
    %52 = vector.broadcast %50 : f32 to vector<1x256xf32>
    %53 = arith.mulf %52, %51 : vector<1x256xf32>
    %54 = arith.addf %49, %53 : vector<1x256xf32>
    %c2_21 = arith.constant 2 : index
    %c2_22 = arith.constant 2 : index
    %55 = memref.load %arg1[%c2_21, %c2_22] : memref<4x4xf32, #tpu.memory_space<smem>>
    %56 = vector.extract_strided_slice %1 {offsets = [2, 0], sizes = [1, 256], strides = [1, 1]} : vector<4x256xf32> to vector<1x256xf32>
    %57 = vector.broadcast %55 : f32 to vector<1x256xf32>
    %58 = arith.mulf %57, %56 : vector<1x256xf32>
    %59 = arith.addf %54, %58 : vector<1x256xf32>
    %c2_23 = arith.constant 2 : index
    %c3_24 = arith.constant 3 : index
    %60 = memref.load %arg1[%c2_23, %c3_24] : memref<4x4xf32, #tpu.memory_space<smem>>
    %61 = vector.extract_strided_slice %1 {offsets = [3, 0], sizes = [1, 256], strides = [1, 1]} : vector<4x256xf32> to vector<1x256xf32>
    %62 = vector.broadcast %60 : f32 to vector<1x256xf32>
    %63 = arith.mulf %62, %61 : vector<1x256xf32>
    %64 = arith.addf %59, %63 : vector<1x256xf32>
    %c2_25 = arith.constant 2 : index
    %65 = memref.load %arg2[%c2_25] : memref<4xf32, #tpu.memory_space<smem>>
    %66 = vector.broadcast %65 : f32 to vector<1x256xf32>
    %67 = arith.addf %64, %66 : vector<1x256xf32>
    %c3_26 = arith.constant 3 : index
    %c0_27 = arith.constant 0 : index
    %68 = memref.load %arg1[%c3_26, %c0_27] : memref<4x4xf32, #tpu.memory_space<smem>>
    %69 = vector.extract_strided_slice %1 {offsets = [0, 0], sizes = [1, 256], strides = [1, 1]} : vector<4x256xf32> to vector<1x256xf32>
    %70 = vector.broadcast %68 : f32 to vector<1x256xf32>
    %71 = arith.mulf %70, %69 : vector<1x256xf32>
    %c3_28 = arith.constant 3 : index
    %c1_29 = arith.constant 1 : index
    %72 = memref.load %arg1[%c3_28, %c1_29] : memref<4x4xf32, #tpu.memory_space<smem>>
    %73 = vector.extract_strided_slice %1 {offsets = [1, 0], sizes = [1, 256], strides = [1, 1]} : vector<4x256xf32> to vector<1x256xf32>
    %74 = vector.broadcast %72 : f32 to vector<1x256xf32>
    %75 = arith.mulf %74, %73 : vector<1x256xf32>
    %76 = arith.addf %71, %75 : vector<1x256xf32>
    %c3_30 = arith.constant 3 : index
    %c2_31 = arith.constant 2 : index
    %77 = memref.load %arg1[%c3_30, %c2_31] : memref<4x4xf32, #tpu.memory_space<smem>>
    %78 = vector.extract_strided_slice %1 {offsets = [2, 0], sizes = [1, 256], strides = [1, 1]} : vector<4x256xf32> to vector<1x256xf32>
    %79 = vector.broadcast %77 : f32 to vector<1x256xf32>
    %80 = arith.mulf %79, %78 : vector<1x256xf32>
    %81 = arith.addf %76, %80 : vector<1x256xf32>
    %c3_32 = arith.constant 3 : index
    %c3_33 = arith.constant 3 : index
    %82 = memref.load %arg1[%c3_32, %c3_33] : memref<4x4xf32, #tpu.memory_space<smem>>
    %83 = vector.extract_strided_slice %1 {offsets = [3, 0], sizes = [1, 256], strides = [1, 1]} : vector<4x256xf32> to vector<1x256xf32>
    %84 = vector.broadcast %82 : f32 to vector<1x256xf32>
    %85 = arith.mulf %84, %83 : vector<1x256xf32>
    %86 = arith.addf %81, %85 : vector<1x256xf32>
    %c3_34 = arith.constant 3 : index
    %87 = memref.load %arg2[%c3_34] : memref<4xf32, #tpu.memory_space<smem>>
    %88 = vector.broadcast %87 : f32 to vector<1x256xf32>
    %89 = arith.addf %86, %88 : vector<1x256xf32>
    %90 = tpu.concatenate %23, %45, %67, %89 in 0 : vector<1x256xf32>, vector<1x256xf32>, vector<1x256xf32>, vector<1x256xf32> -> vector<4x256xf32>
    %91 = vector.extract_strided_slice %90 {offsets = [0, 0], sizes = [2, 256], strides = [1, 1]} : vector<4x256xf32> to vector<2x256xf32>
    %92 = vector.extract_strided_slice %90 {offsets = [2, 0], sizes = [2, 256], strides = [1, 1]} : vector<4x256xf32> to vector<2x256xf32>
    %c0_35 = arith.constant 0 : index
    %c0_36 = arith.constant 0 : index
    %c0_37 = arith.constant 0 : index
    %93 = vector.load %arg4[%c0_35, %c0_36, %c0_37] : memref<1x2x256xf32, #tpu.memory_space<vmem>>, vector<1x2x256xf32>
    %94 = vector.shape_cast %93 : vector<1x2x256xf32> to vector<2x256xf32>
    %95 = tpu.concatenate %91, %94 in 0 : vector<2x256xf32>, vector<2x256xf32> -> vector<4x256xf32>
    %96 = tpu.iota {dimensions = array<i32: 1>} : vector<1x256xi32>
    %c16_i32 = arith.constant 16 : i32
    %c0_i32 = arith.constant 0 : i32
    %97 = arith.cmpi eq, %c16_i32, %c0_i32 : i32
    %c1_i32 = arith.constant 1 : i32
    %98 = arith.select %97, %c1_i32, %c16_i32 : i32
    %99 = vector.broadcast %98 : i32 to vector<1x256xi32>
    %100 = arith.remsi %96, %99 : vector<1x256xi32>
    %c0_i32_38 = arith.constant 0 : i32
    %101 = vector.broadcast %c0_i32_38 : i32 to vector<1x256xi32>
    %102 = arith.cmpi ne, %100, %101 : vector<1x256xi32>
    %c0_i32_39 = arith.constant 0 : i32
    %103 = vector.broadcast %c0_i32_39 : i32 to vector<1x256xi32>
    %104 = arith.cmpi slt, %100, %103 : vector<1x256xi32>
    %c0_i32_40 = arith.constant 0 : i32
    %105 = arith.cmpi slt, %98, %c0_i32_40 : i32
    %106 = vector.broadcast %105 : i1 to vector<1x256xi1>
    %107 = vector.broadcast %106 : vector<1x256xi1> to vector<1x256xi1>
    %108 = arith.xori %104, %107 : vector<1x256xi1>
    %109 = arith.andi %108, %102 : vector<1x256xi1>
    %110 = vector.broadcast %98 : i32 to vector<1x256xi32>
    %111 = arith.addi %100, %110 : vector<1x256xi32>
    %112 = arith.select %109, %111, %100 : vector<1x256xi1>, vector<1x256xi32>
    %c1_i32_41 = arith.constant 1 : i32
    %113 = vector.broadcast %c1_i32_41 : i32 to vector<1x256xi32>
    %114 = arith.cmpi sge, %112, %113 : vector<1x256xi32>
    %115 = arith.extui %114 : vector<1x256xi1> to vector<1x256xi32>
    %116 = arith.sitofp %115 : vector<1x256xi32> to vector<1x256xf32>
    %c15_i32 = arith.constant 15 : i32
    %117 = vector.broadcast %c15_i32 : i32 to vector<1x256xi32>
    %118 = arith.cmpi slt, %112, %117 : vector<1x256xi32>
    %119 = arith.extui %118 : vector<1x256xi1> to vector<1x256xi32>
    %120 = arith.sitofp %119 : vector<1x256xi32> to vector<1x256xf32>
    %cst = arith.constant 0.000000e+00 : f32
    %121 = vector.broadcast %cst : f32 to vector<4x17xf32>
    %122 = tpu.concatenate %121, %95, %121 in 1 : vector<4x17xf32>, vector<4x256xf32>, vector<4x17xf32> -> vector<4x290xf32>
    %cst_42 = arith.constant 0.000000e+00 : f32
    %123 = vector.broadcast %cst_42 : f32 to vector<32x256xf32>
    %124 = vector.extract_strided_slice %122 {offsets = [0, 0], sizes = [4, 256], strides = [1, 1]} : vector<4x290xf32> to vector<4x256xf32>
    %125 = vector.broadcast %116 : vector<1x256xf32> to vector<4x256xf32>
    %126 = arith.mulf %124, %125 : vector<4x256xf32>
    %c0_43 = arith.constant 0 : index
    %c0_44 = arith.constant 0 : index
    %c0_45 = arith.constant 0 : index
    %127 = vector.load %arg5[%c0_43, %c0_44, %c0_45] : memref<9x32x4xf32, #tpu.memory_space<vmem>>, vector<1x32x4xf32>
    %128 = vector.shape_cast %127 : vector<1x32x4xf32> to vector<32x4xf32>
    %129 = arith.truncf %128 : vector<32x4xf32> to vector<32x4xbf16>
    %130 = arith.truncf %126 : vector<4x256xf32> to vector<4x256xbf16>
    %cst_46 = arith.constant dense<0.000000e+00> : vector<32x256xf32>
    %131 = tpu.matmul %129, %130, %cst_46 {dimension_numbers = #tpu.dot_dimension_numbers<[1], [0], [0], [1], [0, 0, 1, 1], [], []>} : vector<32x4xbf16>, vector<4x256xbf16>, vector<32x256xf32> -> vector<32x256xf32>
    %132 = arith.addf %123, %131 : vector<32x256xf32>
    %133 = vector.extract_strided_slice %122 {offsets = [0, 1], sizes = [4, 256], strides = [1, 1]} : vector<4x290xf32> to vector<4x256xf32>
    %c1_47 = arith.constant 1 : index
    %c0_48 = arith.constant 0 : index
    %c0_49 = arith.constant 0 : index
    %134 = vector.load %arg5[%c1_47, %c0_48, %c0_49] : memref<9x32x4xf32, #tpu.memory_space<vmem>>, vector<1x32x4xf32>
    %135 = vector.shape_cast %134 : vector<1x32x4xf32> to vector<32x4xf32>
    %136 = arith.truncf %135 : vector<32x4xf32> to vector<32x4xbf16>
    %137 = arith.truncf %133 : vector<4x256xf32> to vector<4x256xbf16>
    %cst_50 = arith.constant dense<0.000000e+00> : vector<32x256xf32>
    %138 = tpu.matmul %136, %137, %cst_50 {dimension_numbers = #tpu.dot_dimension_numbers<[1], [0], [0], [1], [0, 0, 1, 1], [], []>} : vector<32x4xbf16>, vector<4x256xbf16>, vector<32x256xf32> -> vector<32x256xf32>
    %139 = arith.addf %132, %138 : vector<32x256xf32>
    %140 = vector.extract_strided_slice %122 {offsets = [0, 2], sizes = [4, 256], strides = [1, 1]} : vector<4x290xf32> to vector<4x256xf32>
    %141 = vector.broadcast %120 : vector<1x256xf32> to vector<4x256xf32>
    %142 = arith.mulf %140, %141 : vector<4x256xf32>
    %c2_51 = arith.constant 2 : index
    %c0_52 = arith.constant 0 : index
    %c0_53 = arith.constant 0 : index
    %143 = vector.load %arg5[%c2_51, %c0_52, %c0_53] : memref<9x32x4xf32, #tpu.memory_space<vmem>>, vector<1x32x4xf32>
    %144 = vector.shape_cast %143 : vector<1x32x4xf32> to vector<32x4xf32>
    %145 = arith.truncf %144 : vector<32x4xf32> to vector<32x4xbf16>
    %146 = arith.truncf %142 : vector<4x256xf32> to vector<4x256xbf16>
    %cst_54 = arith.constant dense<0.000000e+00> : vector<32x256xf32>
    %147 = tpu.matmul %145, %146, %cst_54 {dimension_numbers = #tpu.dot_dimension_numbers<[1], [0], [0], [1], [0, 0, 1, 1], [], []>} : vector<32x4xbf16>, vector<4x256xbf16>, vector<32x256xf32> -> vector<32x256xf32>
    %148 = arith.addf %139, %147 : vector<32x256xf32>
    %149 = vector.extract_strided_slice %122 {offsets = [0, 16], sizes = [4, 256], strides = [1, 1]} : vector<4x290xf32> to vector<4x256xf32>
    %150 = vector.broadcast %116 : vector<1x256xf32> to vector<4x256xf32>
    %151 = arith.mulf %149, %150 : vector<4x256xf32>
    %c3_55 = arith.constant 3 : index
    %c0_56 = arith.constant 0 : index
    %c0_57 = arith.constant 0 : index
    %152 = vector.load %arg5[%c3_55, %c0_56, %c0_57] : memref<9x32x4xf32, #tpu.memory_space<vmem>>, vector<1x32x4xf32>
    %153 = vector.shape_cast %152 : vector<1x32x4xf32> to vector<32x4xf32>
    %154 = arith.truncf %153 : vector<32x4xf32> to vector<32x4xbf16>
    %155 = arith.truncf %151 : vector<4x256xf32> to vector<4x256xbf16>
    %cst_58 = arith.constant dense<0.000000e+00> : vector<32x256xf32>
    %156 = tpu.matmul %154, %155, %cst_58 {dimension_numbers = #tpu.dot_dimension_numbers<[1], [0], [0], [1], [0, 0, 1, 1], [], []>} : vector<32x4xbf16>, vector<4x256xbf16>, vector<32x256xf32> -> vector<32x256xf32>
    %157 = arith.addf %148, %156 : vector<32x256xf32>
    %158 = vector.extract_strided_slice %122 {offsets = [0, 17], sizes = [4, 256], strides = [1, 1]} : vector<4x290xf32> to vector<4x256xf32>
    %c4 = arith.constant 4 : index
    %c0_59 = arith.constant 0 : index
    %c0_60 = arith.constant 0 : index
    %159 = vector.load %arg5[%c4, %c0_59, %c0_60] : memref<9x32x4xf32, #tpu.memory_space<vmem>>, vector<1x32x4xf32>
    %160 = vector.shape_cast %159 : vector<1x32x4xf32> to vector<32x4xf32>
    %161 = arith.truncf %160 : vector<32x4xf32> to vector<32x4xbf16>
    %162 = arith.truncf %158 : vector<4x256xf32> to vector<4x256xbf16>
    %cst_61 = arith.constant dense<0.000000e+00> : vector<32x256xf32>
    %163 = tpu.matmul %161, %162, %cst_61 {dimension_numbers = #tpu.dot_dimension_numbers<[1], [0], [0], [1], [0, 0, 1, 1], [], []>} : vector<32x4xbf16>, vector<4x256xbf16>, vector<32x256xf32> -> vector<32x256xf32>
    %164 = arith.addf %157, %163 : vector<32x256xf32>
    %165 = vector.extract_strided_slice %122 {offsets = [0, 18], sizes = [4, 256], strides = [1, 1]} : vector<4x290xf32> to vector<4x256xf32>
    %166 = vector.broadcast %120 : vector<1x256xf32> to vector<4x256xf32>
    %167 = arith.mulf %165, %166 : vector<4x256xf32>
    %c5 = arith.constant 5 : index
    %c0_62 = arith.constant 0 : index
    %c0_63 = arith.constant 0 : index
    %168 = vector.load %arg5[%c5, %c0_62, %c0_63] : memref<9x32x4xf32, #tpu.memory_space<vmem>>, vector<1x32x4xf32>
    %169 = vector.shape_cast %168 : vector<1x32x4xf32> to vector<32x4xf32>
    %170 = arith.truncf %169 : vector<32x4xf32> to vector<32x4xbf16>
    %171 = arith.truncf %167 : vector<4x256xf32> to vector<4x256xbf16>
    %cst_64 = arith.constant dense<0.000000e+00> : vector<32x256xf32>
    %172 = tpu.matmul %170, %171, %cst_64 {dimension_numbers = #tpu.dot_dimension_numbers<[1], [0], [0], [1], [0, 0, 1, 1], [], []>} : vector<32x4xbf16>, vector<4x256xbf16>, vector<32x256xf32> -> vector<32x256xf32>
    %173 = arith.addf %164, %172 : vector<32x256xf32>
    %174 = vector.extract_strided_slice %122 {offsets = [0, 32], sizes = [4, 256], strides = [1, 1]} : vector<4x290xf32> to vector<4x256xf32>
    %175 = vector.broadcast %116 : vector<1x256xf32> to vector<4x256xf32>
    %176 = arith.mulf %174, %175 : vector<4x256xf32>
    %c6 = arith.constant 6 : index
    %c0_65 = arith.constant 0 : index
    %c0_66 = arith.constant 0 : index
    %177 = vector.load %arg5[%c6, %c0_65, %c0_66] : memref<9x32x4xf32, #tpu.memory_space<vmem>>, vector<1x32x4xf32>
    %178 = vector.shape_cast %177 : vector<1x32x4xf32> to vector<32x4xf32>
    %179 = arith.truncf %178 : vector<32x4xf32> to vector<32x4xbf16>
    %180 = arith.truncf %176 : vector<4x256xf32> to vector<4x256xbf16>
    %cst_67 = arith.constant dense<0.000000e+00> : vector<32x256xf32>
    %181 = tpu.matmul %179, %180, %cst_67 {dimension_numbers = #tpu.dot_dimension_numbers<[1], [0], [0], [1], [0, 0, 1, 1], [], []>} : vector<32x4xbf16>, vector<4x256xbf16>, vector<32x256xf32> -> vector<32x256xf32>
    %182 = arith.addf %173, %181 : vector<32x256xf32>
    %183 = vector.extract_strided_slice %122 {offsets = [0, 33], sizes = [4, 256], strides = [1, 1]} : vector<4x290xf32> to vector<4x256xf32>
    %c7 = arith.constant 7 : index
    %c0_68 = arith.constant 0 : index
    %c0_69 = arith.constant 0 : index
    %184 = vector.load %arg5[%c7, %c0_68, %c0_69] : memref<9x32x4xf32, #tpu.memory_space<vmem>>, vector<1x32x4xf32>
    %185 = vector.shape_cast %184 : vector<1x32x4xf32> to vector<32x4xf32>
    %186 = arith.truncf %185 : vector<32x4xf32> to vector<32x4xbf16>
    %187 = arith.truncf %183 : vector<4x256xf32> to vector<4x256xbf16>
    %cst_70 = arith.constant dense<0.000000e+00> : vector<32x256xf32>
    %188 = tpu.matmul %186, %187, %cst_70 {dimension_numbers = #tpu.dot_dimension_numbers<[1], [0], [0], [1], [0, 0, 1, 1], [], []>} : vector<32x4xbf16>, vector<4x256xbf16>, vector<32x256xf32> -> vector<32x256xf32>
    %189 = arith.addf %182, %188 : vector<32x256xf32>
    %190 = vector.extract_strided_slice %122 {offsets = [0, 34], sizes = [4, 256], strides = [1, 1]} : vector<4x290xf32> to vector<4x256xf32>
    %191 = vector.broadcast %120 : vector<1x256xf32> to vector<4x256xf32>
    %192 = arith.mulf %190, %191 : vector<4x256xf32>
    %c8 = arith.constant 8 : index
    %c0_71 = arith.constant 0 : index
    %c0_72 = arith.constant 0 : index
    %193 = vector.load %arg5[%c8, %c0_71, %c0_72] : memref<9x32x4xf32, #tpu.memory_space<vmem>>, vector<1x32x4xf32>
    %194 = vector.shape_cast %193 : vector<1x32x4xf32> to vector<32x4xf32>
    %195 = arith.truncf %194 : vector<32x4xf32> to vector<32x4xbf16>
    %196 = arith.truncf %192 : vector<4x256xf32> to vector<4x256xbf16>
    %cst_73 = arith.constant dense<0.000000e+00> : vector<32x256xf32>
    %197 = tpu.matmul %195, %196, %cst_73 {dimension_numbers = #tpu.dot_dimension_numbers<[1], [0], [0], [1], [0, 0, 1, 1], [], []>} : vector<32x4xbf16>, vector<4x256xbf16>, vector<32x256xf32> -> vector<32x256xf32>
    %198 = arith.addf %189, %197 : vector<32x256xf32>
    %c0_74 = arith.constant 0 : index
    %c0_75 = arith.constant 0 : index
    %199 = vector.load %arg6[%c0_74, %c0_75] : memref<32x1xf32, #tpu.memory_space<vmem>>, vector<32x1xf32>
    %200 = vector.broadcast %199 : vector<32x1xf32> to vector<32x256xf32>
    %201 = arith.addf %198, %200 : vector<32x256xf32>
    %cst_76 = arith.constant 0.000000e+00 : f32
    %202 = vector.broadcast %cst_76 : f32 to vector<32x256xf32>
    %203 = arith.maximumf %201, %202 : vector<32x256xf32>
    %c0_77 = arith.constant 0 : index
    %c0_78 = arith.constant 0 : index
    %204 = vector.load %arg7[%c0_77, %c0_78] : memref<32x32xf32, #tpu.memory_space<vmem>>, vector<32x32xf32>
    %205 = arith.truncf %204 : vector<32x32xf32> to vector<32x32xbf16>
    %206 = arith.truncf %203 : vector<32x256xf32> to vector<32x256xbf16>
    %cst_79 = arith.constant dense<0.000000e+00> : vector<32x256xf32>
    %207 = tpu.matmul %205, %206, %cst_79 {dimension_numbers = #tpu.dot_dimension_numbers<[1], [0], [0], [1], [0, 0, 1, 1], [], []>} : vector<32x32xbf16>, vector<32x256xbf16>, vector<32x256xf32> -> vector<32x256xf32>
    %c0_80 = arith.constant 0 : index
    %c0_81 = arith.constant 0 : index
    %208 = vector.load %arg8[%c0_80, %c0_81] : memref<32x1xf32, #tpu.memory_space<vmem>>, vector<32x1xf32>
    %209 = vector.broadcast %208 : vector<32x1xf32> to vector<32x256xf32>
    %210 = arith.addf %207, %209 : vector<32x256xf32>
    %cst_82 = arith.constant 0.000000e+00 : f32
    %211 = vector.broadcast %cst_82 : f32 to vector<32x256xf32>
    %212 = arith.maximumf %210, %211 : vector<32x256xf32>
    %cst_83 = arith.constant 0.000000e+00 : f32
    %213 = vector.broadcast %cst_83 : f32 to vector<32x17xf32>
    %214 = tpu.concatenate %213, %212, %213 in 1 : vector<32x17xf32>, vector<32x256xf32>, vector<32x17xf32> -> vector<32x290xf32>
    %cst_84 = arith.constant 0.000000e+00 : f32
    %215 = vector.broadcast %cst_84 : f32 to vector<4x256xf32>
    %216 = vector.extract_strided_slice %214 {offsets = [0, 0], sizes = [32, 256], strides = [1, 1]} : vector<32x290xf32> to vector<32x256xf32>
    %217 = vector.broadcast %116 : vector<1x256xf32> to vector<32x256xf32>
    %218 = arith.mulf %216, %217 : vector<32x256xf32>
    %c0_85 = arith.constant 0 : index
    %c0_86 = arith.constant 0 : index
    %c0_87 = arith.constant 0 : index
    %219 = vector.load %arg9[%c0_85, %c0_86, %c0_87] : memref<9x4x32xf32, #tpu.memory_space<vmem>>, vector<1x4x32xf32>
    %220 = vector.shape_cast %219 : vector<1x4x32xf32> to vector<4x32xf32>
    %221 = arith.truncf %220 : vector<4x32xf32> to vector<4x32xbf16>
    %222 = arith.truncf %218 : vector<32x256xf32> to vector<32x256xbf16>
    %cst_88 = arith.constant dense<0.000000e+00> : vector<4x256xf32>
    %223 = tpu.matmul %221, %222, %cst_88 {dimension_numbers = #tpu.dot_dimension_numbers<[1], [0], [0], [1], [0, 0, 1, 1], [], []>} : vector<4x32xbf16>, vector<32x256xbf16>, vector<4x256xf32> -> vector<4x256xf32>
    %224 = arith.addf %215, %223 : vector<4x256xf32>
    %225 = vector.extract_strided_slice %214 {offsets = [0, 1], sizes = [32, 256], strides = [1, 1]} : vector<32x290xf32> to vector<32x256xf32>
    %c1_89 = arith.constant 1 : index
    %c0_90 = arith.constant 0 : index
    %c0_91 = arith.constant 0 : index
    %226 = vector.load %arg9[%c1_89, %c0_90, %c0_91] : memref<9x4x32xf32, #tpu.memory_space<vmem>>, vector<1x4x32xf32>
    %227 = vector.shape_cast %226 : vector<1x4x32xf32> to vector<4x32xf32>
    %228 = arith.truncf %227 : vector<4x32xf32> to vector<4x32xbf16>
    %229 = arith.truncf %225 : vector<32x256xf32> to vector<32x256xbf16>
    %cst_92 = arith.constant dense<0.000000e+00> : vector<4x256xf32>
    %230 = tpu.matmul %228, %229, %cst_92 {dimension_numbers = #tpu.dot_dimension_numbers<[1], [0], [0], [1], [0, 0, 1, 1], [], []>} : vector<4x32xbf16>, vector<32x256xbf16>, vector<4x256xf32> -> vector<4x256xf32>
    %231 = arith.addf %224, %230 : vector<4x256xf32>
    %232 = vector.extract_strided_slice %214 {offsets = [0, 2], sizes = [32, 256], strides = [1, 1]} : vector<32x290xf32> to vector<32x256xf32>
    %233 = vector.broadcast %120 : vector<1x256xf32> to vector<32x256xf32>
    %234 = arith.mulf %232, %233 : vector<32x256xf32>
    %c2_93 = arith.constant 2 : index
    %c0_94 = arith.constant 0 : index
    %c0_95 = arith.constant 0 : index
    %235 = vector.load %arg9[%c2_93, %c0_94, %c0_95] : memref<9x4x32xf32, #tpu.memory_space<vmem>>, vector<1x4x32xf32>
    %236 = vector.shape_cast %235 : vector<1x4x32xf32> to vector<4x32xf32>
    %237 = arith.truncf %236 : vector<4x32xf32> to vector<4x32xbf16>
    %238 = arith.truncf %234 : vector<32x256xf32> to vector<32x256xbf16>
    %cst_96 = arith.constant dense<0.000000e+00> : vector<4x256xf32>
    %239 = tpu.matmul %237, %238, %cst_96 {dimension_numbers = #tpu.dot_dimension_numbers<[1], [0], [0], [1], [0, 0, 1, 1], [], []>} : vector<4x32xbf16>, vector<32x256xbf16>, vector<4x256xf32> -> vector<4x256xf32>
    %240 = arith.addf %231, %239 : vector<4x256xf32>
    %241 = vector.extract_strided_slice %214 {offsets = [0, 16], sizes = [32, 256], strides = [1, 1]} : vector<32x290xf32> to vector<32x256xf32>
    %242 = vector.broadcast %116 : vector<1x256xf32> to vector<32x256xf32>
    %243 = arith.mulf %241, %242 : vector<32x256xf32>
    %c3_97 = arith.constant 3 : index
    %c0_98 = arith.constant 0 : index
    %c0_99 = arith.constant 0 : index
    %244 = vector.load %arg9[%c3_97, %c0_98, %c0_99] : memref<9x4x32xf32, #tpu.memory_space<vmem>>, vector<1x4x32xf32>
    %245 = vector.shape_cast %244 : vector<1x4x32xf32> to vector<4x32xf32>
    %246 = arith.truncf %245 : vector<4x32xf32> to vector<4x32xbf16>
    %247 = arith.truncf %243 : vector<32x256xf32> to vector<32x256xbf16>
    %cst_100 = arith.constant dense<0.000000e+00> : vector<4x256xf32>
    %248 = tpu.matmul %246, %247, %cst_100 {dimension_numbers = #tpu.dot_dimension_numbers<[1], [0], [0], [1], [0, 0, 1, 1], [], []>} : vector<4x32xbf16>, vector<32x256xbf16>, vector<4x256xf32> -> vector<4x256xf32>
    %249 = arith.addf %240, %248 : vector<4x256xf32>
    %250 = vector.extract_strided_slice %214 {offsets = [0, 17], sizes = [32, 256], strides = [1, 1]} : vector<32x290xf32> to vector<32x256xf32>
    %c4_101 = arith.constant 4 : index
    %c0_102 = arith.constant 0 : index
    %c0_103 = arith.constant 0 : index
    %251 = vector.load %arg9[%c4_101, %c0_102, %c0_103] : memref<9x4x32xf32, #tpu.memory_space<vmem>>, vector<1x4x32xf32>
    %252 = vector.shape_cast %251 : vector<1x4x32xf32> to vector<4x32xf32>
    %253 = arith.truncf %252 : vector<4x32xf32> to vector<4x32xbf16>
    %254 = arith.truncf %250 : vector<32x256xf32> to vector<32x256xbf16>
    %cst_104 = arith.constant dense<0.000000e+00> : vector<4x256xf32>
    %255 = tpu.matmul %253, %254, %cst_104 {dimension_numbers = #tpu.dot_dimension_numbers<[1], [0], [0], [1], [0, 0, 1, 1], [], []>} : vector<4x32xbf16>, vector<32x256xbf16>, vector<4x256xf32> -> vector<4x256xf32>
    %256 = arith.addf %249, %255 : vector<4x256xf32>
    %257 = vector.extract_strided_slice %214 {offsets = [0, 18], sizes = [32, 256], strides = [1, 1]} : vector<32x290xf32> to vector<32x256xf32>
    %258 = vector.broadcast %120 : vector<1x256xf32> to vector<32x256xf32>
    %259 = arith.mulf %257, %258 : vector<32x256xf32>
    %c5_105 = arith.constant 5 : index
    %c0_106 = arith.constant 0 : index
    %c0_107 = arith.constant 0 : index
    %260 = vector.load %arg9[%c5_105, %c0_106, %c0_107] : memref<9x4x32xf32, #tpu.memory_space<vmem>>, vector<1x4x32xf32>
    %261 = vector.shape_cast %260 : vector<1x4x32xf32> to vector<4x32xf32>
    %262 = arith.truncf %261 : vector<4x32xf32> to vector<4x32xbf16>
    %263 = arith.truncf %259 : vector<32x256xf32> to vector<32x256xbf16>
    %cst_108 = arith.constant dense<0.000000e+00> : vector<4x256xf32>
    %264 = tpu.matmul %262, %263, %cst_108 {dimension_numbers = #tpu.dot_dimension_numbers<[1], [0], [0], [1], [0, 0, 1, 1], [], []>} : vector<4x32xbf16>, vector<32x256xbf16>, vector<4x256xf32> -> vector<4x256xf32>
    %265 = arith.addf %256, %264 : vector<4x256xf32>
    %266 = vector.extract_strided_slice %214 {offsets = [0, 32], sizes = [32, 256], strides = [1, 1]} : vector<32x290xf32> to vector<32x256xf32>
    %267 = vector.broadcast %116 : vector<1x256xf32> to vector<32x256xf32>
    %268 = arith.mulf %266, %267 : vector<32x256xf32>
    %c6_109 = arith.constant 6 : index
    %c0_110 = arith.constant 0 : index
    %c0_111 = arith.constant 0 : index
    %269 = vector.load %arg9[%c6_109, %c0_110, %c0_111] : memref<9x4x32xf32, #tpu.memory_space<vmem>>, vector<1x4x32xf32>
    %270 = vector.shape_cast %269 : vector<1x4x32xf32> to vector<4x32xf32>
    %271 = arith.truncf %270 : vector<4x32xf32> to vector<4x32xbf16>
    %272 = arith.truncf %268 : vector<32x256xf32> to vector<32x256xbf16>
    %cst_112 = arith.constant dense<0.000000e+00> : vector<4x256xf32>
    %273 = tpu.matmul %271, %272, %cst_112 {dimension_numbers = #tpu.dot_dimension_numbers<[1], [0], [0], [1], [0, 0, 1, 1], [], []>} : vector<4x32xbf16>, vector<32x256xbf16>, vector<4x256xf32> -> vector<4x256xf32>
    %274 = arith.addf %265, %273 : vector<4x256xf32>
    %275 = vector.extract_strided_slice %214 {offsets = [0, 33], sizes = [32, 256], strides = [1, 1]} : vector<32x290xf32> to vector<32x256xf32>
    %c7_113 = arith.constant 7 : index
    %c0_114 = arith.constant 0 : index
    %c0_115 = arith.constant 0 : index
    %276 = vector.load %arg9[%c7_113, %c0_114, %c0_115] : memref<9x4x32xf32, #tpu.memory_space<vmem>>, vector<1x4x32xf32>
    %277 = vector.shape_cast %276 : vector<1x4x32xf32> to vector<4x32xf32>
    %278 = arith.truncf %277 : vector<4x32xf32> to vector<4x32xbf16>
    %279 = arith.truncf %275 : vector<32x256xf32> to vector<32x256xbf16>
    %cst_116 = arith.constant dense<0.000000e+00> : vector<4x256xf32>
    %280 = tpu.matmul %278, %279, %cst_116 {dimension_numbers = #tpu.dot_dimension_numbers<[1], [0], [0], [1], [0, 0, 1, 1], [], []>} : vector<4x32xbf16>, vector<32x256xbf16>, vector<4x256xf32> -> vector<4x256xf32>
    %281 = arith.addf %274, %280 : vector<4x256xf32>
    %282 = vector.extract_strided_slice %214 {offsets = [0, 34], sizes = [32, 256], strides = [1, 1]} : vector<32x290xf32> to vector<32x256xf32>
    %283 = vector.broadcast %120 : vector<1x256xf32> to vector<32x256xf32>
    %284 = arith.mulf %282, %283 : vector<32x256xf32>
    %c8_117 = arith.constant 8 : index
    %c0_118 = arith.constant 0 : index
    %c0_119 = arith.constant 0 : index
    %285 = vector.load %arg9[%c8_117, %c0_118, %c0_119] : memref<9x4x32xf32, #tpu.memory_space<vmem>>, vector<1x4x32xf32>
    %286 = vector.shape_cast %285 : vector<1x4x32xf32> to vector<4x32xf32>
    %287 = arith.truncf %286 : vector<4x32xf32> to vector<4x32xbf16>
    %288 = arith.truncf %284 : vector<32x256xf32> to vector<32x256xbf16>
    %cst_120 = arith.constant dense<0.000000e+00> : vector<4x256xf32>
    %289 = tpu.matmul %287, %288, %cst_120 {dimension_numbers = #tpu.dot_dimension_numbers<[1], [0], [0], [1], [0, 0, 1, 1], [], []>} : vector<4x32xbf16>, vector<32x256xbf16>, vector<4x256xf32> -> vector<4x256xf32>
    %290 = arith.addf %281, %289 : vector<4x256xf32>
    %c0_121 = arith.constant 0 : index
    %c0_122 = arith.constant 0 : index
    %291 = vector.load %arg10[%c0_121, %c0_122] : memref<4x1xf32, #tpu.memory_space<vmem>>, vector<4x1xf32>
    %292 = vector.broadcast %291 : vector<4x1xf32> to vector<4x256xf32>
    %293 = arith.addf %290, %292 : vector<4x256xf32>
    %294 = vector.extract_strided_slice %293 {offsets = [0, 0], sizes = [2, 256], strides = [1, 1]} : vector<4x256xf32> to vector<2x256xf32>
    %295 = vector.extract_strided_slice %293 {offsets = [2, 0], sizes = [2, 256], strides = [1, 1]} : vector<4x256xf32> to vector<2x256xf32>
    %cst_123 = arith.constant 2.000000e+00 : f32
    %296 = vector.broadcast %cst_123 : f32 to vector<2x256xf32>
    %297 = arith.addf %295, %296 : vector<2x256xf32>
    %cst_124 = arith.constant 0.000000e+00 : f32
    %298 = vector.broadcast %cst_124 : f32 to vector<2x256xf32>
    %299 = arith.subf %298, %297 : vector<2x256xf32>
    %300 = math.exp %299 : vector<2x256xf32>
    %cst_125 = arith.constant 1.000000e+00 : f32
    %301 = vector.broadcast %cst_125 : f32 to vector<2x256xf32>
    %302 = arith.addf %301, %300 : vector<2x256xf32>
    %cst_126 = arith.constant 1.000000e+00 : f32
    %303 = vector.broadcast %cst_126 : f32 to vector<2x256xf32>
    %304 = arith.divf %303, %302 : vector<2x256xf32>
    %305 = arith.addf %92, %294 : vector<2x256xf32>
    %306 = arith.mulf %305, %304 : vector<2x256xf32>
    %307 = tpu.concatenate %91, %306 in 0 : vector<2x256xf32>, vector<2x256xf32> -> vector<4x256xf32>
    %c0_127 = arith.constant 0 : index
    %c0_128 = arith.constant 0 : index
    %c0_129 = arith.constant 0 : index
    %308 = vector.load %arg11[%c0_127, %c0_128, %c0_129] : memref<1x4x256xf32, #tpu.memory_space<vmem>>, vector<1x4x256xf32>
    %309 = vector.shape_cast %308 : vector<1x4x256xf32> to vector<4x256xf32>
    %310 = vector.shape_cast %307 : vector<4x256xf32> to vector<1x4x256xf32>
    tpu.vector_store %arg11[%c0_127, %c0_128, %c0_129], %310 {strides = array<i32>} : memref<1x4x256xf32, #tpu.memory_space<vmem>>, vector<1x4x256xf32>,
    %311 = math.log %304 : vector<2x256xf32>
    %cst_130 = arith.constant dense<0.000000e+00> : vector<256xf32>
    %312 = vector.multi_reduction <add>, %311, %cst_130 [0] : vector<2x256xf32> to vector<256xf32>
    %313 = vector.shape_cast %312 : vector<256xf32> to vector<1x256xf32>
    %c0_131 = arith.constant 0 : index
    %c0_132 = arith.constant 0 : index
    %c0_133 = arith.constant 0 : index
    %314 = vector.load %arg12[%c0_131, %c0_132, %c0_133] : memref<1x1x256xf32, #tpu.memory_space<vmem>>, vector<1x1x256xf32>
    %315 = vector.shape_cast %314 : vector<1x1x256xf32> to vector<1x256xf32>
    %316 = vector.shape_cast %313 : vector<1x256xf32> to vector<1x1x256xf32>
    tpu.vector_store %arg12[%c0_131, %c0_132, %c0_133], %316 {strides = array<i32>} : memref<1x1x256xf32, #tpu.memory_space<vmem>>, vector<1x1x256xf32>,
    return
  }
  func.func @transform_0(%arg0: i32) -> (i32, i32) {
    %c0_i32 = arith.constant 0 : i32
    %c0_i32_0 = arith.constant 0 : i32
    %c0_i32_1 = arith.constant 0 : i32
    return %c0_i32, %c0_i32_0 : i32, i32
  }
  func.func @transform_1(%arg0: i32) -> i32 {
    %c0_i32 = arith.constant 0 : i32
    %c0_i32_0 = arith.constant 0 : i32
    return %c0_i32 : i32
  }
  func.func @transform_2(%arg0: i32) -> (i32, i32, i32) {
    %c0_i32 = arith.constant 0 : i32
    %c0_i32_0 = arith.constant 0 : i32
    %c0_i32_1 = arith.constant 0 : i32
    return %arg0, %c0_i32, %c0_i32_0 : i32, i32, i32
  }
  func.func @transform_3(%arg0: i32) -> (i32, i32, i32) {
    %c0_i32 = arith.constant 0 : i32
    %c0_i32_0 = arith.constant 0 : i32
    %c0_i32_1 = arith.constant 0 : i32
    return %arg0, %c0_i32, %c0_i32_0 : i32, i32, i32
  }
  func.func @transform_4(%arg0: i32) -> (i32, i32, i32) {
    %c0_i32 = arith.constant 0 : i32
    %c0_i32_0 = arith.constant 0 : i32
    %c0_i32_1 = arith.constant 0 : i32
    %c0_i32_2 = arith.constant 0 : i32
    return %c0_i32, %c0_i32_0, %c0_i32_1 : i32, i32, i32
  }
  func.func @transform_5(%arg0: i32) -> (i32, i32) {
    %c0_i32 = arith.constant 0 : i32
    %c0_i32_0 = arith.constant 0 : i32
    %c0_i32_1 = arith.constant 0 : i32
    return %c0_i32, %c0_i32_0 : i32, i32
  }
  func.func @transform_6(%arg0: i32) -> (i32, i32) {
    %c0_i32 = arith.constant 0 : i32
    %c0_i32_0 = arith.constant 0 : i32
    %c0_i32_1 = arith.constant 0 : i32
    return %c0_i32, %c0_i32_0 : i32, i32
  }
  func.func @transform_7(%arg0: i32) -> (i32, i32) {
    %c0_i32 = arith.constant 0 : i32
    %c0_i32_0 = arith.constant 0 : i32
    %c0_i32_1 = arith.constant 0 : i32
    return %c0_i32, %c0_i32_0 : i32, i32
  }
  func.func @transform_8(%arg0: i32) -> (i32, i32, i32) {
    %c0_i32 = arith.constant 0 : i32
    %c0_i32_0 = arith.constant 0 : i32
    %c0_i32_1 = arith.constant 0 : i32
    %c0_i32_2 = arith.constant 0 : i32
    return %c0_i32, %c0_i32_0, %c0_i32_1 : i32, i32, i32
  }
  func.func @transform_9(%arg0: i32) -> (i32, i32) {
    %c0_i32 = arith.constant 0 : i32
    %c0_i32_0 = arith.constant 0 : i32
    %c0_i32_1 = arith.constant 0 : i32
    return %c0_i32, %c0_i32_0 : i32, i32
  }
  func.func @transform_10(%arg0: i32) -> (i32, i32, i32) {
    %c0_i32 = arith.constant 0 : i32
    %c0_i32_0 = arith.constant 0 : i32
    %c0_i32_1 = arith.constant 0 : i32
    return %arg0, %c0_i32, %c0_i32_0 : i32, i32, i32
  }
  func.func @transform_11(%arg0: i32) -> (i32, i32, i32) {
    %c0_i32 = arith.constant 0 : i32
    %c0_i32_0 = arith.constant 0 : i32
    %c0_i32_1 = arith.constant 0 : i32
    return %arg0, %c0_i32, %c0_i32_0 : i32, i32, i32
  }
}

</mosaic_0001>

<llo_original>
// kernel: _lambda_.2
$region0: #{_lambda_.2}
  #allocation0 [shape = 'u32[]', space=smem, size = 0x4, offset = 0x4, fixed_abs, tag = 'smem constant byte address 0x4 - core index']
  #allocation1 [shape = 'u32[144,128]{1,0:T(1,128)}', space=vmem, size = 0x12000, scoped, tag = 'internal scratch']
  %s0 = inlined_call_operand.vmem [shape: f32[4,4], index: 0, kind: input, shape index: {}]
  %s1 = inlined_call_operand.vmem [shape: f32[4], index: 1, kind: input, shape index: {}]
  %s2 = inlined_call_operand.vmem [shape: f32[2,4,256], index: 2, kind: input, shape index: {}, may-alias: {2,10}]
  %s3 = inlined_call_operand.vmem [shape: f32[2,2,256], index: 3, kind: input, shape index: {}]
  %s4 = inlined_call_operand.vmem [shape: f32[9,32,4], index: 4, kind: input, shape index: {}]
  %s5 = inlined_call_operand.vmem [shape: f32[32,1], index: 5, kind: input, shape index: {}]
  %s6 = inlined_call_operand.vmem [shape: f32[32,32], index: 6, kind: input, shape index: {}]
  %s7 = inlined_call_operand.vmem [shape: f32[32,1], index: 7, kind: input, shape index: {}]
  %s8 = inlined_call_operand.vmem [shape: f32[9,4,32], index: 8, kind: input, shape index: {}]
  %s9 = inlined_call_operand.vmem [shape: f32[4,1], index: 9, kind: input, shape index: {}]
  %s10 = inlined_call_operand.vmem [shape: f32[2,4,256], index: 10, kind: output, shape index: {0}, may-alias: {2,10}]
  %s11 = inlined_call_operand.vmem [shape: f32[2,1,256], index: 11, kind: output, shape index: {1}]
  %12 = xla_tuple %s10, %s11
  %s13 = sld [smem:[#allocation0]]
  $region89: #{_lambda_.2} parent=0
    _
  %s15 = ssub.s32 1, %s13
  %s16 = scalar_select 0, %s15, %s13
  $region1: #{_lambda_.2} parent=0
    #allocation2 [shape = 'u8[2048]{0}', space=smem, size = 0x800, scoped, tag = 'input window, operand 0, single buffered']
    #allocation3 [shape = 's32[2]{0}', space=sflag, size = 0x8, scoped, tag = 'scoped memory for _lambda_.2']
    #allocation4 [shape = 'u8[512]{0}', space=smem, size = 0x200, scoped, tag = 'input window, operand 1, single buffered']
    #allocation5 [shape = 's32[1]{0}', space=sflag, size = 0x4, scoped, tag = 'scoped memory for _lambda_.2']
    %17 = vsyncpa [#allocation3], 0
    %18 = vsyncpa [#allocation5], 0
    loop: start=0, step=1, limit=4
    $region2: #{_lambda_.2} parent=1 // loop_pre_header
      _
    $region3: #{_lambda_.2} parent=1 // loop_header
      %s20 = sphi 0, %s24
      %p21 = scmp.ge.s32.totalorder %s20, 4
      %s28 = sphi 0, %s28
      %s30 = sphi 0, %s28
      %s31 = sphi 0, %s30
      %s45 = sphi 0, %s31
      %s49 = sphi 0, %s49
      %s51 = sphi 0, %s49
      %s52 = sphi 0, %s51
      %s66 = sphi 0, %s52
      %s72 = sphi 0, %s74
      %s75 = sphi 0, %s72
      %s76 = sphi 0, %s75
      %s92 = sphi 0, %s76
      %s98 = sphi 0, %s100
      %s101 = sphi 0, %s98
      %s102 = sphi 0, %s101
      %s118 = sphi 0, %s102
      %s122 = sphi 0, %s122
      %s124 = sphi 0, %s122
      %s125 = sphi 0, %s124
      %s139 = sphi 0, %s125
      %s143 = sphi 0, %s143
      %s145 = sphi 0, %s143
      %s146 = sphi 0, %s145
      %s160 = sphi 0, %s146
      %s164 = sphi 0, %s164
      %s166 = sphi 0, %s164
      %s167 = sphi 0, %s166
      %s181 = sphi 0, %s167
      %s185 = sphi 0, %s185
      %s187 = sphi 0, %s185
      %s188 = sphi 0, %s187
      %s202 = sphi 0, %s188
      %s206 = sphi 0, %s206
      %s208 = sphi 0, %s206
      %s209 = sphi 0, %s208
      %s223 = sphi 0, %s209
      %s227 = sphi 0, %s227
      %s229 = sphi 0, %s227
      %s230 = sphi 0, %s229
      %s244 = sphi 0, %s230
      %s250 = sphi 0, %s252
      %s253 = sphi 0, %s250
      %s254 = sphi 0, %s253
      %s270 = sphi 0, %s254
      %s276 = sphi 0, %s278
      %s279 = sphi 0, %s276
      %s280 = sphi 0, %s279
      %s296 = sphi 0, %s280
    $region4: #{_lambda_.2} parent=1 // loop_header_branch
      %23 = sbr.rel (%p21) target = $region8
    $region5: #{_lambda_.2} parent=1 // loop_body
      %s25 = ssub.s32 %s20, 1
      %s26 = ssub.s32 %s20, 2
      %s27 = sadd.s32 %s20, 1
      %s29 = sadd.s32 %s28, 1
      %p32 = scmp.eq.s32.totalorder %s20, 1
      %p33 = scmp.ne.s32.totalorder %s28, %s30
      %p34 = scmp.eq.s32.totalorder %s20, 0
      %p35 = por %p33, %p34
      %p36 = scmp.ne.s32.totalorder %s28, %s30
      %p37 = scmp.eq.s32.totalorder %s25, 1
      %p38 = por %p36, %p37
      %p39 = scmp.ne.s32.totalorder %s30, %s31
      %p40 = scmp.eq.s32.totalorder %s25, 0
      %p41 = por %p39, %p40
      %p42 = scmp.ne.s32.totalorder %s30, %s31
      %p43 = scmp.eq.s32.totalorder %s26, 1
      %p44 = por %p42, %p43
      %p46 = scmp.ne.s32.totalorder %s31, %s45
      %p47 = scmp.eq.s32.totalorder %s26, 0
      %p48 = por %p46, %p47
      %s50 = sadd.s32 %s49, 1
      %p53 = scmp.eq.s32.totalorder %s20, 1
      %p54 = scmp.ne.s32.totalorder %s49, %s51
      %p55 = scmp.eq.s32.totalorder %s20, 0
      %p56 = por %p54, %p55
      %p57 = scmp.ne.s32.totalorder %s49, %s51
      %p58 = scmp.eq.s32.totalorder %s25, 1
      %p59 = por %p57, %p58
      %p60 = scmp.ne.s32.totalorder %s51, %s52
      %p61 = scmp.eq.s32.totalorder %s25, 0
      %p62 = por %p60, %p61
      %p63 = scmp.ne.s32.totalorder %s51, %s52
      %p64 = scmp.eq.s32.totalorder %s26, 1
      %p65 = por %p63, %p64
      %p67 = scmp.ne.s32.totalorder %s52, %s66
      %p68 = scmp.eq.s32.totalorder %s26, 0
      %p69 = por %p67, %p68
      %s70 = ssub.s32 %s20, %s27
      %p71 = scmp.eq.s32.totalorder %s70, 0
      %s73 = sadd.s32 %s72, 1
      %s74 = scalar_select %p71, %s72, %s73
      %p77 = pneg %p71
      %p78 = scmp.eq.s32.totalorder %s20, 1
      %p79 = por %p77, %p78
      %p80 = scmp.ne.s32.totalorder %s72, %s75
      %p81 = scmp.eq.s32.totalorder %s20, 0
      %p82 = por %p80, %p81
      %p83 = scmp.ne.s32.totalorder %s72, %s75
      %p84 = scmp.eq.s32.totalorder %s25, 1
      %p85 = por %p83, %p84
      %p86 = scmp.ne.s32.totalorder %s75, %s76
      %p87 = scmp.eq.s32.totalorder %s25, 0
      %p88 = por %p86, %p87
      %p89 = scmp.ne.s32.totalorder %s75, %s76
      %p90 = scmp.eq.s32.totalorder %s26, 1
      %p91 = por %p89, %p90
      %p93 = scmp.ne.s32.totalorder %s76, %s92
      %p94 = scmp.eq.s32.totalorder %s26, 0
      %p95 = por %p93, %p94
      %s96 = ssub.s32 %s20, %s27
      %p97 = scmp.eq.s32.totalorder %s96, 0
      %s99 = sadd.s32 %s98, 1
      %s100 = scalar_select %p97, %s98, %s99
      %p103 = pneg %p97
      %p104 = scmp.eq.s32.totalorder %s20, 1
      %p105 = por %p103, %p104
      %p106 = scmp.ne.s32.totalorder %s98, %s101
      %p107 = scmp.eq.s32.totalorder %s20, 0
      %p108 = por %p106, %p107
      %p109 = scmp.ne.s32.totalorder %s98, %s101
      %p110 = scmp.eq.s32.totalorder %s25, 1
      %p111 = por %p109, %p110
      %p112 = scmp.ne.s32.totalorder %s101, %s102
      %p113 = scmp.eq.s32.totalorder %s25, 0
      %p114 = por %p112, %p113
      %p115 = scmp.ne.s32.totalorder %s101, %s102
      %p116 = scmp.eq.s32.totalorder %s26, 1
      %p117 = por %p115, %p116
      %p119 = scmp.ne.s32.totalorder %s102, %s118
      %p120 = scmp.eq.s32.totalorder %s26, 0
      %p121 = por %p119, %p120
      %s123 = sadd.s32 %s122, 1
      %p126 = scmp.eq.s32.totalorder %s20, 1
      %p127 = scmp.ne.s32.totalorder %s122, %s124
      %p128 = scmp.eq.s32.totalorder %s20, 0
      %p129 = por %p127, %p128
      %p130 = scmp.ne.s32.totalorder %s122, %s124
      %p131 = scmp.eq.s32.totalorder %s25, 1
      %p132 = por %p130, %p131
      %p133 = scmp.ne.s32.totalorder %s124, %s125
      %p134 = scmp.eq.s32.totalorder %s25, 0
      %p135 = por %p133, %p134
      %p136 = scmp.ne.s32.totalorder %s124, %s125
      %p137 = scmp.eq.s32.totalorder %s26, 1
      %p138 = por %p136, %p137
      %p140 = scmp.ne.s32.totalorder %s125, %s139
      %p141 = scmp.eq.s32.totalorder %s26, 0
      %p142 = por %p140, %p141
      %s144 = sadd.s32 %s143, 1
      %p147 = scmp.eq.s32.totalorder %s20, 1
      %p148 = scmp.ne.s32.totalorder %s143, %s145
      %p149 = scmp.eq.s32.totalorder %s20, 0
      %p150 = por %p148, %p149
      %p151 = scmp.ne.s32.totalorder %s143, %s145
      %p152 = scmp.eq.s32.totalorder %s25, 1
      %p153 = por %p151, %p152
      %p154 = scmp.ne.s32.totalorder %s145, %s146
      %p155 = scmp.eq.s32.totalorder %s25, 0
      %p156 = por %p154, %p155
      %p157 = scmp.ne.s32.totalorder %s145, %s146
      %p158 = scmp.eq.s32.totalorder %s26, 1
      %p159 = por %p157, %p158
      %p161 = scmp.ne.s32.totalorder %s146, %s160
      %p162 = scmp.eq.s32.totalorder %s26, 0
      %p163 = por %p161, %p162
      %s165 = sadd.s32 %s164, 1
      %p168 = scmp.eq.s32.totalorder %s20, 1
      %p169 = scmp.ne.s32.totalorder %s164, %s166
      %p170 = scmp.eq.s32.totalorder %s20, 0
      %p171 = por %p169, %p170
      %p172 = scmp.ne.s32.totalorder %s164, %s166
      %p173 = scmp.eq.s32.totalorder %s25, 1
      %p174 = por %p172, %p173
      %p175 = scmp.ne.s32.totalorder %s166, %s167
      %p176 = scmp.eq.s32.totalorder %s25, 0
      %p177 = por %p175, %p176
      %p178 = scmp.ne.s32.totalorder %s166, %s167
      %p179 = scmp.eq.s32.totalorder %s26, 1
      %p180 = por %p178, %p179
      %p182 = scmp.ne.s32.totalorder %s167, %s181
      %p183 = scmp.eq.s32.totalorder %s26, 0
      %p184 = por %p182, %p183
      %s186 = sadd.s32 %s185, 1
      %p189 = scmp.eq.s32.totalorder %s20, 1
      %p190 = scmp.ne.s32.totalorder %s185, %s187
      %p191 = scmp.eq.s32.totalorder %s20, 0
      %p192 = por %p190, %p191
      %p193 = scmp.ne.s32.totalorder %s185, %s187
      %p194 = scmp.eq.s32.totalorder %s25, 1
      %p195 = por %p193, %p194
      %p196 = scmp.ne.s32.totalorder %s187, %s188
      %p197 = scmp.eq.s32.totalorder %s25, 0
      %p198 = por %p196, %p197
      %p199 = scmp.ne.s32.totalorder %s187, %s188
      %p200 = scmp.eq.s32.totalorder %s26, 1
      %p201 = por %p199, %p200
      %p203 = scmp.ne.s32.totalorder %s188, %s202
      %p204 = scmp.eq.s32.totalorder %s26, 0
      %p205 = por %p203, %p204
      %s207 = sadd.s32 %s206, 1
      %p210 = scmp.eq.s32.totalorder %s20, 1
      %p211 = scmp.ne.s32.totalorder %s206, %s208
      %p212 = scmp.eq.s32.totalorder %s20, 0
      %p213 = por %p211, %p212
      %p214 = scmp.ne.s32.totalorder %s206, %s208
      %p215 = scmp.eq.s32.totalorder %s25, 1
      %p216 = por %p214, %p215
      %p217 = scmp.ne.s32.totalorder %s208, %s209
      %p218 = scmp.eq.s32.totalorder %s25, 0
      %p219 = por %p217, %p218
      %p220 = scmp.ne.s32.totalorder %s208, %s209
      %p221 = scmp.eq.s32.totalorder %s26, 1
      %p222 = por %p220, %p221
      %p224 = scmp.ne.s32.totalorder %s209, %s223
      %p225 = scmp.eq.s32.totalorder %s26, 0
      %p226 = por %p224, %p225
      %s228 = sadd.s32 %s227, 1
      %p231 = scmp.eq.s32.totalorder %s20, 1
      %p232 = scmp.ne.s32.totalorder %s227, %s229
      %p233 = scmp.eq.s32.totalorder %s20, 0
      %p234 = por %p232, %p233
      %p235 = scmp.ne.s32.totalorder %s227, %s229
      %p236 = scmp.eq.s32.totalorder %s25, 1
      %p237 = por %p235, %p236
      %p238 = scmp.ne.s32.totalorder %s229, %s230
      %p239 = scmp.eq.s32.totalorder %s25, 0
      %p240 = por %p238, %p239
      %p241 = scmp.ne.s32.totalorder %s229, %s230
      %p242 = scmp.eq.s32.totalorder %s26, 1
      %p243 = por %p241, %p242
      %p245 = scmp.ne.s32.totalorder %s230, %s244
      %p246 = scmp.eq.s32.totalorder %s26, 0
      %p247 = por %p245, %p246
      %s248 = ssub.s32 %s20, %s27
      %p249 = scmp.eq.s32.totalorder %s248, 0
      %s251 = sadd.s32 %s250, 1
      %s252 = scalar_select %p249, %s250, %s251
      %p255 = pneg %p249
      %p256 = scmp.eq.s32.totalorder %s20, 1
      %p257 = por %p255, %p256
      %p258 = scmp.ne.s32.totalorder %s250, %s253
      %p259 = scmp.eq.s32.totalorder %s20, 0
      %p260 = por %p258, %p259
      %p261 = scmp.ne.s32.totalorder %s250, %s253
      %p262 = scmp.eq.s32.totalorder %s25, 1
      %p263 = por %p261, %p262
      %p264 = scmp.ne.s32.totalorder %s253, %s254
      %p265 = scmp.eq.s32.totalorder %s25, 0
      %p266 = por %p264, %p265
      %p267 = scmp.ne.s32.totalorder %s253, %s254
      %p268 = scmp.eq.s32.totalorder %s26, 1
      %p269 = por %p267, %p268
      %p271 = scmp.ne.s32.totalorder %s254, %s270
      %p272 = scmp.eq.s32.totalorder %s26, 0
      %p273 = por %p271, %p272
      %s274 = ssub.s32 %s20, %s27
      %p275 = scmp.eq.s32.totalorder %s274, 0
      %s277 = sadd.s32 %s276, 1
      %s278 = scalar_select %p275, %s276, %s277
      %p281 = pneg %p275
      %p282 = scmp.eq.s32.totalorder %s20, 1
      %p283 = por %p281, %p282
      %p284 = scmp.ne.s32.totalorder %s276, %s279
      %p285 = scmp.eq.s32.totalorder %s20, 0
      %p286 = por %p284, %p285
      %p287 = scmp.ne.s32.totalorder %s276, %s279
      %p288 = scmp.eq.s32.totalorder %s25, 1
      %p289 = por %p287, %p288
      %p290 = scmp.ne.s32.totalorder %s279, %s280
      %p291 = scmp.eq.s32.totalorder %s25, 0
      %p292 = por %p290, %p291
      %p293 = scmp.ne.s32.totalorder %s279, %s280
      %p294 = scmp.eq.s32.totalorder %s26, 1
      %p295 = por %p293, %p294
      %p297 = scmp.ne.s32.totalorder %s280, %s296
      %p298 = scmp.eq.s32.totalorder %s26, 0
      %p299 = por %p297, %p298
      %p300 = scmp.le.s32.totalorder 1, %s20
      %p301 = scmp.lt.s32.totalorder %s20, 3
      %p302 = pnand %p300, %p301
      %p303 = pneg %p302
      // Predicated region
      $region9: #{_lambda_.2} parent=5 // pred_check
        _
      $region10: #{_lambda_.2} parent=5 // pred_check_branch
        %305 = sbr.rel (%p302) target = $region12
      $region11: #{_lambda_.2} parent=5 // pred_region
        %s306 = ssub.s32 %s20, 1
        // Predicated region
        $region13: #{_lambda_.2} parent=11 // pred_check
          %p307 = pneg %p41
        $region14: #{_lambda_.2} parent=11 // pred_check_branch
          %309 = sbr.rel (%p307) target = $region16
        $region15: #{_lambda_.2} parent=11 // pred_region
          %s311 = ssub.s32 64, 64
          %312 = vsyncadd [#allocation3], %s311
          %s314 = sshll.u32 %s0, 4
          %s315 = int_to_ptr.vmem [resolvable:$true] %s314
          %317 = dma.vmem_to_smem %s315, 64, [#allocation2], [#allocation3]
        $region16: #{_lambda_.2} parent=11 // pred_fallthru
          _
        // Predicated region
        $region17: #{_lambda_.2} parent=11 // pred_check
          %p318 = pneg %p62
        $region18: #{_lambda_.2} parent=11 // pred_check_branch
          %320 = sbr.rel (%p318) target = $region20
        $region19: #{_lambda_.2} parent=11 // pred_region
          %s322 = ssub.s32 16, 16
          %323 = vsyncadd [#allocation5], %s322
          %s325 = sshll.u32 %s1, 4
          %s326 = int_to_ptr.vmem [resolvable:$true] %s325
          %328 = dma.vmem_to_smem %s326, 16, [#allocation4], [#allocation5]
        $region20: #{_lambda_.2} parent=11 // pred_fallthru
          _
        // Predicated region
        $region21: #{_lambda_.2} parent=11 // pred_check
          %p329 = pneg %p135
        $region22: #{_lambda_.2} parent=11 // pred_check_branch
          %331 = sbr.rel (%p329) target = $region24
        $region23: #{_lambda_.2} parent=11 // pred_region
          _
        $region24: #{_lambda_.2} parent=11 // pred_fallthru
          _
        // Predicated region
        $region25: #{_lambda_.2} parent=11 // pred_check
          %p332 = pneg %p156
        $region26: #{_lambda_.2} parent=11 // pred_check_branch
          %334 = sbr.rel (%p332) target = $region28
        $region27: #{_lambda_.2} parent=11 // pred_region
          _
        $region28: #{_lambda_.2} parent=11 // pred_fallthru
          _
        // Predicated region
        $region29: #{_lambda_.2} parent=11 // pred_check
          %p335 = pneg %p177
        $region30: #{_lambda_.2} parent=11 // pred_check_branch
          %337 = sbr.rel (%p335) target = $region32
        $region31: #{_lambda_.2} parent=11 // pred_region
          _
        $region32: #{_lambda_.2} parent=11 // pred_fallthru
          _
        // Predicated region
        $region33: #{_lambda_.2} parent=11 // pred_check
          %p338 = pneg %p198
        $region34: #{_lambda_.2} parent=11 // pred_check_branch
          %340 = sbr.rel (%p338) target = $region36
        $region35: #{_lambda_.2} parent=11 // pred_region
          _
        $region36: #{_lambda_.2} parent=11 // pred_fallthru
          _
        // Predicated region
        $region37: #{_lambda_.2} parent=11 // pred_check
          %p341 = pneg %p219
        $region38: #{_lambda_.2} parent=11 // pred_check_branch
          %343 = sbr.rel (%p341) target = $region40
        $region39: #{_lambda_.2} parent=11 // pred_region
          _
        $region40: #{_lambda_.2} parent=11 // pred_fallthru
          _
        // Predicated region
        $region41: #{_lambda_.2} parent=11 // pred_check
          %p344 = pneg %p240
        $region42: #{_lambda_.2} parent=11 // pred_check_branch
          %346 = sbr.rel (%p344) target = $region44
        $region43: #{_lambda_.2} parent=11 // pred_region
          _
        $region44: #{_lambda_.2} parent=11 // pred_fallthru
          _
      $region12: #{_lambda_.2} parent=5 // pred_fallthru
        _
      %p347 = scmp.lt.s32.totalorder %s20, 2
      // Predicated region
      $region45: #{_lambda_.2} parent=5 // pred_check
        %p348 = pneg %p347
      $region46: #{_lambda_.2} parent=5 // pred_check_branch
        %350 = sbr.rel (%p348) target = $region48
      $region47: #{_lambda_.2} parent=5 // pred_region
        // Predicated region
        $region49: #{_lambda_.2} parent=47 // pred_check
          %p351 = pneg %p82
        $region50: #{_lambda_.2} parent=47 // pred_check_branch
          %353 = sbr.rel (%p351) target = $region52
        $region51: #{_lambda_.2} parent=47 // pred_region
          %p354 = scmp.lt.s32.totalorder %s20, 1
          %s355 = scalar_select %p354, %s20, 1
          %s356 = smul.addr %s355, 2
          %s357 = smul.addr %s356, 4
          %s358 = scalar_lea.vmem %s2, %s357
        $region52: #{_lambda_.2} parent=47 // pred_fallthru
          _
        // Predicated region
        $region53: #{_lambda_.2} parent=47 // pred_check
          %p359 = pneg %p108
        $region54: #{_lambda_.2} parent=47 // pred_check_branch
          %361 = sbr.rel (%p359) target = $region56
        $region55: #{_lambda_.2} parent=47 // pred_region
          %p362 = scmp.lt.s32.totalorder %s20, 1
          %s363 = scalar_select %p362, %s20, 1
          %s364 = smul.addr %s363, 2
          %s365 = smul.addr %s364, 2
          %s366 = scalar_lea.vmem %s3, %s365
        $region56: #{_lambda_.2} parent=47 // pred_fallthru
          _
      $region48: #{_lambda_.2} parent=5 // pred_fallthru
        _
      %p367 = scmp.le.s32.totalorder 1, %s20
      %p368 = scmp.lt.s32.totalorder %s20, 3
      %p369 = pnand %p367, %p368
      %p370 = pneg %p369
      // Predicated region
      $region57: #{_lambda_.2} parent=5 // pred_check
        _
      $region58: #{_lambda_.2} parent=5 // pred_check_branch
        %372 = sbr.rel (%p369) target = $region60
      $region59: #{_lambda_.2} parent=5 // pred_region
        %s373 = ssub.s32 %s20, 1
        // Predicated region
        $region61: #{_lambda_.2} parent=59 // pred_check
          %p374 = pneg %p41
        $region62: #{_lambda_.2} parent=59 // pred_check_branch
          %376 = sbr.rel (%p374) target = $region64
        $region63: #{_lambda_.2} parent=59 // pred_region
          %377 = dma.done [#allocation3], 64
        $region64: #{_lambda_.2} parent=59 // pred_fallthru
          _
        // Predicated region
        $region65: #{_lambda_.2} parent=59 // pred_check
          %p378 = pneg %p62
        $region66: #{_lambda_.2} parent=59 // pred_check_branch
          %380 = sbr.rel (%p378) target = $region68
        $region67: #{_lambda_.2} parent=59 // pred_region
          %381 = dma.done [#allocation5], 16
        $region68: #{_lambda_.2} parent=59 // pred_fallthru
          _
        %382 = sfence
        %p383 = pneg %p41
        %p384 = pneg %p38
        %p385 = pneg %p62
        %p386 = pneg %p59
        %p387 = scmp.lt.s32.totalorder %s25, 1
        %s388 = scalar_select %p387, %s25, 1
        %s389 = smul.addr %s388, 2
        %s390 = smul.addr %s389, 4
        %s391 = scalar_lea.vmem %s2, %s390
        %p392 = pneg %p88
        %p393 = pneg %p85
        %p394 = scmp.lt.s32.totalorder %s25, 1
        %s395 = scalar_select %p394, %s25, 1
        %s396 = smul.addr %s395, 2
        %s397 = smul.addr %s396, 2
        %s398 = scalar_lea.vmem %s3, %s397
        %p399 = pneg %p114
        %p400 = pneg %p111
        %p401 = pneg %p135
        %p402 = pneg %p132
        %p403 = pneg %p156
        %p404 = pneg %p153
        %p405 = pneg %p177
        %p406 = pneg %p174
        %p407 = pneg %p198
        %p408 = pneg %p195
        %p409 = pneg %p219
        %p410 = pneg %p216
        %p411 = pneg %p240
        %p412 = pneg %p237
        %p413 = pneg %p266
        %p414 = pneg %p263
        %p415 = scmp.lt.s32.totalorder %s25, 1
        %s416 = scalar_select %p415, %s25, 1
        %s417 = smul.addr %s416, 2
        %s418 = smul.addr %s417, 4
        %s419 = scalar_lea.vmem %s10, %s418
        %p420 = pneg %p292
        %p421 = pneg %p289
        %p422 = scmp.lt.s32.totalorder %s25, 1
        %s423 = scalar_select %p422, %s25, 1
        %s424 = smul.addr %s423, 2
        %s425 = scalar_lea.vmem %s11, %s424
        %p426 = scmp.lt.s32.totalorder %s25, 1
        %s427 = scalar_select %p426, %s25, 1
        %s428 = smul.addr %s427, 2
        %s429 = smul.addr %s428, 4
        %s430 = scalar_lea.vmem %s2, %s429
        %p431 = scmp.lt.s32.totalorder %s25, 1
        %s432 = scalar_select %p431, %s25, 1
        %s433 = smul.addr %s432, 2
        %s434 = smul.addr %s433, 2
        %s435 = scalar_lea.vmem %s3, %s434
        %p436 = scmp.lt.s32.totalorder %s25, 1
        %s437 = scalar_select %p436, %s25, 1
        %s438 = smul.addr %s437, 2
        %s439 = smul.addr %s438, 4
        %s440 = scalar_lea.vmem %s10, %s439
        %p441 = scmp.lt.s32.totalorder %s25, 1
        %s442 = scalar_select %p441, %s25, 1
        %s443 = smul.addr %s442, 2
        %s444 = scalar_lea.vmem %s11, %s443
        %v446 = vld [vmem:[%s430] sm:$0xff]
        %s447 = sld [smem:[#allocation2]]
        %v448 = vstv %s447
        %v449 = vmul.f32 %v448, %v446
        %s450 = sld [smem:[#allocation2 + $0x1]]
        %v451 = vstv %s450
        %v452 = vmul.f32 %v451, %v446
        %v454 = vrot.slane %v452, 5
        %v455 = vrot.slane %v454, 4
        %v457 = vadd.f32 %v449, %v455
        %s458 = sld [smem:[#allocation2 + $0x2]]
        %v459 = vstv %s458
        %v460 = vmul.f32 %v459, %v446
        %v462 = vrot.slane %v460, 6
        %v463 = vrot.slane %v462, 4
        %v465 = vadd.f32 %v457, %v463
        %s466 = sld [smem:[#allocation2 + $0x3]]
        %v467 = vstv %s466
        %v468 = vmul.f32 %v467, %v446
        %v470 = vrot.slane %v468, 7
        %v471 = vrot.slane %v470, 4
        %v473 = vadd.f32 %v465, %v471
        %s474 = sld [smem:[#allocation4]]
        %v475 = vstv %s474
        %v476 = vadd.f32 %v473, %v475
        %s477 = sld [smem:[#allocation2 + $0x80]]
        %v478 = vstv %s477
        %v479 = vmul.f32 %v478, %v446
        %s480 = sld [smem:[#allocation2 + $0x81]]
        %v481 = vstv %s480
        %v482 = vmul.f32 %v481, %v446
        %v484 = vrot.slane %v482, 5
        %v485 = vrot.slane %v484, 4
        %v487 = vadd.f32 %v479, %v485
        %s488 = sld [smem:[#allocation2 + $0x82]]
        %v489 = vstv %s488
        %v490 = vmul.f32 %v489, %v446
        %v492 = vrot.slane %v490, 6
        %v493 = vrot.slane %v492, 4
        %v495 = vadd.f32 %v487, %v493
        %s496 = sld [smem:[#allocation2 + $0x83]]
        %v497 = vstv %s496
        %v498 = vmul.f32 %v497, %v446
        %v500 = vrot.slane %v498, 7
        %v501 = vrot.slane %v500, 4
        %v503 = vadd.f32 %v495, %v501
        %s504 = sld [smem:[#allocation4 + $0x1]]
        %v505 = vstv %s504
        %v506 = vadd.f32 %v503, %v505
        %s507 = sld [smem:[#allocation2 + $0x100]]
        %v508 = vstv %s507
        %v509 = vmul.f32 %v508, %v446
        %s510 = sld [smem:[#allocation2 + $0x101]]
        %v511 = vstv %s510
        %v512 = vmul.f32 %v511, %v446
        %v514 = vrot.slane %v512, 5
        %v515 = vrot.slane %v514, 4
        %v517 = vadd.f32 %v509, %v515
        %s518 = sld [smem:[#allocation2 + $0x102]]
        %v519 = vstv %s518
        %v520 = vmul.f32 %v519, %v446
        %v522 = vrot.slane %v520, 6
        %v523 = vrot.slane %v522, 4
        %v525 = vadd.f32 %v517, %v523
        %s526 = sld [smem:[#allocation2 + $0x103]]
        %v527 = vstv %s526
        %v528 = vmul.f32 %v527, %v446
        %v530 = vrot.slane %v528, 7
        %v531 = vrot.slane %v530, 4
        %v533 = vadd.f32 %v525, %v531
        %s534 = sld [smem:[#allocation4 + $0x2]]
        %v535 = vstv %s534
        %v536 = vadd.f32 %v533, %v535
        %s537 = sld [smem:[#allocation2 + $0x180]]
        %v538 = vstv %s537
        %v539 = vmul.f32 %v538, %v446
        %s540 = sld [smem:[#allocation2 + $0x181]]
        %v541 = vstv %s540
        %v542 = vmul.f32 %v541, %v446
        %v544 = vrot.slane %v542, 5
        %v545 = vrot.slane %v544, 4
        %v547 = vadd.f32 %v539, %v545
        %s548 = sld [smem:[#allocation2 + $0x182]]
        %v549 = vstv %s548
        %v550 = vmul.f32 %v549, %v446
        %v552 = vrot.slane %v550, 6
        %v553 = vrot.slane %v552, 4
        %v555 = vadd.f32 %v547, %v553
        %s556 = sld [smem:[#allocation2 + $0x183]]
        %v557 = vstv %s556
        %v558 = vmul.f32 %v557, %v446
        %v560 = vrot.slane %v558, 7
        %v561 = vrot.slane %v560, 4
        %v563 = vadd.f32 %v555, %v561
        %s564 = sld [smem:[#allocation4 + $0x3]]
        %v565 = vstv %s564
        %v566 = vadd.f32 %v563, %v565
        %v568 = vlaneseq
        %v569 = vshrl.u32 %v568, 7
        %v570 = vsub.s32 0, %v569
        %v571 = vrot.slane %v476, %v570
        %v572 = vlaneseq
        %v573 = vshrl.u32 %v572, 7
        %v574 = vsub.s32 4, %v573
        %v575 = vrot.slane %v476, %v574
        %v579 = vlaneseq
        %v580 = vshrl.u32 %v579, 7
        %v581 = vsub.s32 0, %v580
        %v582 = vrot.slane %v506, %v581
        %v583 = vlaneseq
        %v584 = vshrl.u32 %v583, 7
        %v585 = vsub.s32 4, %v584
        %v586 = vrot.slane %v506, %v585
        %v590 = vlaneseq
        %v591 = vshrl.u32 %v590, 7
        %v592 = vsub.s32 0, %v591
        %v593 = vrot.slane %v536, %v592
        %v594 = vlaneseq
        %v595 = vshrl.u32 %v594, 7
        %v596 = vsub.s32 4, %v595
        %v597 = vrot.slane %v536, %v596
        %v601 = vlaneseq
        %v602 = vshrl.u32 %v601, 7
        %v603 = vsub.s32 0, %v602
        %v604 = vrot.slane %v566, %v603
        %v605 = vlaneseq
        %v606 = vshrl.u32 %v605, 7
        %v607 = vsub.s32 4, %v606
        %v608 = vrot.slane %v566, %v607
        %vm611 = vcmask 1040384
        %v612 = vsel %vm611, %v571, %v582
        %v613 = vsel %vm611, %v575, %v586
        %vm614 = vcmask 1041408
        %v615 = vsel %vm614, %v612, %v593
        %v616 = vsel %vm614, %v613, %v597
        %vm617 = vcmask 1042432
        %v618 = vsel %vm617, %v615, %v604
        %v619 = vsel %vm617, %v616, %v608
        %v620 = vld [vmem:[%s435] sm:$0xf]
        %v622 = vcombine.low %v620, %v620
        %v624 = vunpack.c.l.s4 1983009808
        %v625 = vunpack.c.0.s8 %v624
        %v626 = vlaneseq
        %v627 = vshrl.u32 %v626, 7
        %v628 = vsub.s32 %v625, %v627
        %v629 = vrot.slane %v622, %v628
        %v630 = vcombine.high %v629, %v629
        %v633 = vsel %vm614, %v618, %v629
        %v634 = vsel %vm614, %v619, %v630
        %v635 = vlaneseq
        %v636 = vand.u32 %v635, 127
        %v637 = vadd.s32 %v636, 128
        %vm638 = vcmp.lt.s32.totalorder %v636, 0
        %v639 = vsub.s32 0, %v636
        %v640 = vsel %vm638, %v639, %v636
        %v641 = vshrl.u32 %v640, 4
        %v642 = vand.u32 %v640, 15
        %v643 = vsub.s32 0, %v642
        %v644 = vsel %vm638, %v643, %v642
        %vm645 = vcmp.lt.s32.totalorder %v637, 0
        %v646 = vsub.s32 0, %v637
        %v647 = vsel %vm645, %v646, %v637
        %v648 = vshrl.u32 %v647, 4
        %v649 = vand.u32 %v647, 15
        %v650 = vsub.s32 0, %v649
        %v651 = vsel %vm645, %v650, %v649
        %vm652 = vcmp.ne.s32.totalorder %v644, 0
        %vm653 = vcmp.ne.s32.totalorder %v651, 0
        %vm654 = vcmp.lt.s32.totalorder %v644, 0
        %vm655 = vcmp.lt.s32.totalorder %v651, 0
        %vm656 = vmand %vm654, %vm652
        %vm657 = vmand %vm655, %vm653
        %v658 = vadd.s32 %v644, 16
        %v659 = vadd.s32 %v651, 16
        %v660 = vsel %vm656, %v658, %v644
        %v661 = vsel %vm657, %v659, %v651
        %vm662 = vcmp.ge.s32.totalorder %v660, 1
        %vm663 = vcmp.ge.s32.totalorder %v661, 1
        %v664 = vsel %vm662, 1, 0
        %v665 = vsel %vm663, 1, 0
        %v666 = vcvt.s32.f32 %v664
        %v667 = vcvt.s32.f32 %v665
        %vm668 = vcmp.lt.s32.totalorder %v660, 15
        %vm669 = vcmp.lt.s32.totalorder %v661, 15
        %v670 = vsel %vm668, 1, 0
        %v671 = vsel %vm669, 1, 0
        %v672 = vcvt.s32.f32 %v670
        %v673 = vcvt.s32.f32 %v671
        %676 = vrot.lane.b32.xlu0 %v633, 17
        %v677 = vpop.permute.xlu0 %676
        %678 = vrot.lane.b32.xlu0 %v634, 17
        %v679 = vpop.permute.xlu0 %678
        %vm680 = vcmask 138240
        %v681 = vsel %vm680, %v677, %v679
        %v685 = vsel %vm680, 0.0, %v677
        %v686 = vsel %vm680, %v679, 0.0
        %v687 = vmul.f32 %v685, %v666
        %v688 = vmul.f32 %v681, %v667
        %v689 = vld [vmem:[%s4] sm:$0xff]
        %v690 = vld [vmem:[%s4 + $0x8] sm:$0xff]
        %v691 = vld [vmem:[%s4 + $0x10] sm:$0xff]
        %v692 = vld [vmem:[%s4 + $0x18] sm:$0xff]
        %v693 = vpack.c.bf16 %v690, %v689
        %v694 = vpack.c.bf16 %v692, %v691
        %v695 = vpack.c.bf16 %v687, %v687
        %v696 = vpack.c.bf16 %v688, %v688
        %s697 = scalar_lea.vmem %s4, 32
        %v698 = vld [vmem:[%s697] sm:$0xff]
        %v699 = vld [vmem:[%s697 + $0x8] sm:$0xff]
        %v700 = vld [vmem:[%s697 + $0x10] sm:$0xff]
        %v701 = vld [vmem:[%s697 + $0x18] sm:$0xff]
        %v702 = vpack.c.bf16 %v699, %v698
        %v703 = vpack.c.bf16 %v701, %v700
        %v704 = vpack.c.bf16 %v685, %v685
        %v705 = vpack.c.bf16 %v681, %v681
        %v706 = vpack.c.bf16 %v686, %v686
        %710 = vrot.lane.b32.xlu0 %v704, 127
        %v711 = vpop.permute.xlu0 %710
        %712 = vrot.lane.b32.xlu0 %v705, 127
        %v713 = vpop.permute.xlu0 %712
        %714 = vrot.lane.b32.xlu0 %v706, 127
        %v715 = vpop.permute.xlu0 %714
        %vm716 = vcmask 1039360
        %v717 = vsel %vm716, %v711, %v713
        %v718 = vsel %vm716, %v713, %v715
        %vm719 = vcmask 31744
        %v721 = vsel %vm719, %v702, 0
        %v724 = vsel %vm719, %v703, 0
        %v727 = vsel %vm614, %v717, 0
        %v730 = vsel %vm614, %v718, 0
        %732 = vmatprep.subr.bf16.mxu0 %v730
        %733 = vmatpush1.bf16.msra.mxu0 %v727
        %734 = vmatprep.subr.bf16.mxu0 0
        %735 = vmatpush1.bf16.msra.mxu0 0
        %736 = vmatprep.subr.bf16.mxu0 0
        %737 = vmatpush1.bf16.msra.mxu0 0
        %738 = vmatprep.subr.bf16.mxu0 0
        %739 = vmatpush1.bf16.msra.mxu0 0
        %740 = vmatprep.subr.bf16.mxu0 0
        %741 = vmatpush1.bf16.msra.mxu0 0
        %742 = vmatprep.subr.bf16.mxu0 0
        %743 = vmatpush1.bf16.msra.mxu0 0
        %744 = vmatprep.subr.bf16.mxu0 0
        %745 = vmatpush1.bf16.msra.mxu0 0
        %746 = vmatprep.subr.bf16.mxu0 0
        %747 = vmatpush1.bf16.msra.mxu0 0
        %748 = vmatprep.subr.bf16.mxu0 0
        %749 = vmatpush1.bf16.msra.mxu0 0
        %750 = vmatprep.subr.bf16.mxu0 0
        %751 = vmatpush1.bf16.msra.mxu0 0
        %752 = vmatprep.subr.bf16.mxu0 0
        %753 = vmatpush1.bf16.msra.mxu0 0
        %754 = vmatprep.subr.bf16.mxu0 0
        %755 = vmatpush1.bf16.msra.mxu0 0
        %756 = vmatprep.subr.bf16.mxu0 0
        %757 = vmatpush1.bf16.msra.mxu0 0
        %758 = vmatprep.subr.bf16.mxu0 0
        %759 = vmatpush1.bf16.msra.mxu0 0
        %760 = vmatprep.subr.bf16.mxu0 0
        %761 = vmatpush1.bf16.msra.mxu0 0
        %762 = vmatprep.subr.bf16.mxu0 0
        %763 = vmatpush1.bf16.msra.mxu0 0
        %764 = vmatprep.mubr.bf16.mxu0 0
        %765 = vmatmul.mubr.bf16.gmra.mrb[0].mxu0 %v721
        %v766 = vpop.f32.mrb[0].mxu0
        %v767 = vadd.f32 0.0, %v766
        %v768 = vpop.f32.mrb[0].mxu0
        %v769 = vadd.f32 0.0, %v768
        %v770 = vpop.f32.mrb[0].mxu0
        %v771 = vadd.f32 0.0, %v770
        %v772 = vpop.f32.mrb[0].mxu0
        %v773 = vadd.f32 0.0, %v772
        %774 = vmatprep.mubr.bf16.mxu0 0
        %775 = vmatmul.mubr.bf16.gmra.mrb[0].mxu0 %v724
        %v776 = vpop.f32.mrb[0].mxu0
        %v777 = vadd.f32 0.0, %v776
        %v778 = vpop.f32.mrb[0].mxu0
        %v779 = vadd.f32 0.0, %v778
        %v780 = vpop.f32.mrb[0].mxu0
        %v781 = vadd.f32 0.0, %v780
        %v782 = vpop.f32.mrb[0].mxu0
        %v783 = vadd.f32 0.0, %v782
        %784 = vdwg.mxu0
        %v786 = vsel %vm719, %v693, 0
        %v789 = vsel %vm719, %v694, 0
        %v792 = vsel %vm614, %v695, 0
        %v795 = vsel %vm614, %v696, 0
        %797 = vmatprep.subr.bf16.mxu0 %v795
        %798 = vmatpush1.bf16.msra.mxu0 %v792
        %799 = vmatprep.subr.bf16.mxu0 0
        %800 = vmatpush1.bf16.msra.mxu0 0
        %801 = vmatprep.subr.bf16.mxu0 0
        %802 = vmatpush1.bf16.msra.mxu0 0
        %803 = vmatprep.subr.bf16.mxu0 0
        %804 = vmatpush1.bf16.msra.mxu0 0
        %805 = vmatprep.subr.bf16.mxu0 0
        %806 = vmatpush1.bf16.msra.mxu0 0
        %807 = vmatprep.subr.bf16.mxu0 0
        %808 = vmatpush1.bf16.msra.mxu0 0
        %809 = vmatprep.subr.bf16.mxu0 0
        %810 = vmatpush1.bf16.msra.mxu0 0
        %811 = vmatprep.subr.bf16.mxu0 0
        %812 = vmatpush1.bf16.msra.mxu0 0
        %813 = vmatprep.subr.bf16.mxu0 0
        %814 = vmatpush1.bf16.msra.mxu0 0
        %815 = vmatprep.subr.bf16.mxu0 0
        %816 = vmatpush1.bf16.msra.mxu0 0
        %817 = vmatprep.subr.bf16.mxu0 0
        %818 = vmatpush1.bf16.msra.mxu0 0
        %819 = vmatprep.subr.bf16.mxu0 0
        %820 = vmatpush1.bf16.msra.mxu0 0
        %821 = vmatprep.subr.bf16.mxu0 0
        %822 = vmatpush1.bf16.msra.mxu0 0
        %823 = vmatprep.subr.bf16.mxu0 0
        %824 = vmatpush1.bf16.msra.mxu0 0
        %825 = vmatprep.subr.bf16.mxu0 0
        %826 = vmatpush1.bf16.msra.mxu0 0
        %827 = vmatprep.subr.bf16.mxu0 0
        %828 = vmatpush1.bf16.msra.mxu0 0
        %829 = vmatprep.mubr.bf16.mxu0 0
        %830 = vmatmul.mubr.bf16.gmra.mrb[0].mxu0 %v786
        %v831 = vpop.f32.mrb[0].mxu0
        %v832 = vadd.f32 %v767, %v831
        %v833 = vpop.f32.mrb[0].mxu0
        %v834 = vadd.f32 %v769, %v833
        %v835 = vpop.f32.mrb[0].mxu0
        %v836 = vadd.f32 %v771, %v835
        %v837 = vpop.f32.mrb[0].mxu0
        %v838 = vadd.f32 %v773, %v837
        %839 = vmatprep.mubr.bf16.mxu0 0
        %840 = vmatmul.mubr.bf16.gmra.mrb[0].mxu0 %v789
        %v841 = vpop.f32.mrb[0].mxu0
        %v842 = vadd.f32 %v777, %v841
        %v843 = vpop.f32.mrb[0].mxu0
        %v844 = vadd.f32 %v779, %v843
        %v845 = vpop.f32.mrb[0].mxu0
        %v846 = vadd.f32 %v781, %v845
        %v847 = vpop.f32.mrb[0].mxu0
        %v848 = vadd.f32 %v783, %v847
        %849 = vdwg.mxu0
        %852 = vrot.lane.b32.xlu0 %v672, 2
        %v853 = vpop.permute.xlu0 %852
        %854 = vrot.lane.b32.xlu0 %v673, 2
        %v855 = vpop.permute.xlu0 %854
        %vm856 = vcmask 15360
        %v857 = vsel %vm856, %v853, %v855
        %v861 = vmul.f32 %v685, %v853
        %v862 = vmul.f32 %v681, %v857
        %v863 = vmul.f32 %v686, %v855
        %s864 = scalar_lea.vmem %s4, 64
        %v865 = vld [vmem:[%s864] sm:$0xff]
        %v866 = vld [vmem:[%s864 + $0x8] sm:$0xff]
        %v867 = vld [vmem:[%s864 + $0x10] sm:$0xff]
        %v868 = vld [vmem:[%s864 + $0x18] sm:$0xff]
        %v869 = vpack.c.bf16 %v866, %v865
        %v870 = vpack.c.bf16 %v868, %v867
        %v871 = vpack.c.bf16 %v861, %v861
        %v872 = vpack.c.bf16 %v862, %v862
        %v873 = vpack.c.bf16 %v863, %v863
        %877 = vrot.lane.b32.xlu0 %v871, 126
        %v878 = vpop.permute.xlu0 %877
        %879 = vrot.lane.b32.xlu0 %v872, 126
        %v880 = vpop.permute.xlu0 %879
        %881 = vrot.lane.b32.xlu0 %v873, 126
        %v882 = vpop.permute.xlu0 %881
        %vm883 = vcmask 1031168
        %v884 = vsel %vm883, %v878, %v880
        %v885 = vsel %vm883, %v880, %v882
        %v887 = vsel %vm719, %v869, 0
        %v890 = vsel %vm719, %v870, 0
        %v893 = vsel %vm614, %v884, 0
        %v896 = vsel %vm614, %v885, 0
        %898 = vmatprep.subr.bf16.mxu0 %v896
        %899 = vmatpush1.bf16.msra.mxu0 %v893
        %900 = vmatprep.subr.bf16.mxu0 0
        %901 = vmatpush1.bf16.msra.mxu0 0
        %902 = vmatprep.subr.bf16.mxu0 0
        %903 = vmatpush1.bf16.msra.mxu0 0
        %904 = vmatprep.subr.bf16.mxu0 0
        %905 = vmatpush1.bf16.msra.mxu0 0
        %906 = vmatprep.subr.bf16.mxu0 0
        %907 = vmatpush1.bf16.msra.mxu0 0
        %908 = vmatprep.subr.bf16.mxu0 0
        %909 = vmatpush1.bf16.msra.mxu0 0
        %910 = vmatprep.subr.bf16.mxu0 0
        %911 = vmatpush1.bf16.msra.mxu0 0
        %912 = vmatprep.subr.bf16.mxu0 0
        %913 = vmatpush1.bf16.msra.mxu0 0
        %914 = vmatprep.subr.bf16.mxu0 0
        %915 = vmatpush1.bf16.msra.mxu0 0
        %916 = vmatprep.subr.bf16.mxu0 0
        %917 = vmatpush1.bf16.msra.mxu0 0
        %918 = vmatprep.subr.bf16.mxu0 0
        %919 = vmatpush1.bf16.msra.mxu0 0
        %920 = vmatprep.subr.bf16.mxu0 0
        %921 = vmatpush1.bf16.msra.mxu0 0
        %922 = vmatprep.subr.bf16.mxu0 0
        %923 = vmatpush1.bf16.msra.mxu0 0
        %924 = vmatprep.subr.bf16.mxu0 0
        %925 = vmatpush1.bf16.msra.mxu0 0
        %926 = vmatprep.subr.bf16.mxu0 0
        %927 = vmatpush1.bf16.msra.mxu0 0
        %928 = vmatprep.subr.bf16.mxu0 0
        %929 = vmatpush1.bf16.msra.mxu0 0
        %930 = vmatprep.mubr.bf16.mxu0 0
        %931 = vmatmul.mubr.bf16.gmra.mrb[0].mxu0 %v887
        %v932 = vpop.f32.mrb[0].mxu0
        %v933 = vadd.f32 0.0, %v932
        %v934 = vpop.f32.mrb[0].mxu0
        %v935 = vadd.f32 0.0, %v934
        %v936 = vpop.f32.mrb[0].mxu0
        %v937 = vadd.f32 0.0, %v936
        %v938 = vpop.f32.mrb[0].mxu0
        %v939 = vadd.f32 0.0, %v938
        %940 = vmatprep.mubr.bf16.mxu0 0
        %941 = vmatmul.mubr.bf16.gmra.mrb[0].mxu0 %v890
        %v942 = vpop.f32.mrb[0].mxu0
        %v943 = vadd.f32 0.0, %v942
        %v944 = vpop.f32.mrb[0].mxu0
        %v945 = vadd.f32 0.0, %v944
        %v946 = vpop.f32.mrb[0].mxu0
        %v947 = vadd.f32 0.0, %v946
        %v948 = vpop.f32.mrb[0].mxu0
        %v949 = vadd.f32 0.0, %v948
        %950 = vdwg.mxu0
        %v951 = vadd.f32 %v832, %v933
        %v952 = vadd.f32 %v834, %v935
        %v953 = vadd.f32 %v836, %v937
        %v954 = vadd.f32 %v838, %v939
        %v955 = vadd.f32 %v842, %v943
        %v956 = vadd.f32 %v844, %v945
        %v957 = vadd.f32 %v846, %v947
        %v958 = vadd.f32 %v848, %v949
        %961 = vrot.lane.b32.xlu0 %v666, 16
        %v962 = vpop.permute.xlu0 %961
        %963 = vrot.lane.b32.xlu0 %v667, 16
        %v964 = vpop.permute.xlu0 %963
        %vm965 = vcmask 130048
        %v966 = vsel %vm965, %v962, %v964
        %v970 = vmul.f32 %v685, %v962
        %v971 = vmul.f32 %v681, %v966
        %v972 = vmul.f32 %v686, %v964
        %s973 = scalar_lea.vmem %s4, 96
        %v974 = vld [vmem:[%s973] sm:$0xff]
        %v975 = vld [vmem:[%s973 + $0x8] sm:$0xff]
        %v976 = vld [vmem:[%s973 + $0x10] sm:$0xff]
        %v977 = vld [vmem:[%s973 + $0x18] sm:$0xff]
        %v978 = vpack.c.bf16 %v975, %v974
        %v979 = vpack.c.bf16 %v977, %v976
        %v980 = vpack.c.bf16 %v970, %v970
        %v981 = vpack.c.bf16 %v971, %v971
        %v982 = vpack.c.bf16 %v972, %v972
        %986 = vrot.lane.b32.xlu0 %v980, 112
        %v987 = vpop.permute.xlu0 %986
        %988 = vrot.lane.b32.xlu0 %v981, 112
        %v989 = vpop.permute.xlu0 %988
        %990 = vrot.lane.b32.xlu0 %v982, 112
        %v991 = vpop.permute.xlu0 %990
        %vm992 = vcmask 916480
        %v993 = vsel %vm992, %v987, %v989
        %v994 = vsel %vm992, %v989, %v991
        %v996 = vsel %vm719, %v978, 0
        %v999 = vsel %vm719, %v979, 0
        %v1002 = vsel %vm614, %v993, 0
        %v1005 = vsel %vm614, %v994, 0
        %1007 = vmatprep.subr.bf16.mxu0 %v1005
        %1008 = vmatpush1.bf16.msra.mxu0 %v1002
        %1009 = vmatprep.subr.bf16.mxu0 0
        %1010 = vmatpush1.bf16.msra.mxu0 0
        %1011 = vmatprep.subr.bf16.mxu0 0
        %1012 = vmatpush1.bf16.msra.mxu0 0
        %1013 = vmatprep.subr.bf16.mxu0 0
        %1014 = vmatpush1.bf16.msra.mxu0 0
        %1015 = vmatprep.subr.bf16.mxu0 0
        %1016 = vmatpush1.bf16.msra.mxu0 0
        %1017 = vmatprep.subr.bf16.mxu0 0
        %1018 = vmatpush1.bf16.msra.mxu0 0
        %1019 = vmatprep.subr.bf16.mxu0 0
        %1020 = vmatpush1.bf16.msra.mxu0 0
        %1021 = vmatprep.subr.bf16.mxu0 0
        %1022 = vmatpush1.bf16.msra.mxu0 0
        %1023 = vmatprep.subr.bf16.mxu0 0
        %1024 = vmatpush1.bf16.msra.mxu0 0
        %1025 = vmatprep.subr.bf16.mxu0 0
        %1026 = vmatpush1.bf16.msra.mxu0 0
        %1027 = vmatprep.subr.bf16.mxu0 0
        %1028 = vmatpush1.bf16.msra.mxu0 0
        %1029 = vmatprep.subr.bf16.mxu0 0
        %1030 = vmatpush1.bf16.msra.mxu0 0
        %1031 = vmatprep.subr.bf16.mxu0 0
        %1032 = vmatpush1.bf16.msra.mxu0 0
        %1033 = vmatprep.subr.bf16.mxu0 0
        %1034 = vmatpush1.bf16.msra.mxu0 0
        %1035 = vmatprep.subr.bf16.mxu0 0
        %1036 = vmatpush1.bf16.msra.mxu0 0
        %1037 = vmatprep.subr.bf16.mxu0 0
        %1038 = vmatpush1.bf16.msra.mxu0 0
        %1039 = vmatprep.mubr.bf16.mxu0 0
        %1040 = vmatmul.mubr.bf16.gmra.mrb[0].mxu0 %v996
        %v1041 = vpop.f32.mrb[0].mxu0
        %v1042 = vadd.f32 0.0, %v1041
        %v1043 = vpop.f32.mrb[0].mxu0
        %v1044 = vadd.f32 0.0, %v1043
        %v1045 = vpop.f32.mrb[0].mxu0
        %v1046 = vadd.f32 0.0, %v1045
        %v1047 = vpop.f32.mrb[0].mxu0
        %v1048 = vadd.f32 0.0, %v1047
        %1049 = vmatprep.mubr.bf16.mxu0 0
        %1050 = vmatmul.mubr.bf16.gmra.mrb[0].mxu0 %v999
        %v1051 = vpop.f32.mrb[0].mxu0
        %v1052 = vadd.f32 0.0, %v1051
        %v1053 = vpop.f32.mrb[0].mxu0
        %v1054 = vadd.f32 0.0, %v1053
        %v1055 = vpop.f32.mrb[0].mxu0
        %v1056 = vadd.f32 0.0, %v1055
        %v1057 = vpop.f32.mrb[0].mxu0
        %v1058 = vadd.f32 0.0, %v1057
        %1059 = vdwg.mxu0
        %v1060 = vadd.f32 %v951, %v1042
        %v1061 = vadd.f32 %v952, %v1044
        %v1062 = vadd.f32 %v953, %v1046
        %v1063 = vadd.f32 %v954, %v1048
        %v1064 = vadd.f32 %v955, %v1052
        %v1065 = vadd.f32 %v956, %v1054
        %v1066 = vadd.f32 %v957, %v1056
        %v1067 = vadd.f32 %v958, %v1058
        %s1068 = scalar_lea.vmem %s4, 128
        %v1069 = vld [vmem:[%s1068] sm:$0xff]
        %v1070 = vld [vmem:[%s1068 + $0x8] sm:$0xff]
        %v1071 = vld [vmem:[%s1068 + $0x10] sm:$0xff]
        %v1072 = vld [vmem:[%s1068 + $0x18] sm:$0xff]
        %v1073 = vpack.c.bf16 %v1070, %v1069
        %v1074 = vpack.c.bf16 %v1072, %v1071
        %1075 = vrot.lane.b32.xlu0 %v704, 111
        %v1076 = vpop.permute.xlu0 %1075
        %1077 = vrot.lane.b32.xlu0 %v705, 111
        %v1078 = vpop.permute.xlu0 %1077
        %1079 = vrot.lane.b32.xlu0 %v706, 111
        %v1080 = vpop.permute.xlu0 %1079
        %vm1081 = vcmask 908288
        %v1082 = vsel %vm1081, %v1076, %v1078
        %v1083 = vsel %vm1081, %v1078, %v1080
        %v1085 = vsel %vm719, %v1073, 0
        %v1088 = vsel %vm719, %v1074, 0
        %v1091 = vsel %vm614, %v1082, 0
        %v1094 = vsel %vm614, %v1083, 0
        %1096 = vmatprep.subr.bf16.mxu0 %v1094
        %1097 = vmatpush1.bf16.msra.mxu0 %v1091
        %1098 = vmatprep.subr.bf16.mxu0 0
        %1099 = vmatpush1.bf16.msra.mxu0 0
        %1100 = vmatprep.subr.bf16.mxu0 0
        %1101 = vmatpush1.bf16.msra.mxu0 0
        %1102 = vmatprep.subr.bf16.mxu0 0
        %1103 = vmatpush1.bf16.msra.mxu0 0
        %1104 = vmatprep.subr.bf16.mxu0 0
        %1105 = vmatpush1.bf16.msra.mxu0 0
        %1106 = vmatprep.subr.bf16.mxu0 0
        %1107 = vmatpush1.bf16.msra.mxu0 0
        %1108 = vmatprep.subr.bf16.mxu0 0
        %1109 = vmatpush1.bf16.msra.mxu0 0
        %1110 = vmatprep.subr.bf16.mxu0 0
        %1111 = vmatpush1.bf16.msra.mxu0 0
        %1112 = vmatprep.subr.bf16.mxu0 0
        %1113 = vmatpush1.bf16.msra.mxu0 0
        %1114 = vmatprep.subr.bf16.mxu0 0
        %1115 = vmatpush1.bf16.msra.mxu0 0
        %1116 = vmatprep.subr.bf16.mxu0 0
        %1117 = vmatpush1.bf16.msra.mxu0 0
        %1118 = vmatprep.subr.bf16.mxu0 0
        %1119 = vmatpush1.bf16.msra.mxu0 0
        %1120 = vmatprep.subr.bf16.mxu0 0
        %1121 = vmatpush1.bf16.msra.mxu0 0
        %1122 = vmatprep.subr.bf16.mxu0 0
        %1123 = vmatpush1.bf16.msra.mxu0 0
        %1124 = vmatprep.subr.bf16.mxu0 0
        %1125 = vmatpush1.bf16.msra.mxu0 0
        %1126 = vmatprep.subr.bf16.mxu0 0
        %1127 = vmatpush1.bf16.msra.mxu0 0
        %1128 = vmatprep.mubr.bf16.mxu0 0
        %1129 = vmatmul.mubr.bf16.gmra.mrb[0].mxu0 %v1085
        %v1130 = vpop.f32.mrb[0].mxu0
        %v1131 = vadd.f32 0.0, %v1130
        %v1132 = vpop.f32.mrb[0].mxu0
        %v1133 = vadd.f32 0.0, %v1132
        %v1134 = vpop.f32.mrb[0].mxu0
        %v1135 = vadd.f32 0.0, %v1134
        %v1136 = vpop.f32.mrb[0].mxu0
        %v1137 = vadd.f32 0.0, %v1136
        %1138 = vmatprep.mubr.bf16.mxu0 0
        %1139 = vmatmul.mubr.bf16.gmra.mrb[0].mxu0 %v1088
        %v1140 = vpop.f32.mrb[0].mxu0
        %v1141 = vadd.f32 0.0, %v1140
        %v1142 = vpop.f32.mrb[0].mxu0
        %v1143 = vadd.f32 0.0, %v1142
        %v1144 = vpop.f32.mrb[0].mxu0
        %v1145 = vadd.f32 0.0, %v1144
        %v1146 = vpop.f32.mrb[0].mxu0
        %v1147 = vadd.f32 0.0, %v1146
        %1148 = vdwg.mxu0
        %v1149 = vadd.f32 %v1060, %v1131
        %v1150 = vadd.f32 %v1061, %v1133
        %v1151 = vadd.f32 %v1062, %v1135
        %v1152 = vadd.f32 %v1063, %v1137
        %v1153 = vadd.f32 %v1064, %v1141
        %v1154 = vadd.f32 %v1065, %v1143
        %v1155 = vadd.f32 %v1066, %v1145
        %v1156 = vadd.f32 %v1067, %v1147
        %1157 = vrot.lane.b32.xlu0 %v672, 18
        %v1158 = vpop.permute.xlu0 %1157
        %1159 = vrot.lane.b32.xlu0 %v673, 18
        %v1160 = vpop.permute.xlu0 %1159
        %vm1161 = vcmask 146432
        %v1162 = vsel %vm1161, %v1158, %v1160
        %v1166 = vmul.f32 %v685, %v1158
        %v1167 = vmul.f32 %v681, %v1162
        %v1168 = vmul.f32 %v686, %v1160
        %s1169 = scalar_lea.vmem %s4, 160
        %v1170 = vld [vmem:[%s1169] sm:$0xff]
        %v1171 = vld [vmem:[%s1169 + $0x8] sm:$0xff]
        %v1172 = vld [vmem:[%s1169 + $0x10] sm:$0xff]
        %v1173 = vld [vmem:[%s1169 + $0x18] sm:$0xff]
        %v1174 = vpack.c.bf16 %v1171, %v1170
        %v1175 = vpack.c.bf16 %v1173, %v1172
        %v1176 = vpack.c.bf16 %v1166, %v1166
        %v1177 = vpack.c.bf16 %v1167, %v1167
        %v1178 = vpack.c.bf16 %v1168, %v1168
        %1182 = vrot.lane.b32.xlu0 %v1176, 110
        %v1183 = vpop.permute.xlu0 %1182
        %1184 = vrot.lane.b32.xlu0 %v1177, 110
        %v1185 = vpop.permute.xlu0 %1184
        %1186 = vrot.lane.b32.xlu0 %v1178, 110
        %v1187 = vpop.permute.xlu0 %1186
        %vm1188 = vcmask 900096
        %v1189 = vsel %vm1188, %v1183, %v1185
        %v1190 = vsel %vm1188, %v1185, %v1187
        %v1192 = vsel %vm719, %v1174, 0
        %v1195 = vsel %vm719, %v1175, 0
        %v1198 = vsel %vm614, %v1189, 0
        %v1201 = vsel %vm614, %v1190, 0
        %1203 = vmatprep.subr.bf16.mxu0 %v1201
        %1204 = vmatpush1.bf16.msra.mxu0 %v1198
        %1205 = vmatprep.subr.bf16.mxu0 0
        %1206 = vmatpush1.bf16.msra.mxu0 0
        %1207 = vmatprep.subr.bf16.mxu0 0
        %1208 = vmatpush1.bf16.msra.mxu0 0
        %1209 = vmatprep.subr.bf16.mxu0 0
        %1210 = vmatpush1.bf16.msra.mxu0 0
        %1211 = vmatprep.subr.bf16.mxu0 0
        %1212 = vmatpush1.bf16.msra.mxu0 0
        %1213 = vmatprep.subr.bf16.mxu0 0
        %1214 = vmatpush1.bf16.msra.mxu0 0
        %1215 = vmatprep.subr.bf16.mxu0 0
        %1216 = vmatpush1.bf16.msra.mxu0 0
        %1217 = vmatprep.subr.bf16.mxu0 0
        %1218 = vmatpush1.bf16.msra.mxu0 0
        %1219 = vmatprep.subr.bf16.mxu0 0
        %1220 = vmatpush1.bf16.msra.mxu0 0
        %1221 = vmatprep.subr.bf16.mxu0 0
        %1222 = vmatpush1.bf16.msra.mxu0 0
        %1223 = vmatprep.subr.bf16.mxu0 0
        %1224 = vmatpush1.bf16.msra.mxu0 0
        %1225 = vmatprep.subr.bf16.mxu0 0
        %1226 = vmatpush1.bf16.msra.mxu0 0
        %1227 = vmatprep.subr.bf16.mxu0 0
        %1228 = vmatpush1.bf16.msra.mxu0 0
        %1229 = vmatprep.subr.bf16.mxu0 0
        %1230 = vmatpush1.bf16.msra.mxu0 0
        %1231 = vmatprep.subr.bf16.mxu0 0
        %1232 = vmatpush1.bf16.msra.mxu0 0
        %1233 = vmatprep.subr.bf16.mxu0 0
        %1234 = vmatpush1.bf16.msra.mxu0 0
        %1235 = vmatprep.mubr.bf16.mxu0 0
        %1236 = vmatmul.mubr.bf16.gmra.mrb[0].mxu0 %v1192
        %v1237 = vpop.f32.mrb[0].mxu0
        %v1238 = vadd.f32 0.0, %v1237
        %v1239 = vpop.f32.mrb[0].mxu0
        %v1240 = vadd.f32 0.0, %v1239
        %v1241 = vpop.f32.mrb[0].mxu0
        %v1242 = vadd.f32 0.0, %v1241
        %v1243 = vpop.f32.mrb[0].mxu0
        %v1244 = vadd.f32 0.0, %v1243
        %1245 = vmatprep.mubr.bf16.mxu0 0
        %1246 = vmatmul.mubr.bf16.gmra.mrb[0].mxu0 %v1195
        %v1247 = vpop.f32.mrb[0].mxu0
        %v1248 = vadd.f32 0.0, %v1247
        %v1249 = vpop.f32.mrb[0].mxu0
        %v1250 = vadd.f32 0.0, %v1249
        %v1251 = vpop.f32.mrb[0].mxu0
        %v1252 = vadd.f32 0.0, %v1251
        %v1253 = vpop.f32.mrb[0].mxu0
        %v1254 = vadd.f32 0.0, %v1253
        %1255 = vdwg.mxu0
        %v1256 = vadd.f32 %v1149, %v1238
        %v1257 = vadd.f32 %v1150, %v1240
        %v1258 = vadd.f32 %v1151, %v1242
        %v1259 = vadd.f32 %v1152, %v1244
        %v1260 = vadd.f32 %v1153, %v1248
        %v1261 = vadd.f32 %v1154, %v1250
        %v1262 = vadd.f32 %v1155, %v1252
        %v1263 = vadd.f32 %v1156, %v1254
        %1264 = vrot.lane.b32.xlu0 %v666, 32
        %v1265 = vpop.permute.xlu0 %1264
        %1266 = vrot.lane.b32.xlu0 %v667, 32
        %v1267 = vpop.permute.xlu0 %1266
        %vm1268 = vcmask 261120
        %v1269 = vsel %vm1268, %v1265, %v1267
        %v1273 = vmul.f32 %v685, %v1265
        %v1274 = vmul.f32 %v681, %v1269
        %v1275 = vmul.f32 %v686, %v1267
        %s1276 = scalar_lea.vmem %s4, 192
        %v1277 = vld [vmem:[%s1276] sm:$0xff]
        %v1278 = vld [vmem:[%s1276 + $0x8] sm:$0xff]
        %v1279 = vld [vmem:[%s1276 + $0x10] sm:$0xff]
        %v1280 = vld [vmem:[%s1276 + $0x18] sm:$0xff]
        %v1281 = vpack.c.bf16 %v1278, %v1277
        %v1282 = vpack.c.bf16 %v1280, %v1279
        %v1283 = vpack.c.bf16 %v1273, %v1273
        %v1284 = vpack.c.bf16 %v1274, %v1274
        %v1285 = vpack.c.bf16 %v1275, %v1275
        %1289 = vrot.lane.b32.xlu0 %v1283, 96
        %v1290 = vpop.permute.xlu0 %1289
        %1291 = vrot.lane.b32.xlu0 %v1284, 96
        %v1292 = vpop.permute.xlu0 %1291
        %1293 = vrot.lane.b32.xlu0 %v1285, 96
        %v1294 = vpop.permute.xlu0 %1293
        %vm1295 = vcmask 785408
        %v1296 = vsel %vm1295, %v1290, %v1292
        %v1297 = vsel %vm1295, %v1292, %v1294
        %v1299 = vsel %vm719, %v1281, 0
        %v1302 = vsel %vm719, %v1282, 0
        %v1305 = vsel %vm614, %v1296, 0
        %v1308 = vsel %vm614, %v1297, 0
        %1310 = vmatprep.subr.bf16.mxu0 %v1308
        %1311 = vmatpush1.bf16.msra.mxu0 %v1305
        %1312 = vmatprep.subr.bf16.mxu0 0
        %1313 = vmatpush1.bf16.msra.mxu0 0
        %1314 = vmatprep.subr.bf16.mxu0 0
        %1315 = vmatpush1.bf16.msra.mxu0 0
        %1316 = vmatprep.subr.bf16.mxu0 0
        %1317 = vmatpush1.bf16.msra.mxu0 0
        %1318 = vmatprep.subr.bf16.mxu0 0
        %1319 = vmatpush1.bf16.msra.mxu0 0
        %1320 = vmatprep.subr.bf16.mxu0 0
        %1321 = vmatpush1.bf16.msra.mxu0 0
        %1322 = vmatprep.subr.bf16.mxu0 0
        %1323 = vmatpush1.bf16.msra.mxu0 0
        %1324 = vmatprep.subr.bf16.mxu0 0
        %1325 = vmatpush1.bf16.msra.mxu0 0
        %1326 = vmatprep.subr.bf16.mxu0 0
        %1327 = vmatpush1.bf16.msra.mxu0 0
        %1328 = vmatprep.subr.bf16.mxu0 0
        %1329 = vmatpush1.bf16.msra.mxu0 0
        %1330 = vmatprep.subr.bf16.mxu0 0
        %1331 = vmatpush1.bf16.msra.mxu0 0
        %1332 = vmatprep.subr.bf16.mxu0 0
        %1333 = vmatpush1.bf16.msra.mxu0 0
        %1334 = vmatprep.subr.bf16.mxu0 0
        %1335 = vmatpush1.bf16.msra.mxu0 0
        %1336 = vmatprep.subr.bf16.mxu0 0
        %1337 = vmatpush1.bf16.msra.mxu0 0
        %1338 = vmatprep.subr.bf16.mxu0 0
        %1339 = vmatpush1.bf16.msra.mxu0 0
        %1340 = vmatprep.subr.bf16.mxu0 0
        %1341 = vmatpush1.bf16.msra.mxu0 0
        %1342 = vmatprep.mubr.bf16.mxu0 0
        %1343 = vmatmul.mubr.bf16.gmra.mrb[0].mxu0 %v1299
        %v1344 = vpop.f32.mrb[0].mxu0
        %v1345 = vadd.f32 0.0, %v1344
        %v1346 = vpop.f32.mrb[0].mxu0
        %v1347 = vadd.f32 0.0, %v1346
        %v1348 = vpop.f32.mrb[0].mxu0
        %v1349 = vadd.f32 0.0, %v1348
        %v1350 = vpop.f32.mrb[0].mxu0
        %v1351 = vadd.f32 0.0, %v1350
        %1352 = vmatprep.mubr.bf16.mxu0 0
        %1353 = vmatmul.mubr.bf16.gmra.mrb[0].mxu0 %v1302
        %v1354 = vpop.f32.mrb[0].mxu0
        %v1355 = vadd.f32 0.0, %v1354
        %v1356 = vpop.f32.mrb[0].mxu0
        %v1357 = vadd.f32 0.0, %v1356
        %v1358 = vpop.f32.mrb[0].mxu0
        %v1359 = vadd.f32 0.0, %v1358
        %v1360 = vpop.f32.mrb[0].mxu0
        %v1361 = vadd.f32 0.0, %v1360
        %1362 = vdwg.mxu0
        %v1363 = vadd.f32 %v1256, %v1345
        %v1364 = vadd.f32 %v1257, %v1347
        %v1365 = vadd.f32 %v1258, %v1349
        %v1366 = vadd.f32 %v1259, %v1351
        %v1367 = vadd.f32 %v1260, %v1355
        %v1368 = vadd.f32 %v1261, %v1357
        %v1369 = vadd.f32 %v1262, %v1359
        %v1370 = vadd.f32 %v1263, %v1361
        %s1371 = scalar_lea.vmem %s4, 224
        %v1372 = vld [vmem:[%s1371] sm:$0xff]
        %v1373 = vld [vmem:[%s1371 + $0x8] sm:$0xff]
        %v1374 = vld [vmem:[%s1371 + $0x10] sm:$0xff]
        %v1375 = vld [vmem:[%s1371 + $0x18] sm:$0xff]
        %v1376 = vpack.c.bf16 %v1373, %v1372
        %v1377 = vpack.c.bf16 %v1375, %v1374
        %1378 = vrot.lane.b32.xlu0 %v704, 95
        %v1379 = vpop.permute.xlu0 %1378
        %1380 = vrot.lane.b32.xlu0 %v705, 95
        %v1381 = vpop.permute.xlu0 %1380
        %1382 = vrot.lane.b32.xlu0 %v706, 95
        %v1383 = vpop.permute.xlu0 %1382
        %vm1384 = vcmask 777216
        %v1385 = vsel %vm1384, %v1379, %v1381
        %v1386 = vsel %vm1384, %v1381, %v1383
        %v1388 = vsel %vm719, %v1376, 0
        %v1391 = vsel %vm719, %v1377, 0
        %v1394 = vsel %vm614, %v1385, 0
        %v1397 = vsel %vm614, %v1386, 0
        %1399 = vmatprep.subr.bf16.mxu0 %v1397
        %1400 = vmatpush1.bf16.msra.mxu0 %v1394
        %1401 = vmatprep.subr.bf16.mxu0 0
        %1402 = vmatpush1.bf16.msra.mxu0 0
        %1403 = vmatprep.subr.bf16.mxu0 0
        %1404 = vmatpush1.bf16.msra.mxu0 0
        %1405 = vmatprep.subr.bf16.mxu0 0
        %1406 = vmatpush1.bf16.msra.mxu0 0
        %1407 = vmatprep.subr.bf16.mxu0 0
        %1408 = vmatpush1.bf16.msra.mxu0 0
        %1409 = vmatprep.subr.bf16.mxu0 0
        %1410 = vmatpush1.bf16.msra.mxu0 0
        %1411 = vmatprep.subr.bf16.mxu0 0
        %1412 = vmatpush1.bf16.msra.mxu0 0
        %1413 = vmatprep.subr.bf16.mxu0 0
        %1414 = vmatpush1.bf16.msra.mxu0 0
        %1415 = vmatprep.subr.bf16.mxu0 0
        %1416 = vmatpush1.bf16.msra.mxu0 0
        %1417 = vmatprep.subr.bf16.mxu0 0
        %1418 = vmatpush1.bf16.msra.mxu0 0
        %1419 = vmatprep.subr.bf16.mxu0 0
        %1420 = vmatpush1.bf16.msra.mxu0 0
        %1421 = vmatprep.subr.bf16.mxu0 0
        %1422 = vmatpush1.bf16.msra.mxu0 0
        %1423 = vmatprep.subr.bf16.mxu0 0
        %1424 = vmatpush1.bf16.msra.mxu0 0
        %1425 = vmatprep.subr.bf16.mxu0 0
        %1426 = vmatpush1.bf16.msra.mxu0 0
        %1427 = vmatprep.subr.bf16.mxu0 0
        %1428 = vmatpush1.bf16.msra.mxu0 0
        %1429 = vmatprep.subr.bf16.mxu0 0
        %1430 = vmatpush1.bf16.msra.mxu0 0
        %1431 = vmatprep.mubr.bf16.mxu0 0
        %1432 = vmatmul.mubr.bf16.gmra.mrb[0].mxu0 %v1388
        %v1433 = vpop.f32.mrb[0].mxu0
        %v1434 = vadd.f32 0.0, %v1433
        %v1435 = vpop.f32.mrb[0].mxu0
        %v1436 = vadd.f32 0.0, %v1435
        %v1437 = vpop.f32.mrb[0].mxu0
        %v1438 = vadd.f32 0.0, %v1437
        %v1439 = vpop.f32.mrb[0].mxu0
        %v1440 = vadd.f32 0.0, %v1439
        %1441 = vmatprep.mubr.bf16.mxu0 0
        %1442 = vmatmul.mubr.bf16.gmra.mrb[0].mxu0 %v1391
        %v1443 = vpop.f32.mrb[0].mxu0
        %v1444 = vadd.f32 0.0, %v1443
        %v1445 = vpop.f32.mrb[0].mxu0
        %v1446 = vadd.f32 0.0, %v1445
        %v1447 = vpop.f32.mrb[0].mxu0
        %v1448 = vadd.f32 0.0, %v1447
        %v1449 = vpop.f32.mrb[0].mxu0
        %v1450 = vadd.f32 0.0, %v1449
        %1451 = vdwg.mxu0
        %v1452 = vadd.f32 %v1363, %v1434
        %v1453 = vadd.f32 %v1364, %v1436
        %v1454 = vadd.f32 %v1365, %v1438
        %v1455 = vadd.f32 %v1366, %v1440
        %v1456 = vadd.f32 %v1367, %v1444
        %v1457 = vadd.f32 %v1368, %v1446
        %v1458 = vadd.f32 %v1369, %v1448
        %v1459 = vadd.f32 %v1370, %v1450
        %1460 = vrot.lane.b32.xlu0 %v672, 34
        %v1461 = vpop.permute.xlu0 %1460
        %1462 = vrot.lane.b32.xlu0 %v673, 34
        %v1463 = vpop.permute.xlu0 %1462
        %vm1464 = vcmask 277504
        %v1465 = vsel %vm1464, %v1461, %v1463
        %v1469 = vmul.f32 %v685, %v1461
        %v1470 = vmul.f32 %v681, %v1465
        %v1471 = vmul.f32 %v686, %v1463
        %s1472 = scalar_lea.vmem %s4, 256
        %v1473 = vld [vmem:[%s1472] sm:$0xff]
        %v1474 = vld [vmem:[%s1472 + $0x8] sm:$0xff]
        %v1475 = vld [vmem:[%s1472 + $0x10] sm:$0xff]
        %v1476 = vld [vmem:[%s1472 + $0x18] sm:$0xff]
        %v1477 = vpack.c.bf16 %v1474, %v1473
        %v1478 = vpack.c.bf16 %v1476, %v1475
        %v1479 = vpack.c.bf16 %v1469, %v1469
        %v1480 = vpack.c.bf16 %v1470, %v1470
        %v1481 = vpack.c.bf16 %v1471, %v1471
        %1485 = vrot.lane.b32.xlu0 %v1479, 94
        %v1486 = vpop.permute.xlu0 %1485
        %1487 = vrot.lane.b32.xlu0 %v1480, 94
        %v1488 = vpop.permute.xlu0 %1487
        %1489 = vrot.lane.b32.xlu0 %v1481, 94
        %v1490 = vpop.permute.xlu0 %1489
        %vm1491 = vcmask 769024
        %v1492 = vsel %vm1491, %v1486, %v1488
        %v1493 = vsel %vm1491, %v1488, %v1490
        %v1495 = vsel %vm719, %v1477, 0
        %v1498 = vsel %vm719, %v1478, 0
        %v1501 = vsel %vm614, %v1492, 0
        %v1504 = vsel %vm614, %v1493, 0
        %1506 = vmatprep.subr.bf16.mxu0 %v1504
        %1507 = vmatpush1.bf16.msra.mxu0 %v1501
        %1508 = vmatprep.subr.bf16.mxu0 0
        %1509 = vmatpush1.bf16.msra.mxu0 0
        %1510 = vmatprep.subr.bf16.mxu0 0
        %1511 = vmatpush1.bf16.msra.mxu0 0
        %1512 = vmatprep.subr.bf16.mxu0 0
        %1513 = vmatpush1.bf16.msra.mxu0 0
        %1514 = vmatprep.subr.bf16.mxu0 0
        %1515 = vmatpush1.bf16.msra.mxu0 0
        %1516 = vmatprep.subr.bf16.mxu0 0
        %1517 = vmatpush1.bf16.msra.mxu0 0
        %1518 = vmatprep.subr.bf16.mxu0 0
        %1519 = vmatpush1.bf16.msra.mxu0 0
        %1520 = vmatprep.subr.bf16.mxu0 0
        %1521 = vmatpush1.bf16.msra.mxu0 0
        %1522 = vmatprep.subr.bf16.mxu0 0
        %1523 = vmatpush1.bf16.msra.mxu0 0
        %1524 = vmatprep.subr.bf16.mxu0 0
        %1525 = vmatpush1.bf16.msra.mxu0 0
        %1526 = vmatprep.subr.bf16.mxu0 0
        %1527 = vmatpush1.bf16.msra.mxu0 0
        %1528 = vmatprep.subr.bf16.mxu0 0
        %1529 = vmatpush1.bf16.msra.mxu0 0
        %1530 = vmatprep.subr.bf16.mxu0 0
        %1531 = vmatpush1.bf16.msra.mxu0 0
        %1532 = vmatprep.subr.bf16.mxu0 0
        %1533 = vmatpush1.bf16.msra.mxu0 0
        %1534 = vmatprep.subr.bf16.mxu0 0
        %1535 = vmatpush1.bf16.msra.mxu0 0
        %1536 = vmatprep.subr.bf16.mxu0 0
        %1537 = vmatpush1.bf16.msra.mxu0 0
        %1538 = vmatprep.mubr.bf16.mxu0 0
        %1539 = vmatmul.mubr.bf16.gmra.mrb[0].mxu0 %v1495
        %v1540 = vpop.f32.mrb[0].mxu0
        %v1541 = vadd.f32 0.0, %v1540
        %v1542 = vpop.f32.mrb[0].mxu0
        %v1543 = vadd.f32 0.0, %v1542
        %v1544 = vpop.f32.mrb[0].mxu0
        %v1545 = vadd.f32 0.0, %v1544
        %v1546 = vpop.f32.mrb[0].mxu0
        %v1547 = vadd.f32 0.0, %v1546
        %1548 = vmatprep.mubr.bf16.mxu0 0
        %1549 = vmatmul.mubr.bf16.gmra.mrb[0].mxu0 %v1498
        %v1550 = vpop.f32.mrb[0].mxu0
        %v1551 = vadd.f32 0.0, %v1550
        %v1552 = vpop.f32.mrb[0].mxu0
        %v1553 = vadd.f32 0.0, %v1552
        %v1554 = vpop.f32.mrb[0].mxu0
        %v1555 = vadd.f32 0.0, %v1554
        %v1556 = vpop.f32.mrb[0].mxu0
        %v1557 = vadd.f32 0.0, %v1556
        %1558 = vdwg.mxu0
        %v1559 = vadd.f32 %v1452, %v1541
        %v1560 = vadd.f32 %v1453, %v1543
        %v1561 = vadd.f32 %v1454, %v1545
        %v1562 = vadd.f32 %v1455, %v1547
        %v1563 = vadd.f32 %v1456, %v1551
        %v1564 = vadd.f32 %v1457, %v1553
        %v1565 = vadd.f32 %v1458, %v1555
        %v1566 = vadd.f32 %v1459, %v1557
        %v1567 = vld [vmem:[%s5] sm:$0xff]
        %v1568 = vld [vmem:[%s5 + $0x8] sm:$0xff]
        %v1569 = vld [vmem:[%s5 + $0x10] sm:$0xff]
        %v1570 = vld [vmem:[%s5 + $0x18] sm:$0xff]
        %1572 = vset.pattern.permute.xlu0 0
        %1573 = vperm.xlu0 %1572, %v1567
        %v1574 = vpop.permute.xlu0 %1573
        %1577 = vset.pattern.permute.xlu0 0
        %1578 = vperm.xlu0 %1577, %v1568
        %v1579 = vpop.permute.xlu0 %1578
        %1582 = vset.pattern.permute.xlu0 0
        %1583 = vperm.xlu0 %1582, %v1569
        %v1584 = vpop.permute.xlu0 %1583
        %1587 = vset.pattern.permute.xlu0 0
        %1588 = vperm.xlu0 %1587, %v1570
        %v1589 = vpop.permute.xlu0 %1588
        %v1591 = vadd.f32 %v1559, %v1574
        %v1592 = vadd.f32 %v1560, %v1574
        %v1593 = vadd.f32 %v1561, %v1579
        %v1594 = vadd.f32 %v1562, %v1579
        %v1595 = vadd.f32 %v1563, %v1584
        %v1596 = vadd.f32 %v1564, %v1584
        %v1597 = vadd.f32 %v1565, %v1589
        %v1598 = vadd.f32 %v1566, %v1589
        %v1599 = vmax.f32 %v1591, 0.0
        %v1600 = vmax.f32 %v1592, 0.0
        %v1601 = vmax.f32 %v1593, 0.0
        %v1602 = vmax.f32 %v1594, 0.0
        %v1603 = vmax.f32 %v1595, 0.0
        %v1604 = vmax.f32 %v1596, 0.0
        %v1605 = vmax.f32 %v1597, 0.0
        %v1606 = vmax.f32 %v1598, 0.0
        %v1607 = vld [vmem:[%s6] sm:$0xff]
        %v1608 = vld [vmem:[%s6 + $0x8] sm:$0xff]
        %v1609 = vld [vmem:[%s6 + $0x10] sm:$0xff]
        %v1610 = vld [vmem:[%s6 + $0x18] sm:$0xff]
        %v1611 = vpack.c.bf16 %v1608, %v1607
        %v1612 = vpack.c.bf16 %v1610, %v1609
        %v1613 = vpack.c.bf16 %v1601, %v1599
        %v1614 = vpack.c.bf16 %v1602, %v1600
        %v1615 = vpack.c.bf16 %v1605, %v1603
        %v1616 = vpack.c.bf16 %v1606, %v1604
        %v1617 = vld [vmem:[%s7] sm:$0xff]
        %v1618 = vld [vmem:[%s7 + $0x8] sm:$0xff]
        %v1619 = vld [vmem:[%s7 + $0x10] sm:$0xff]
        %v1620 = vld [vmem:[%s7 + $0x18] sm:$0xff]
        %1622 = vset.pattern.permute.xlu0 0
        %1623 = vperm.xlu0 %1622, %v1617
        %v1624 = vpop.permute.xlu0 %1623
        %1627 = vset.pattern.permute.xlu0 0
        %1628 = vperm.xlu0 %1627, %v1618
        %v1629 = vpop.permute.xlu0 %1628
        %1632 = vset.pattern.permute.xlu0 0
        %1633 = vperm.xlu0 %1632, %v1619
        %v1634 = vpop.permute.xlu0 %1633
        %1637 = vset.pattern.permute.xlu0 0
        %1638 = vperm.xlu0 %1637, %v1620
        %v1639 = vpop.permute.xlu0 %1638
        %v1642 = vsel %vm1268, %v1611, 0
        %v1645 = vsel %vm1268, %v1612, 0
        %1647 = vmatprep.subr.bf16.mxu0 %v1614
        %1648 = vmatpush1.bf16.msra.mxu0 %v1613
        %1649 = vmatprep.subr.bf16.mxu0 %v1616
        %1650 = vmatpush1.bf16.msra.mxu0 %v1615
        %1651 = vmatprep.subr.bf16.mxu0 0
        %1652 = vmatpush1.bf16.msra.mxu0 0
        %1653 = vmatprep.subr.bf16.mxu0 0
        %1654 = vmatpush1.bf16.msra.mxu0 0
        %1655 = vmatprep.subr.bf16.mxu0 0
        %1656 = vmatpush1.bf16.msra.mxu0 0
        %1657 = vmatprep.subr.bf16.mxu0 0
        %1658 = vmatpush1.bf16.msra.mxu0 0
        %1659 = vmatprep.subr.bf16.mxu0 0
        %1660 = vmatpush1.bf16.msra.mxu0 0
        %1661 = vmatprep.subr.bf16.mxu0 0
        %1662 = vmatpush1.bf16.msra.mxu0 0
        %1663 = vmatprep.subr.bf16.mxu0 0
        %1664 = vmatpush1.bf16.msra.mxu0 0
        %1665 = vmatprep.subr.bf16.mxu0 0
        %1666 = vmatpush1.bf16.msra.mxu0 0
        %1667 = vmatprep.subr.bf16.mxu0 0
        %1668 = vmatpush1.bf16.msra.mxu0 0
        %1669 = vmatprep.subr.bf16.mxu0 0
        %1670 = vmatpush1.bf16.msra.mxu0 0
        %1671 = vmatprep.subr.bf16.mxu0 0
        %1672 = vmatpush1.bf16.msra.mxu0 0
        %1673 = vmatprep.subr.bf16.mxu0 0
        %1674 = vmatpush1.bf16.msra.mxu0 0
        %1675 = vmatprep.subr.bf16.mxu0 0
        %1676 = vmatpush1.bf16.msra.mxu0 0
        %1677 = vmatprep.subr.bf16.mxu0 0
        %1678 = vmatpush1.bf16.msra.mxu0 0
        %1679 = vmatprep.mubr.bf16.mxu0 0
        %1680 = vmatmul.mubr.bf16.gmra.mrb[0].mxu0 %v1642
        %v1681 = vpop.f32.mrb[0].mxu0
        %v1682 = vadd.f32 %v1624, %v1681
        %v1683 = vpop.f32.mrb[0].mxu0
        %v1684 = vadd.f32 %v1624, %v1683
        %v1685 = vpop.f32.mrb[0].mxu0
        %v1686 = vadd.f32 %v1629, %v1685
        %v1687 = vpop.f32.mrb[0].mxu0
        %v1688 = vadd.f32 %v1629, %v1687
        %1689 = vmatprep.mubr.bf16.mxu0 0
        %1690 = vmatmul.mubr.bf16.gmra.mrb[0].mxu0 %v1645
        %v1691 = vpop.f32.mrb[0].mxu0
        %v1692 = vadd.f32 %v1634, %v1691
        %v1693 = vpop.f32.mrb[0].mxu0
        %v1694 = vadd.f32 %v1634, %v1693
        %v1695 = vpop.f32.mrb[0].mxu0
        %v1696 = vadd.f32 %v1639, %v1695
        %v1697 = vpop.f32.mrb[0].mxu0
        %v1698 = vadd.f32 %v1639, %v1697
        %1699 = vdwg.mxu0
        %v1700 = vmax.f32 %v1682, 0.0
        %v1701 = vmax.f32 %v1684, 0.0
        %v1702 = vmax.f32 %v1686, 0.0
        %v1703 = vmax.f32 %v1688, 0.0
        %v1704 = vmax.f32 %v1692, 0.0
        %v1705 = vmax.f32 %v1694, 0.0
        %v1706 = vmax.f32 %v1696, 0.0
        %v1707 = vmax.f32 %v1698, 0.0
        %1716 = vrot.lane.b32.xlu0 %v1700, 17
        %v1717 = vpop.permute.xlu0 %1716
        %1718 = vrot.lane.b32.xlu0 %v1701, 17
        %v1719 = vpop.permute.xlu0 %1718
        %1720 = vrot.lane.b32.xlu0 %v1702, 17
        %v1721 = vpop.permute.xlu0 %1720
        %1722 = vrot.lane.b32.xlu0 %v1703, 17
        %v1723 = vpop.permute.xlu0 %1722
        %1724 = vrot.lane.b32.xlu0 %v1704, 17
        %v1725 = vpop.permute.xlu0 %1724
        %1726 = vrot.lane.b32.xlu0 %v1705, 17
        %v1727 = vpop.permute.xlu0 %1726
        %1728 = vrot.lane.b32.xlu0 %v1706, 17
        %v1729 = vpop.permute.xlu0 %1728
        %1730 = vrot.lane.b32.xlu0 %v1707, 17
        %v1731 = vpop.permute.xlu0 %1730
        %v1732 = vsel %vm680, %v1717, %v1719
        %v1733 = vsel %vm680, %v1721, %v1723
        %v1734 = vsel %vm680, %v1725, %v1727
        %v1735 = vsel %vm680, %v1729, %v1731
        %v1748 = vsel %vm680, 0.0, %v1717
        %v1749 = vsel %vm680, 0.0, %v1721
        %v1750 = vsel %vm680, 0.0, %v1725
        %v1751 = vsel %vm680, 0.0, %v1729
        %v1752 = vsel %vm680, %v1719, 0.0
        %v1753 = vsel %vm680, %v1723, 0.0
        %v1754 = vsel %vm680, %v1727, 0.0
        %v1755 = vsel %vm680, %v1731, 0.0
        %v1756 = vmul.f32 %v1748, %v666
        %v1757 = vmul.f32 %v1732, %v667
        %v1758 = vmul.f32 %v1749, %v666
        %v1759 = vmul.f32 %v1733, %v667
        %v1760 = vmul.f32 %v1750, %v666
        %v1761 = vmul.f32 %v1734, %v667
        %v1762 = vmul.f32 %v1751, %v666
        %v1763 = vmul.f32 %v1735, %v667
        %v1764 = vld [vmem:[%s8] sm:$0xf]
        %v1765 = vpack.c.bf16 %v1764, %v1764
        %v1766 = vpack.c.bf16 %v1758, %v1756
        %v1767 = vpack.c.bf16 %v1759, %v1757
        %v1768 = vpack.c.bf16 %v1762, %v1760
        %v1769 = vpack.c.bf16 %v1763, %v1761
        %s1770 = scalar_lea.vmem %s8, 4
        %v1771 = vld [vmem:[%s1770] sm:$0xf]
        %v1772 = vpack.c.bf16 %v1771, %v1771
        %v1773 = vpack.c.bf16 %v1749, %v1748
        %v1774 = vpack.c.bf16 %v1733, %v1732
        %v1775 = vpack.c.bf16 %v1753, %v1752
        %v1776 = vpack.c.bf16 %v1751, %v1750
        %v1777 = vpack.c.bf16 %v1735, %v1734
        %v1778 = vpack.c.bf16 %v1755, %v1754
        %1785 = vrot.lane.b32.xlu0 %v1773, 127
        %v1786 = vpop.permute.xlu0 %1785
        %1787 = vrot.lane.b32.xlu0 %v1774, 127
        %v1788 = vpop.permute.xlu0 %1787
        %1789 = vrot.lane.b32.xlu0 %v1775, 127
        %v1790 = vpop.permute.xlu0 %1789
        %1791 = vrot.lane.b32.xlu0 %v1776, 127
        %v1792 = vpop.permute.xlu0 %1791
        %1793 = vrot.lane.b32.xlu0 %v1777, 127
        %v1794 = vpop.permute.xlu0 %1793
        %1795 = vrot.lane.b32.xlu0 %v1778, 127
        %v1796 = vpop.permute.xlu0 %1795
        %v1797 = vsel %vm716, %v1786, %v1788
        %v1798 = vsel %vm716, %v1788, %v1790
        %v1799 = vsel %vm716, %v1792, %v1794
        %v1800 = vsel %vm716, %v1794, %v1796
        %v1806 = vsel %vm1268, %v1772, 0
        %1808 = vmatprep.subr.bf16.mxu0 %v1798
        %1809 = vmatpush1.bf16.msra.mxu0 %v1797
        %1810 = vmatprep.subr.bf16.mxu0 %v1800
        %1811 = vmatpush1.bf16.msra.mxu0 %v1799
        %1812 = vmatprep.subr.bf16.mxu0 0
        %1813 = vmatpush1.bf16.msra.mxu0 0
        %1814 = vmatprep.subr.bf16.mxu0 0
        %1815 = vmatpush1.bf16.msra.mxu0 0
        %1816 = vmatprep.subr.bf16.mxu0 0
        %1817 = vmatpush1.bf16.msra.mxu0 0
        %1818 = vmatprep.subr.bf16.mxu0 0
        %1819 = vmatpush1.bf16.msra.mxu0 0
        %1820 = vmatprep.subr.bf16.mxu0 0
        %1821 = vmatpush1.bf16.msra.mxu0 0
        %1822 = vmatprep.subr.bf16.mxu0 0
        %1823 = vmatpush1.bf16.msra.mxu0 0
        %1824 = vmatprep.subr.bf16.mxu0 0
        %1825 = vmatpush1.bf16.msra.mxu0 0
        %1826 = vmatprep.subr.bf16.mxu0 0
        %1827 = vmatpush1.bf16.msra.mxu0 0
        %1828 = vmatprep.subr.bf16.mxu0 0
        %1829 = vmatpush1.bf16.msra.mxu0 0
        %1830 = vmatprep.subr.bf16.mxu0 0
        %1831 = vmatpush1.bf16.msra.mxu0 0
        %1832 = vmatprep.subr.bf16.mxu0 0
        %1833 = vmatpush1.bf16.msra.mxu0 0
        %1834 = vmatprep.subr.bf16.mxu0 0
        %1835 = vmatpush1.bf16.msra.mxu0 0
        %1836 = vmatprep.subr.bf16.mxu0 0
        %1837 = vmatpush1.bf16.msra.mxu0 0
        %1838 = vmatprep.subr.bf16.mxu0 0
        %1839 = vmatpush1.bf16.msra.mxu0 0
        %1840 = vmatprep.mubr.bf16.mxu0 0
        %1841 = vmatmul.mubr.bf16.gmra.mrb[0].mxu0 %v1806
        %v1842 = vpop.f32.mrb[0].mxu0
        %v1843 = vadd.f32 0.0, %v1842
        %v1844 = vpop.f32.mrb[0].mxu0
        %v1845 = vadd.f32 0.0, %v1844
        %v1846 = vpop.f32.mrb[0].mxu0
        %v1847 = vpop.f32.mrb[0].mxu0
        %1848 = vdwg.mxu0
        %v1850 = vsel %vm1268, %v1765, 0
        %1852 = vmatprep.subr.bf16.mxu0 %v1767
        %1853 = vmatpush1.bf16.msra.mxu0 %v1766
        %1854 = vmatprep.subr.bf16.mxu0 %v1769
        %1855 = vmatpush1.bf16.msra.mxu0 %v1768
        %1856 = vmatprep.subr.bf16.mxu0 0
        %1857 = vmatpush1.bf16.msra.mxu0 0
        %1858 = vmatprep.subr.bf16.mxu0 0
        %1859 = vmatpush1.bf16.msra.mxu0 0
        %1860 = vmatprep.subr.bf16.mxu0 0
        %1861 = vmatpush1.bf16.msra.mxu0 0
        %1862 = vmatprep.subr.bf16.mxu0 0
        %1863 = vmatpush1.bf16.msra.mxu0 0
        %1864 = vmatprep.subr.bf16.mxu0 0
        %1865 = vmatpush1.bf16.msra.mxu0 0
        %1866 = vmatprep.subr.bf16.mxu0 0
        %1867 = vmatpush1.bf16.msra.mxu0 0
        %1868 = vmatprep.subr.bf16.mxu0 0
        %1869 = vmatpush1.bf16.msra.mxu0 0
        %1870 = vmatprep.subr.bf16.mxu0 0
        %1871 = vmatpush1.bf16.msra.mxu0 0
        %1872 = vmatprep.subr.bf16.mxu0 0
        %1873 = vmatpush1.bf16.msra.mxu0 0
        %1874 = vmatprep.subr.bf16.mxu0 0
        %1875 = vmatpush1.bf16.msra.mxu0 0
        %1876 = vmatprep.subr.bf16.mxu0 0
        %1877 = vmatpush1.bf16.msra.mxu0 0
        %1878 = vmatprep.subr.bf16.mxu0 0
        %1879 = vmatpush1.bf16.msra.mxu0 0
        %1880 = vmatprep.subr.bf16.mxu0 0
        %1881 = vmatpush1.bf16.msra.mxu0 0
        %1882 = vmatprep.subr.bf16.mxu0 0
        %1883 = vmatpush1.bf16.msra.mxu0 0
        %1884 = vmatprep.mubr.bf16.mxu0 0
        %1885 = vmatmul.mubr.bf16.gmra.mrb[0].mxu0 %v1850
        %v1886 = vpop.f32.mrb[0].mxu0
        %v1887 = vadd.f32 %v1843, %v1886
        %v1888 = vpop.f32.mrb[0].mxu0
        %v1889 = vadd.f32 %v1845, %v1888
        %v1890 = vpop.f32.mrb[0].mxu0
        %v1891 = vpop.f32.mrb[0].mxu0
        %1892 = vdwg.mxu0
        %v1893 = vmul.f32 %v1748, %v853
        %v1894 = vmul.f32 %v1732, %v857
        %v1895 = vmul.f32 %v1752, %v855
        %v1896 = vmul.f32 %v1749, %v853
        %v1897 = vmul.f32 %v1733, %v857
        %v1898 = vmul.f32 %v1753, %v855
        %v1899 = vmul.f32 %v1750, %v853
        %v1900 = vmul.f32 %v1734, %v857
        %v1901 = vmul.f32 %v1754, %v855
        %v1902 = vmul.f32 %v1751, %v853
        %v1903 = vmul.f32 %v1735, %v857
        %v1904 = vmul.f32 %v1755, %v855
        %s1905 = scalar_lea.vmem %s8, 8
        %v1906 = vld [vmem:[%s1905] sm:$0xf]
        %v1907 = vpack.c.bf16 %v1906, %v1906
        %v1908 = vpack.c.bf16 %v1896, %v1893
        %v1909 = vpack.c.bf16 %v1897, %v1894
        %v1910 = vpack.c.bf16 %v1898, %v1895
        %v1911 = vpack.c.bf16 %v1902, %v1899
        %v1912 = vpack.c.bf16 %v1903, %v1900
        %v1913 = vpack.c.bf16 %v1904, %v1901
        %1920 = vrot.lane.b32.xlu0 %v1908, 126
        %v1921 = vpop.permute.xlu0 %1920
        %1922 = vrot.lane.b32.xlu0 %v1909, 126
        %v1923 = vpop.permute.xlu0 %1922
        %1924 = vrot.lane.b32.xlu0 %v1910, 126
        %v1925 = vpop.permute.xlu0 %1924
        %1926 = vrot.lane.b32.xlu0 %v1911, 126
        %v1927 = vpop.permute.xlu0 %1926
        %1928 = vrot.lane.b32.xlu0 %v1912, 126
        %v1929 = vpop.permute.xlu0 %1928
        %1930 = vrot.lane.b32.xlu0 %v1913, 126
        %v1931 = vpop.permute.xlu0 %1930
        %v1932 = vsel %vm883, %v1921, %v1923
        %v1933 = vsel %vm883, %v1923, %v1925
        %v1934 = vsel %vm883, %v1927, %v1929
        %v1935 = vsel %vm883, %v1929, %v1931
        %v1941 = vsel %vm1268, %v1907, 0
        %1943 = vmatprep.subr.bf16.mxu0 %v1933
        %1944 = vmatpush1.bf16.msra.mxu0 %v1932
        %1945 = vmatprep.subr.bf16.mxu0 %v1935
        %1946 = vmatpush1.bf16.msra.mxu0 %v1934
        %1947 = vmatprep.subr.bf16.mxu0 0
        %1948 = vmatpush1.bf16.msra.mxu0 0
        %1949 = vmatprep.subr.bf16.mxu0 0
        %1950 = vmatpush1.bf16.msra.mxu0 0
        %1951 = vmatprep.subr.bf16.mxu0 0
        %1952 = vmatpush1.bf16.msra.mxu0 0
        %1953 = vmatprep.subr.bf16.mxu0 0
        %1954 = vmatpush1.bf16.msra.mxu0 0
        %1955 = vmatprep.subr.bf16.mxu0 0
        %1956 = vmatpush1.bf16.msra.mxu0 0
        %1957 = vmatprep.subr.bf16.mxu0 0
        %1958 = vmatpush1.bf16.msra.mxu0 0
        %1959 = vmatprep.subr.bf16.mxu0 0
        %1960 = vmatpush1.bf16.msra.mxu0 0
        %1961 = vmatprep.subr.bf16.mxu0 0
        %1962 = vmatpush1.bf16.msra.mxu0 0
        %1963 = vmatprep.subr.bf16.mxu0 0
        %1964 = vmatpush1.bf16.msra.mxu0 0
        %1965 = vmatprep.subr.bf16.mxu0 0
        %1966 = vmatpush1.bf16.msra.mxu0 0
        %1967 = vmatprep.subr.bf16.mxu0 0
        %1968 = vmatpush1.bf16.msra.mxu0 0
        %1969 = vmatprep.subr.bf16.mxu0 0
        %1970 = vmatpush1.bf16.msra.mxu0 0
        %1971 = vmatprep.subr.bf16.mxu0 0
        %1972 = vmatpush1.bf16.msra.mxu0 0
        %1973 = vmatprep.subr.bf16.mxu0 0
        %1974 = vmatpush1.bf16.msra.mxu0 0
        %1975 = vmatprep.mubr.bf16.mxu0 0
        %1976 = vmatmul.mubr.bf16.gmra.mrb[0].mxu0 %v1941
        %v1977 = vpop.f32.mrb[0].mxu0
        %v1978 = vadd.f32 0.0, %v1977
        %v1979 = vpop.f32.mrb[0].mxu0
        %v1980 = vadd.f32 0.0, %v1979
        %v1981 = vpop.f32.mrb[0].mxu0
        %v1982 = vpop.f32.mrb[0].mxu0
        %1983 = vdwg.mxu0
        %v1984 = vadd.f32 %v1887, %v1978
        %v1985 = vadd.f32 %v1889, %v1980
        %v1986 = vmul.f32 %v1748, %v962
        %v1987 = vmul.f32 %v1732, %v966
        %v1988 = vmul.f32 %v1752, %v964
        %v1989 = vmul.f32 %v1749, %v962
        %v1990 = vmul.f32 %v1733, %v966
        %v1991 = vmul.f32 %v1753, %v964
        %v1992 = vmul.f32 %v1750, %v962
        %v1993 = vmul.f32 %v1734, %v966
        %v1994 = vmul.f32 %v1754, %v964
        %v1995 = vmul.f32 %v1751, %v962
        %v1996 = vmul.f32 %v1735, %v966
        %v1997 = vmul.f32 %v1755, %v964
        %s1998 = scalar_lea.vmem %s8, 12
        %v1999 = vld [vmem:[%s1998] sm:$0xf]
        %v2000 = vpack.c.bf16 %v1999, %v1999
        %v2001 = vpack.c.bf16 %v1989, %v1986
        %v2002 = vpack.c.bf16 %v1990, %v1987
        %v2003 = vpack.c.bf16 %v1991, %v1988
        %v2004 = vpack.c.bf16 %v1995, %v1992
        %v2005 = vpack.c.bf16 %v1996, %v1993
        %v2006 = vpack.c.bf16 %v1997, %v1994
        %2013 = vrot.lane.b32.xlu0 %v2001, 112
        %v2014 = vpop.permute.xlu0 %2013
        %2015 = vrot.lane.b32.xlu0 %v2002, 112
        %v2016 = vpop.permute.xlu0 %2015
        %2017 = vrot.lane.b32.xlu0 %v2003, 112
        %v2018 = vpop.permute.xlu0 %2017
        %2019 = vrot.lane.b32.xlu0 %v2004, 112
        %v2020 = vpop.permute.xlu0 %2019
        %2021 = vrot.lane.b32.xlu0 %v2005, 112
        %v2022 = vpop.permute.xlu0 %2021
        %2023 = vrot.lane.b32.xlu0 %v2006, 112
        %v2024 = vpop.permute.xlu0 %2023
        %v2025 = vsel %vm992, %v2014, %v2016
        %v2026 = vsel %vm992, %v2016, %v2018
        %v2027 = vsel %vm992, %v2020, %v2022
        %v2028 = vsel %vm992, %v2022, %v2024
        %v2034 = vsel %vm1268, %v2000, 0
        %2036 = vmatprep.subr.bf16.mxu0 %v2026
        %2037 = vmatpush1.bf16.msra.mxu0 %v2025
        %2038 = vmatprep.subr.bf16.mxu0 %v2028
        %2039 = vmatpush1.bf16.msra.mxu0 %v2027
        %2040 = vmatprep.subr.bf16.mxu0 0
        %2041 = vmatpush1.bf16.msra.mxu0 0
        %2042 = vmatprep.subr.bf16.mxu0 0
        %2043 = vmatpush1.bf16.msra.mxu0 0
        %2044 = vmatprep.subr.bf16.mxu0 0
        %2045 = vmatpush1.bf16.msra.mxu0 0
        %2046 = vmatprep.subr.bf16.mxu0 0
        %2047 = vmatpush1.bf16.msra.mxu0 0
        %2048 = vmatprep.subr.bf16.mxu0 0
        %2049 = vmatpush1.bf16.msra.mxu0 0
        %2050 = vmatprep.subr.bf16.mxu0 0
        %2051 = vmatpush1.bf16.msra.mxu0 0
        %2052 = vmatprep.subr.bf16.mxu0 0
        %2053 = vmatpush1.bf16.msra.mxu0 0
        %2054 = vmatprep.subr.bf16.mxu0 0
        %2055 = vmatpush1.bf16.msra.mxu0 0
        %2056 = vmatprep.subr.bf16.mxu0 0
        %2057 = vmatpush1.bf16.msra.mxu0 0
        %2058 = vmatprep.subr.bf16.mxu0 0
        %2059 = vmatpush1.bf16.msra.mxu0 0
        %2060 = vmatprep.subr.bf16.mxu0 0
        %2061 = vmatpush1.bf16.msra.mxu0 0
        %2062 = vmatprep.subr.bf16.mxu0 0
        %2063 = vmatpush1.bf16.msra.mxu0 0
        %2064 = vmatprep.subr.bf16.mxu0 0
        %2065 = vmatpush1.bf16.msra.mxu0 0
        %2066 = vmatprep.subr.bf16.mxu0 0
        %2067 = vmatpush1.bf16.msra.mxu0 0
        %2068 = vmatprep.mubr.bf16.mxu0 0
        %2069 = vmatmul.mubr.bf16.gmra.mrb[0].mxu0 %v2034
        %v2070 = vpop.f32.mrb[0].mxu0
        %v2071 = vadd.f32 0.0, %v2070
        %v2072 = vpop.f32.mrb[0].mxu0
        %v2073 = vadd.f32 0.0, %v2072
        %v2074 = vpop.f32.mrb[0].mxu0
        %v2075 = vpop.f32.mrb[0].mxu0
        %2076 = vdwg.mxu0
        %v2077 = vadd.f32 %v1984, %v2071
        %v2078 = vadd.f32 %v1985, %v2073
        %s2079 = scalar_lea.vmem %s8, 16
        %v2080 = vld [vmem:[%s2079] sm:$0xf]
        %v2081 = vpack.c.bf16 %v2080, %v2080
        %2082 = vrot.lane.b32.xlu0 %v1773, 111
        %v2083 = vpop.permute.xlu0 %2082
        %2084 = vrot.lane.b32.xlu0 %v1774, 111
        %v2085 = vpop.permute.xlu0 %2084
        %2086 = vrot.lane.b32.xlu0 %v1775, 111
        %v2087 = vpop.permute.xlu0 %2086
        %2088 = vrot.lane.b32.xlu0 %v1776, 111
        %v2089 = vpop.permute.xlu0 %2088
        %2090 = vrot.lane.b32.xlu0 %v1777, 111
        %v2091 = vpop.permute.xlu0 %2090
        %2092 = vrot.lane.b32.xlu0 %v1778, 111
        %v2093 = vpop.permute.xlu0 %2092
        %v2094 = vsel %vm1081, %v2083, %v2085
        %v2095 = vsel %vm1081, %v2085, %v2087
        %v2096 = vsel %vm1081, %v2089, %v2091
        %v2097 = vsel %vm1081, %v2091, %v2093
        %v2103 = vsel %vm1268, %v2081, 0
        %2105 = vmatprep.subr.bf16.mxu0 %v2095
        %2106 = vmatpush1.bf16.msra.mxu0 %v2094
        %2107 = vmatprep.subr.bf16.mxu0 %v2097
        %2108 = vmatpush1.bf16.msra.mxu0 %v2096
        %2109 = vmatprep.subr.bf16.mxu0 0
        %2110 = vmatpush1.bf16.msra.mxu0 0
        %2111 = vmatprep.subr.bf16.mxu0 0
        %2112 = vmatpush1.bf16.msra.mxu0 0
        %2113 = vmatprep.subr.bf16.mxu0 0
        %2114 = vmatpush1.bf16.msra.mxu0 0
        %2115 = vmatprep.subr.bf16.mxu0 0
        %2116 = vmatpush1.bf16.msra.mxu0 0
        %2117 = vmatprep.subr.bf16.mxu0 0
        %2118 = vmatpush1.bf16.msra.mxu0 0
        %2119 = vmatprep.subr.bf16.mxu0 0
        %2120 = vmatpush1.bf16.msra.mxu0 0
        %2121 = vmatprep.subr.bf16.mxu0 0
        %2122 = vmatpush1.bf16.msra.mxu0 0
        %2123 = vmatprep.subr.bf16.mxu0 0
        %2124 = vmatpush1.bf16.msra.mxu0 0
        %2125 = vmatprep.subr.bf16.mxu0 0
        %2126 = vmatpush1.bf16.msra.mxu0 0
        %2127 = vmatprep.subr.bf16.mxu0 0
        %2128 = vmatpush1.bf16.msra.mxu0 0
        %2129 = vmatprep.subr.bf16.mxu0 0
        %2130 = vmatpush1.bf16.msra.mxu0 0
        %2131 = vmatprep.subr.bf16.mxu0 0
        %2132 = vmatpush1.bf16.msra.mxu0 0
        %2133 = vmatprep.subr.bf16.mxu0 0
        %2134 = vmatpush1.bf16.msra.mxu0 0
        %2135 = vmatprep.subr.bf16.mxu0 0
        %2136 = vmatpush1.bf16.msra.mxu0 0
        %2137 = vmatprep.mubr.bf16.mxu0 0
        %2138 = vmatmul.mubr.bf16.gmra.mrb[0].mxu0 %v2103
        %v2139 = vpop.f32.mrb[0].mxu0
        %v2140 = vadd.f32 0.0, %v2139
        %v2141 = vpop.f32.mrb[0].mxu0
        %v2142 = vadd.f32 0.0, %v2141
        %v2143 = vpop.f32.mrb[0].mxu0
        %v2144 = vpop.f32.mrb[0].mxu0
        %2145 = vdwg.mxu0
        %v2146 = vadd.f32 %v2077, %v2140
        %v2147 = vadd.f32 %v2078, %v2142
        %v2148 = vmul.f32 %v1748, %v1158
        %v2149 = vmul.f32 %v1732, %v1162
        %v2150 = vmul.f32 %v1752, %v1160
        %v2151 = vmul.f32 %v1749, %v1158
        %v2152 = vmul.f32 %v1733, %v1162
        %v2153 = vmul.f32 %v1753, %v1160
        %v2154 = vmul.f32 %v1750, %v1158
        %v2155 = vmul.f32 %v1734, %v1162
        %v2156 = vmul.f32 %v1754, %v1160
        %v2157 = vmul.f32 %v1751, %v1158
        %v2158 = vmul.f32 %v1735, %v1162
        %v2159 = vmul.f32 %v1755, %v1160
        %s2160 = scalar_lea.vmem %s8, 20
        %v2161 = vld [vmem:[%s2160] sm:$0xf]
        %v2162 = vpack.c.bf16 %v2161, %v2161
        %v2163 = vpack.c.bf16 %v2151, %v2148
        %v2164 = vpack.c.bf16 %v2152, %v2149
        %v2165 = vpack.c.bf16 %v2153, %v2150
        %v2166 = vpack.c.bf16 %v2157, %v2154
        %v2167 = vpack.c.bf16 %v2158, %v2155
        %v2168 = vpack.c.bf16 %v2159, %v2156
        %2175 = vrot.lane.b32.xlu0 %v2163, 110
        %v2176 = vpop.permute.xlu0 %2175
        %2177 = vrot.lane.b32.xlu0 %v2164, 110
        %v2178 = vpop.permute.xlu0 %2177
        %2179 = vrot.lane.b32.xlu0 %v2165, 110
        %v2180 = vpop.permute.xlu0 %2179
        %2181 = vrot.lane.b32.xlu0 %v2166, 110
        %v2182 = vpop.permute.xlu0 %2181
        %2183 = vrot.lane.b32.xlu0 %v2167, 110
        %v2184 = vpop.permute.xlu0 %2183
        %2185 = vrot.lane.b32.xlu0 %v2168, 110
        %v2186 = vpop.permute.xlu0 %2185
        %v2187 = vsel %vm1188, %v2176, %v2178
        %v2188 = vsel %vm1188, %v2178, %v2180
        %v2189 = vsel %vm1188, %v2182, %v2184
        %v2190 = vsel %vm1188, %v2184, %v2186
        %v2196 = vsel %vm1268, %v2162, 0
        %2198 = vmatprep.subr.bf16.mxu0 %v2188
        %2199 = vmatpush1.bf16.msra.mxu0 %v2187
        %2200 = vmatprep.subr.bf16.mxu0 %v2190
        %2201 = vmatpush1.bf16.msra.mxu0 %v2189
        %2202 = vmatprep.subr.bf16.mxu0 0
        %2203 = vmatpush1.bf16.msra.mxu0 0
        %2204 = vmatprep.subr.bf16.mxu0 0
        %2205 = vmatpush1.bf16.msra.mxu0 0
        %2206 = vmatprep.subr.bf16.mxu0 0
        %2207 = vmatpush1.bf16.msra.mxu0 0
        %2208 = vmatprep.subr.bf16.mxu0 0
        %2209 = vmatpush1.bf16.msra.mxu0 0
        %2210 = vmatprep.subr.bf16.mxu0 0
        %2211 = vmatpush1.bf16.msra.mxu0 0
        %2212 = vmatprep.subr.bf16.mxu0 0
        %2213 = vmatpush1.bf16.msra.mxu0 0
        %2214 = vmatprep.subr.bf16.mxu0 0
        %2215 = vmatpush1.bf16.msra.mxu0 0
        %2216 = vmatprep.subr.bf16.mxu0 0
        %2217 = vmatpush1.bf16.msra.mxu0 0
        %2218 = vmatprep.subr.bf16.mxu0 0
        %2219 = vmatpush1.bf16.msra.mxu0 0
        %2220 = vmatprep.subr.bf16.mxu0 0
        %2221 = vmatpush1.bf16.msra.mxu0 0
        %2222 = vmatprep.subr.bf16.mxu0 0
        %2223 = vmatpush1.bf16.msra.mxu0 0
        %2224 = vmatprep.subr.bf16.mxu0 0
        %2225 = vmatpush1.bf16.msra.mxu0 0
        %2226 = vmatprep.subr.bf16.mxu0 0
        %2227 = vmatpush1.bf16.msra.mxu0 0
        %2228 = vmatprep.subr.bf16.mxu0 0
        %2229 = vmatpush1.bf16.msra.mxu0 0
        %2230 = vmatprep.mubr.bf16.mxu0 0
        %2231 = vmatmul.mubr.bf16.gmra.mrb[0].mxu0 %v2196
        %v2232 = vpop.f32.mrb[0].mxu0
        %v2233 = vadd.f32 0.0, %v2232
        %v2234 = vpop.f32.mrb[0].mxu0
        %v2235 = vadd.f32 0.0, %v2234
        %v2236 = vpop.f32.mrb[0].mxu0
        %v2237 = vpop.f32.mrb[0].mxu0
        %2238 = vdwg.mxu0
        %v2239 = vadd.f32 %v2146, %v2233
        %v2240 = vadd.f32 %v2147, %v2235
        %v2241 = vmul.f32 %v1748, %v1265
        %v2242 = vmul.f32 %v1732, %v1269
        %v2243 = vmul.f32 %v1752, %v1267
        %v2244 = vmul.f32 %v1749, %v1265
        %v2245 = vmul.f32 %v1733, %v1269
        %v2246 = vmul.f32 %v1753, %v1267
        %v2247 = vmul.f32 %v1750, %v1265
        %v2248 = vmul.f32 %v1734, %v1269
        %v2249 = vmul.f32 %v1754, %v1267
        %v2250 = vmul.f32 %v1751, %v1265
        %v2251 = vmul.f32 %v1735, %v1269
        %v2252 = vmul.f32 %v1755, %v1267
        %s2253 = scalar_lea.vmem %s8, 24
        %v2254 = vld [vmem:[%s2253] sm:$0xf]
        %v2255 = vpack.c.bf16 %v2254, %v2254
        %v2256 = vpack.c.bf16 %v2244, %v2241
        %v2257 = vpack.c.bf16 %v2245, %v2242
        %v2258 = vpack.c.bf16 %v2246, %v2243
        %v2259 = vpack.c.bf16 %v2250, %v2247
        %v2260 = vpack.c.bf16 %v2251, %v2248
        %v2261 = vpack.c.bf16 %v2252, %v2249
        %2268 = vrot.lane.b32.xlu0 %v2256, 96
        %v2269 = vpop.permute.xlu0 %2268
        %2270 = vrot.lane.b32.xlu0 %v2257, 96
        %v2271 = vpop.permute.xlu0 %2270
        %2272 = vrot.lane.b32.xlu0 %v2258, 96
        %v2273 = vpop.permute.xlu0 %2272
        %2274 = vrot.lane.b32.xlu0 %v2259, 96
        %v2275 = vpop.permute.xlu0 %2274
        %2276 = vrot.lane.b32.xlu0 %v2260, 96
        %v2277 = vpop.permute.xlu0 %2276
        %2278 = vrot.lane.b32.xlu0 %v2261, 96
        %v2279 = vpop.permute.xlu0 %2278
        %v2280 = vsel %vm1295, %v2269, %v2271
        %v2281 = vsel %vm1295, %v2271, %v2273
        %v2282 = vsel %vm1295, %v2275, %v2277
        %v2283 = vsel %vm1295, %v2277, %v2279
        %v2289 = vsel %vm1268, %v2255, 0
        %2291 = vmatprep.subr.bf16.mxu0 %v2281
        %2292 = vmatpush1.bf16.msra.mxu0 %v2280
        %2293 = vmatprep.subr.bf16.mxu0 %v2283
        %2294 = vmatpush1.bf16.msra.mxu0 %v2282
        %2295 = vmatprep.subr.bf16.mxu0 0
        %2296 = vmatpush1.bf16.msra.mxu0 0
        %2297 = vmatprep.subr.bf16.mxu0 0
        %2298 = vmatpush1.bf16.msra.mxu0 0
        %2299 = vmatprep.subr.bf16.mxu0 0
        %2300 = vmatpush1.bf16.msra.mxu0 0
        %2301 = vmatprep.subr.bf16.mxu0 0
        %2302 = vmatpush1.bf16.msra.mxu0 0
        %2303 = vmatprep.subr.bf16.mxu0 0
        %2304 = vmatpush1.bf16.msra.mxu0 0
        %2305 = vmatprep.subr.bf16.mxu0 0
        %2306 = vmatpush1.bf16.msra.mxu0 0
        %2307 = vmatprep.subr.bf16.mxu0 0
        %2308 = vmatpush1.bf16.msra.mxu0 0
        %2309 = vmatprep.subr.bf16.mxu0 0
        %2310 = vmatpush1.bf16.msra.mxu0 0
        %2311 = vmatprep.subr.bf16.mxu0 0
        %2312 = vmatpush1.bf16.msra.mxu0 0
        %2313 = vmatprep.subr.bf16.mxu0 0
        %2314 = vmatpush1.bf16.msra.mxu0 0
        %2315 = vmatprep.subr.bf16.mxu0 0
        %2316 = vmatpush1.bf16.msra.mxu0 0
        %2317 = vmatprep.subr.bf16.mxu0 0
        %2318 = vmatpush1.bf16.msra.mxu0 0
        %2319 = vmatprep.subr.bf16.mxu0 0
        %2320 = vmatpush1.bf16.msra.mxu0 0
        %2321 = vmatprep.subr.bf16.mxu0 0
        %2322 = vmatpush1.bf16.msra.mxu0 0
        %2323 = vmatprep.mubr.bf16.mxu0 0
        %2324 = vmatmul.mubr.bf16.gmra.mrb[0].mxu0 %v2289
        %v2325 = vpop.f32.mrb[0].mxu0
        %v2326 = vadd.f32 0.0, %v2325
        %v2327 = vpop.f32.mrb[0].mxu0
        %v2328 = vadd.f32 0.0, %v2327
        %v2329 = vpop.f32.mrb[0].mxu0
        %v2330 = vpop.f32.mrb[0].mxu0
        %2331 = vdwg.mxu0
        %v2332 = vadd.f32 %v2239, %v2326
        %v2333 = vadd.f32 %v2240, %v2328
        %s2334 = scalar_lea.vmem %s8, 28
        %v2335 = vld [vmem:[%s2334] sm:$0xf]
        %v2336 = vpack.c.bf16 %v2335, %v2335
        %2337 = vrot.lane.b32.xlu0 %v1773, 95
        %v2338 = vpop.permute.xlu0 %2337
        %2339 = vrot.lane.b32.xlu0 %v1774, 95
        %v2340 = vpop.permute.xlu0 %2339
        %2341 = vrot.lane.b32.xlu0 %v1775, 95
        %v2342 = vpop.permute.xlu0 %2341
        %2343 = vrot.lane.b32.xlu0 %v1776, 95
        %v2344 = vpop.permute.xlu0 %2343
        %2345 = vrot.lane.b32.xlu0 %v1777, 95
        %v2346 = vpop.permute.xlu0 %2345
        %2347 = vrot.lane.b32.xlu0 %v1778, 95
        %v2348 = vpop.permute.xlu0 %2347
        %v2349 = vsel %vm1384, %v2338, %v2340
        %v2350 = vsel %vm1384, %v2340, %v2342
        %v2351 = vsel %vm1384, %v2344, %v2346
        %v2352 = vsel %vm1384, %v2346, %v2348
        %v2358 = vsel %vm1268, %v2336, 0
        %2360 = vmatprep.subr.bf16.mxu0 %v2350
        %2361 = vmatpush1.bf16.msra.mxu0 %v2349
        %2362 = vmatprep.subr.bf16.mxu0 %v2352
        %2363 = vmatpush1.bf16.msra.mxu0 %v2351
        %2364 = vmatprep.subr.bf16.mxu0 0
        %2365 = vmatpush1.bf16.msra.mxu0 0
        %2366 = vmatprep.subr.bf16.mxu0 0
        %2367 = vmatpush1.bf16.msra.mxu0 0
        %2368 = vmatprep.subr.bf16.mxu0 0
        %2369 = vmatpush1.bf16.msra.mxu0 0
        %2370 = vmatprep.subr.bf16.mxu0 0
        %2371 = vmatpush1.bf16.msra.mxu0 0
        %2372 = vmatprep.subr.bf16.mxu0 0
        %2373 = vmatpush1.bf16.msra.mxu0 0
        %2374 = vmatprep.subr.bf16.mxu0 0
        %2375 = vmatpush1.bf16.msra.mxu0 0
        %2376 = vmatprep.subr.bf16.mxu0 0
        %2377 = vmatpush1.bf16.msra.mxu0 0
        %2378 = vmatprep.subr.bf16.mxu0 0
        %2379 = vmatpush1.bf16.msra.mxu0 0
        %2380 = vmatprep.subr.bf16.mxu0 0
        %2381 = vmatpush1.bf16.msra.mxu0 0
        %2382 = vmatprep.subr.bf16.mxu0 0
        %2383 = vmatpush1.bf16.msra.mxu0 0
        %2384 = vmatprep.subr.bf16.mxu0 0
        %2385 = vmatpush1.bf16.msra.mxu0 0
        %2386 = vmatprep.subr.bf16.mxu0 0
        %2387 = vmatpush1.bf16.msra.mxu0 0
        %2388 = vmatprep.subr.bf16.mxu0 0
        %2389 = vmatpush1.bf16.msra.mxu0 0
        %2390 = vmatprep.subr.bf16.mxu0 0
        %2391 = vmatpush1.bf16.msra.mxu0 0
        %2392 = vmatprep.mubr.bf16.mxu0 0
        %2393 = vmatmul.mubr.bf16.gmra.mrb[0].mxu0 %v2358
        %v2394 = vpop.f32.mrb[0].mxu0
        %v2395 = vadd.f32 0.0, %v2394
        %v2396 = vpop.f32.mrb[0].mxu0
        %v2397 = vadd.f32 0.0, %v2396
        %v2398 = vpop.f32.mrb[0].mxu0
        %v2399 = vpop.f32.mrb[0].mxu0
        %2400 = vdwg.mxu0
        %v2401 = vadd.f32 %v2332, %v2395
        %v2402 = vadd.f32 %v2333, %v2397
        %v2403 = vmul.f32 %v1748, %v1461
        %v2404 = vmul.f32 %v1732, %v1465
        %v2405 = vmul.f32 %v1752, %v1463
        %v2406 = vmul.f32 %v1749, %v1461
        %v2407 = vmul.f32 %v1733, %v1465
        %v2408 = vmul.f32 %v1753, %v1463
        %v2409 = vmul.f32 %v1750, %v1461
        %v2410 = vmul.f32 %v1734, %v1465
        %v2411 = vmul.f32 %v1754, %v1463
        %v2412 = vmul.f32 %v1751, %v1461
        %v2413 = vmul.f32 %v1735, %v1465
        %v2414 = vmul.f32 %v1755, %v1463
        %s2415 = scalar_lea.vmem %s8, 32
        %v2416 = vld [vmem:[%s2415] sm:$0xf]
        %v2417 = vpack.c.bf16 %v2416, %v2416
        %v2418 = vpack.c.bf16 %v2406, %v2403
        %v2419 = vpack.c.bf16 %v2407, %v2404
        %v2420 = vpack.c.bf16 %v2408, %v2405
        %v2421 = vpack.c.bf16 %v2412, %v2409
        %v2422 = vpack.c.bf16 %v2413, %v2410
        %v2423 = vpack.c.bf16 %v2414, %v2411
        %2430 = vrot.lane.b32.xlu0 %v2418, 94
        %v2431 = vpop.permute.xlu0 %2430
        %2432 = vrot.lane.b32.xlu0 %v2419, 94
        %v2433 = vpop.permute.xlu0 %2432
        %2434 = vrot.lane.b32.xlu0 %v2420, 94
        %v2435 = vpop.permute.xlu0 %2434
        %2436 = vrot.lane.b32.xlu0 %v2421, 94
        %v2437 = vpop.permute.xlu0 %2436
        %2438 = vrot.lane.b32.xlu0 %v2422, 94
        %v2439 = vpop.permute.xlu0 %2438
        %2440 = vrot.lane.b32.xlu0 %v2423, 94
        %v2441 = vpop.permute.xlu0 %2440
        %v2442 = vsel %vm1491, %v2431, %v2433
        %v2443 = vsel %vm1491, %v2433, %v2435
        %v2444 = vsel %vm1491, %v2437, %v2439
        %v2445 = vsel %vm1491, %v2439, %v2441
        %v2451 = vsel %vm1268, %v2417, 0
        %2453 = vmatprep.subr.bf16.mxu0 %v2443
        %2454 = vmatpush1.bf16.msra.mxu0 %v2442
        %2455 = vmatprep.subr.bf16.mxu0 %v2445
        %2456 = vmatpush1.bf16.msra.mxu0 %v2444
        %2457 = vmatprep.subr.bf16.mxu0 0
        %2458 = vmatpush1.bf16.msra.mxu0 0
        %2459 = vmatprep.subr.bf16.mxu0 0
        %2460 = vmatpush1.bf16.msra.mxu0 0
        %2461 = vmatprep.subr.bf16.mxu0 0
        %2462 = vmatpush1.bf16.msra.mxu0 0
        %2463 = vmatprep.subr.bf16.mxu0 0
        %2464 = vmatpush1.bf16.msra.mxu0 0
        %2465 = vmatprep.subr.bf16.mxu0 0
        %2466 = vmatpush1.bf16.msra.mxu0 0
        %2467 = vmatprep.subr.bf16.mxu0 0
        %2468 = vmatpush1.bf16.msra.mxu0 0
        %2469 = vmatprep.subr.bf16.mxu0 0
        %2470 = vmatpush1.bf16.msra.mxu0 0
        %2471 = vmatprep.subr.bf16.mxu0 0
        %2472 = vmatpush1.bf16.msra.mxu0 0
        %2473 = vmatprep.subr.bf16.mxu0 0
        %2474 = vmatpush1.bf16.msra.mxu0 0
        %2475 = vmatprep.subr.bf16.mxu0 0
        %2476 = vmatpush1.bf16.msra.mxu0 0
        %2477 = vmatprep.subr.bf16.mxu0 0
        %2478 = vmatpush1.bf16.msra.mxu0 0
        %2479 = vmatprep.subr.bf16.mxu0 0
        %2480 = vmatpush1.bf16.msra.mxu0 0
        %2481 = vmatprep.subr.bf16.mxu0 0
        %2482 = vmatpush1.bf16.msra.mxu0 0
        %2483 = vmatprep.subr.bf16.mxu0 0
        %2484 = vmatpush1.bf16.msra.mxu0 0
        %2485 = vmatprep.mubr.bf16.mxu0 0
        %2486 = vmatmul.mubr.bf16.gmra.mrb[0].mxu0 %v2451
        %v2487 = vpop.f32.mrb[0].mxu0
        %v2488 = vadd.f32 0.0, %v2487
        %v2489 = vpop.f32.mrb[0].mxu0
        %v2490 = vadd.f32 0.0, %v2489
        %v2491 = vpop.f32.mrb[0].mxu0
        %v2492 = vpop.f32.mrb[0].mxu0
        %2493 = vdwg.mxu0
        %v2494 = vadd.f32 %v2401, %v2488
        %v2495 = vadd.f32 %v2402, %v2490
        %v2496 = vld [vmem:[%s9] sm:$0xf]
        %2498 = vset.pattern.permute.xlu0 0
        %2499 = vperm.xlu0 %2498, %v2496
        %v2500 = vpop.permute.xlu0 %2499
        %v2502 = vadd.f32 %v2494, %v2500
        %v2503 = vadd.f32 %v2495, %v2500
        %v2504 = vadd.f32 %v2502, 2.0
        %v2505 = vadd.f32 %v2503, 2.0
        %v2506 = vsub.f32 0.0, %v2504
        %v2507 = vsub.f32 0.0, %v2505
        %v2508 = vmul.f32 %v2506, 1.442695
        %v2509 = vpow.pop %v2508
        %v2510 = vmul.f32 %v2507, 1.442695
        %v2511 = vpow.pop %v2510
        %v2512 = vadd.f32 %v2509, 1.0
        %v2513 = vadd.f32 %v2511, 1.0
        %v2514 = vrcp.pop %v2512
        %v2515 = vmul.f32 1.0, %v2514
        %v2516 = vrcp.pop %v2513
        %v2517 = vmul.f32 1.0, %v2516
        %v2520 = vrot.slane %v2502, 6
        %v2521 = vrot.slane %v2503, 6
        %v2524 = vadd.f32 %v618, %v2520
        %v2525 = vadd.f32 %v619, %v2521
        %v2526 = vmul.f32 %v2524, %v2515
        %v2527 = vmul.f32 %v2525, %v2517
        %v2528 = vsel %vm614, %v618, %v2526
        %v2529 = vsel %vm614, %v619, %v2527
        %v2532 = vcombine.low %v2528, %v2529
        %2534 = vst [vmem:[%s440] sm:$0xff] %v2532
        %v2535 = vlog2.pop %v2515
        %v2536 = vmul.f32 %v2535, 0.6931472
        %v2537 = vlog2.pop %v2517
        %v2538 = vmul.f32 %v2537, 0.6931472
        %v2541 = vrot.slane %v2536, 2
        %v2542 = vrot.slane %v2538, 2
        %v2545 = vsel %vm614, %v2541, 0.0
        %v2546 = vrot.slane %v2545, 4
        %v2547 = vadd.f32 %v2545, %v2546
        %v2548 = vrot.slane %v2547, 2
        %v2549 = vadd.f32 %v2547, %v2548
        %v2550 = vrot.slane %v2549, 1
        %v2551 = vadd.f32 %v2549, %v2550
        %v2552 = vsel %vm614, %v2542, 0.0
        %v2553 = vrot.slane %v2552, 4
        %v2554 = vadd.f32 %v2552, %v2553
        %v2555 = vrot.slane %v2554, 2
        %v2556 = vadd.f32 %v2554, %v2555
        %v2557 = vrot.slane %v2556, 1
        %v2558 = vadd.f32 %v2556, %v2557
        %v2561 = vcombine.low %v2551, %v2558
        %v2563 = vunpack.c.l.s4 1966171168
        %v2564 = vunpack.c.0.s8 %v2563
        %v2565 = vlaneseq
        %v2566 = vshrl.u32 %v2565, 7
        %v2567 = vsub.s32 %v2564, %v2566
        %v2568 = vrot.slane %v2561, %v2567
        %v2570 = vunpack.c.l.s4 1966171168
        %v2571 = vunpack.c.0.s8 %v2570
        %v2572 = vlaneseq
        %v2573 = vshrl.u32 %v2572, 7
        %v2574 = vsub.s32 %v2571, %v2573
        %v2575 = vrot.slane %v2568, %v2574
        %v2577 = vlaneseq
        %vm2578 = vcmp.ge.s32.totalorder %v2577, 0
        %vm2579 = vcmp.lt.s32.totalorder %v2577, 256
        %vm2580 = vmand %vm2578, %vm2579
        %2581 = vst.msk [vmem:[%s444] sm:$0x3] %vm2580, %v2575
        %p2582 = scmp.lt.s32.totalorder %s25, 1
        %s2583 = scalar_select %p2582, %s25, 1
        %s2584 = smul.addr %s2583, 2
        %s2585 = smul.addr %s2584, 4
        %s2586 = scalar_lea.vmem %s10, %s2585
        %p2587 = scmp.lt.s32.totalorder %s25, 1
        %s2588 = scalar_select %p2587, %s25, 1
        %s2589 = smul.addr %s2588, 2
        %s2590 = scalar_lea.vmem %s11, %s2589
        // Predicated region
        $region69: #{_lambda_.2} parent=59 // pred_check
          %p2591 = pneg %p263
        $region70: #{_lambda_.2} parent=59 // pred_check_branch
          %2593 = sbr.rel (%p2591) target = $region72
        $region71: #{_lambda_.2} parent=59 // pred_region
          _
        $region72: #{_lambda_.2} parent=59 // pred_fallthru
          _
        // Predicated region
        $region73: #{_lambda_.2} parent=59 // pred_check
          %p2594 = pneg %p289
        $region74: #{_lambda_.2} parent=59 // pred_check_branch
          %2596 = sbr.rel (%p2594) target = $region76
        $region75: #{_lambda_.2} parent=59 // pred_region
          _
        $region76: #{_lambda_.2} parent=59 // pred_fallthru
          _
      $region60: #{_lambda_.2} parent=5 // pred_fallthru
        _
      %p2597 = scmp.le.s32.totalorder 2, %s20
      // Predicated region
      $region77: #{_lambda_.2} parent=5 // pred_check
        %p2598 = pneg %p2597
      $region78: #{_lambda_.2} parent=5 // pred_check_branch
        %2600 = sbr.rel (%p2598) target = $region80
      $region79: #{_lambda_.2} parent=5 // pred_region
        %s2601 = ssub.s32 %s20, 2
        // Predicated region
        $region81: #{_lambda_.2} parent=79 // pred_check
          %p2602 = pneg %p269
        $region82: #{_lambda_.2} parent=79 // pred_check_branch
          %2604 = sbr.rel (%p2602) target = $region84
        $region83: #{_lambda_.2} parent=79 // pred_region
          %p2605 = scmp.lt.s32.totalorder %s26, 1
          %s2606 = scalar_select %p2605, %s26, 1
          %s2607 = smul.addr %s2606, 2
          %s2608 = smul.addr %s2607, 4
          %s2609 = scalar_lea.vmem %s10, %s2608
        $region84: #{_lambda_.2} parent=79 // pred_fallthru
          _
        // Predicated region
        $region85: #{_lambda_.2} parent=79 // pred_check
          %p2610 = pneg %p295
        $region86: #{_lambda_.2} parent=79 // pred_check_branch
          %2612 = sbr.rel (%p2610) target = $region88
        $region87: #{_lambda_.2} parent=79 // pred_region
          %p2613 = scmp.lt.s32.totalorder %s26, 1
          %s2614 = scalar_select %p2613, %s26, 1
          %s2615 = smul.addr %s2614, 2
          %s2616 = scalar_lea.vmem %s11, %s2615
        $region88: #{_lambda_.2} parent=79 // pred_fallthru
          _
      $region80: #{_lambda_.2} parent=5 // pred_fallthru
        _
    $region6: #{_lambda_.2} parent=1 // loop_footer
      %s24 = sadd.s32 1, %s20
    $region7: #{_lambda_.2} parent=1 // loop_footer_branch
      %19 = sbr.rel target = $region3
    $region8: #{_lambda_.2} parent=1 // loop_exit
      _
    %2617 = vsyncpa [#allocation3], 1
    %s2618 = scalar_lea.sflag [#allocation3], 1
    %2619 = vsyncpa %s2618, 1
    %2620 = vsyncpa [#allocation5], 1

</llo_original>
